<compile_context>
chip_gen: v7x
topology: tpu7x:2x2x1
jax: 0.10.0
libtpu: 0.0.40
codegen_flags: <defaults>
</compile_context>

<pallas_src>
import functools

import jax
import jax.numpy as jnp
from jax import lax
from jax.experimental import pallas as pl
from jax.experimental.pallas import tpu as pltpu


def _round_up(x, m):
    return (x + m - 1) // m * m


# --------------------------------------------------------------------------
# Kernel
# --------------------------------------------------------------------------
def _resnext_kernel(xm_ref, xh_ref, w1_ref, wc_ref, w3_ref, o_ref, *, wp, ck):
    # xm_ref : (1, TH*Wp, Cin)       bf16  main window (padded rows [i*TH, i*TH+TH))
    # xh_ref : (1, 2*Wp,  Cin)       bf16  bottom halo (padded rows [i*TH+TH, i*TH+TH+2))
    # w1_ref : (Cin, D)              bf16  conv_reduce (1x1)
    # wc_ref : (n_chunks*9, Ck, Ck)  bf16  grouped 3x3, block-diag per MXU-width chunk
    # w3_ref : (D, Cout)             bf16  conv_expand (1x1)
    # o_ref  : (1, TH*Wp, Cout)      f32   output rows [i*TH, i*TH+TH); flat col q = out col q-1
    R = xm_ref.shape[1]                      # TH * Wp
    D = w1_ref.shape[1]
    Cout = o_ref.shape[2]
    n_chunks = D // ck

    xm = xm_ref[0]                           # (R, Cin)     bf16
    xh = xh_ref[0]                           # (2*Wp, Cin)  bf16
    w1 = w1_ref[...]                         # (Cin, D)     bf16

    # 1x1 reduce + leaky_relu(0.2) over the full halo window.  The two input
    # blocks are reduced separately (no Cin-wide concat) and joined in the
    # D-wide space as bf16 (halves tap / roll traffic downstream).
    def reduce_lrelu(x):
        y = jnp.dot(x, w1, preferred_element_type=jnp.float32)
        return jnp.where(y > 0, y, 0.2 * y).astype(jnp.bfloat16)

    y1 = jnp.concatenate([reduce_lrelu(xm), reduce_lrelu(xh)], axis=0)   # (Rw, D) bf16

    # Column (kw) taps: +-1 flat row == +-1 image column.  jnp.roll is used
    # (static shift -> two slices + concat) since pltpu.roll only accepts
    # non-negative shifts; wrap-around values only pollute the discarded
    # padded border columns.  Taps stay bf16.
    left = jnp.roll(y1, 1, axis=0)           # [t] <- y1[t-1]   (kw = 0 tap)
    right = jnp.roll(y1, -1, axis=0)         # [t] <- y1[t+1]   (kw = 2 tap)
    taps = (left, y1, right)

    # Grouped 3x3 conv, chunked to MXU width: within each Ck-wide channel
    # chunk the weight is block-diagonal over its own groups only, so FLOP
    # inflation is Ck/Cg (not cardinality).  Row (kh) taps are Wp-aligned row
    # slices; no concatenated ycat buffer is materialized.
    y3 = jnp.zeros((R, Cout), jnp.float32)
    for c in range(n_chunks):
        cs = slice(c * ck, (c + 1) * ck)
        acc = jnp.zeros((R, ck), jnp.float32)
        for kh in range(3):
            rs = slice(kh * wp, kh * wp + R)
            for kw in range(3):
                acc = acc + jnp.dot(taps[kw][rs, cs],
                                    wc_ref[(c * 3 + kh) * 3 + kw],
                                    preferred_element_type=jnp.float32)
        y2c = jnp.where(acc > 0, acc, 0.2 * acc).astype(jnp.bfloat16)
        # 1x1 expand, accumulated chunk-by-chunk in f32.
        y3 = y3 + jnp.dot(y2c, w3_ref[cs, :], preferred_element_type=jnp.float32)

    # Identity shortcut: output flat row r (flat col q = out col q-1) needs the
    # input at window flat row r + Wp; its last Wp rows live in the halo block
    # -> two aligned stores.  Residual add is done in f32.
    o_ref[0, :R - wp, :] = (y3[:R - wp]
                            + xm[wp:, :Cout].astype(jnp.float32)).astype(o_ref.dtype)
    o_ref[0, R - wp:, :] = (y3[R - wp:]
                            + xh[:wp, :Cout].astype(jnp.float32)).astype(o_ref.dtype)


# --------------------------------------------------------------------------
# Parameter preparation (hoisted out of the per-call path)
# --------------------------------------------------------------------------
def prepare_resnext_params(w_reduce, w_conv, w_expand, cardinality,
                           dtype=jnp.bfloat16, mxu_width=256):
    """Pre-transpose / chunk-block-diagonalize / cast the conv weights once.

    mxu_width: target chunk width for the grouped-conv weights (128 on v5e,
    256 on v6e/v7x).  Chunks consist of whole groups, so the 3x3 stage's
    FLOP/weight inflation is Ck/Cg instead of cardinality.
    """
    D = w_reduce.shape[0]
    Cg = D // cardinality

    w1 = jnp.transpose(w_reduce[:, :, 0, 0], (1, 0)).astype(dtype)       # (Cin, D)
    w3 = jnp.transpose(w_expand[:, :, 0, 0], (1, 0)).astype(dtype)       # (D, Cout)

    # Largest divisor of cardinality whose chunk width stays <= mxu_width.
    gpc = 1
    for d in range(1, cardinality + 1):
        if cardinality % d == 0 and d * Cg <= max(mxu_width, Cg):
            gpc = d
    ck = gpc * Cg
    n_chunks = cardinality // gpc

    # wc[(c*3+kh)*3+kw] is (Ck, Ck), block-diagonal over chunk c's groups.
    wc = jnp.zeros((n_chunks, 3, 3, ck, ck), jnp.float32)
    for g in range(cardinality):
        c, gl = divmod(g, gpc)
        blk = jnp.transpose(w_conv[g * Cg:(g + 1) * Cg], (2, 3, 1, 0))   # (3,3,ci,co)
        wc = wc.at[c, :, :, gl * Cg:(gl + 1) * Cg, gl * Cg:(gl + 1) * Cg].set(blk)
    wc = wc.reshape(n_chunks * 9, ck, ck).astype(dtype)

    return {"w1": w1, "wc": wc, "w3": w3}


# --------------------------------------------------------------------------
# Device-aware VMEM budgeting / tile-size selection
# --------------------------------------------------------------------------
def _device_vmem_bytes():
    try:
        cap = getattr(pltpu.get_tpu_info(), "vmem_capacity_bytes", None)
        if cap:
            return int(cap)
    except Exception:
        pass
    return 128 * 2 ** 20        # v5e / v6e default; v7x reports 64 MiB above


def _estimate_vmem_bytes(TH, Wp, Cin, D, Cout, Ck):
    R, Rw = TH * Wp, (TH + 2) * Wp
    io = 2 * (R * Cin * 2 + 2 * Wp * Cin * 2) + 2 * R * Cout * 4        # dbl-buffered blocks
    weights = 2 * 2 * (Cin * D + (D // Ck) * 9 * Ck * Ck + D * Cout)    # bf16, dbl-buffered
    # Peak live intermediates (max over phases, +20% for compiler temps):
    # y1/left/right (bf16), one f32 pre-cast matmul result, chunk accumulator,
    # f32 expand accumulator.
    inter = int(1.2 * (3 * Rw * D * 2 + R * D * 4 + R * Ck * 4 + R * Cout * 4))
    return io + weights + inter


def _pick_tile_rows(N, H, Wp, Cin, D, Cout, Ck, budget_bytes):
    th = 2                              # must stay even (halo block index uses TH // 2)
    h_cap = max(2, _round_up(H, 2))
    while (th * 2 <= h_cap
           and _estimate_vmem_bytes(th * 2, Wp, Cin, D, Cout, Ck) <= budget_bytes):
        th *= 2
    # v7x shards the parallel grid axes across 2 TensorCores: keep >= 2 grid
    # steps when there is only a single image so both cores get work.
    if N == 1 and H > 2:
        th = min(th, max(2, _round_up(-(-H // 2), 2)))
    return th


# --------------------------------------------------------------------------
# Wrapper
# --------------------------------------------------------------------------
def resnext_bottleneck(x_nchw, params, tile_rows=None):
    """Fused ResNeXt bottleneck forward (stride=1, dilate=1). x_nchw: (N,Cin,H,W) f32."""
    w1, wc, w3 = params["w1"], params["wc"], params["w3"]
    Cin, D = w1.shape
    Cout = w3.shape[1]
    Ck = wc.shape[1]                    # chunk width (static, read off the weight shape)
    N, Cx, H, W = x_nchw.shape
    assert Cx == Cin and Cin >= Cout, "identity shortcut needs Cin >= Cout"
    assert D % Ck == 0

    # Width padded to a multiple of 16 so every flat-row offset used in the
    # kernel (Wp, kh*Wp, R-Wp) is bf16-sublane-tile aligned (activations are a
    # bf16 stream now); >= 1 zero border column per side is preserved for the
    # roll wrap-around.
    Wp = _round_up(W + 2, 16)

    vmem_cap = _device_vmem_bytes()
    if tile_rows is None:
        tile_rows = _pick_tile_rows(N, H, Wp, Cin, D, Cout, Ck,
                                    budget_bytes=int(vmem_cap * 0.45))
    TH = int(tile_rows)
    assert TH % 2 == 0
    T = -(-H // TH)                     # row tiles per image
    Ht = T * TH
    R = TH * Wp

    # NCHW -> NHWC, zero-pad H/W (conv padding + tiling/alignment), flatten
    # (H, W), cast to bf16 (halves the dominant HBM input stream).
    # TODO(synk): keep the surrounding model in NHWC to drop these transposes.
    x_nhwc = jnp.transpose(x_nchw, (0, 2, 3, 1))
    x_pad = jnp.pad(x_nhwc, ((0, 0), (1, 1 + Ht - H), (1, Wp - W - 1), (0, 0)))
    x_flat = x_pad.reshape(N, (Ht + 2) * Wp, Cin).astype(jnp.bfloat16)

    kernel = functools.partial(_resnext_kernel, wp=Wp, ck=Ck)

    flops = N * T * (2 * R * Cin * D                      # 1x1 reduce
                     + (D // Ck) * 9 * 2 * R * Ck * Ck    # chunked grouped 3x3
                     + 2 * R * D * Cout)                  # 1x1 expand
    bytes_accessed = (x_flat.size * 2 + N * Ht * Wp * Cout * 4
                      + (w1.size + wc.size + w3.size) * 2)

    out_flat = pl.pallas_call(
        kernel,
        out_shape=jax.ShapeDtypeStruct((N, Ht * Wp, Cout), jnp.float32),
        grid_spec=pltpu.PrefetchScalarGridSpec(
            num_scalar_prefetch=0,
            grid=(N, T),
            in_specs=[
                # main TH rows of the window
                pl.BlockSpec((1, R, Cin), lambda b, i: (b, i, 0)),
                # 2-row bottom halo of the window (same array, second spec)
                pl.BlockSpec((1, 2 * Wp, Cin),
                             lambda b, i: (b, (i + 1) * (TH // 2), 0)),
                pl.BlockSpec((Cin, D), lambda b, i: (0, 0)),
                pl.BlockSpec((wc.shape[0], Ck, Ck), lambda b, i: (0, 0, 0)),
                pl.BlockSpec((D, Cout), lambda b, i: (0, 0)),
            ],
            out_specs=pl.BlockSpec((1, R, Cout), lambda b, i: (b, i, 0)),
        ),
        compiler_params=pltpu.CompilerParams(
            dimension_semantics=("parallel", "parallel"),
            vmem_limit_bytes=int(vmem_cap * 0.72)),
        cost_estimate=pl.CostEstimate(flops=int(flops), transcendentals=0,
                                      bytes_accessed=int(bytes_accessed)),
    )(x_flat, x_flat, w1, wc, w3)

    # Drop the padded border columns / extra rows, back to NCHW.
    out = out_flat.reshape(N, Ht, Wp, Cout)[:, :H, 1:W + 1, :]
    return jnp.transpose(out, (0, 3, 1, 2)).astype(x_nchw.dtype)


# --------------------------------------------------------------------------
# Plain-JAX (XLA conv) reference, NCHW, f32
# --------------------------------------------------------------------------
def resnext_reference(x, w_reduce, w_conv, w_expand, cardinality):
    dn = ("NCHW", "OIHW", "NCHW")
    lrelu = lambda v: jnp.where(v > 0, v, 0.2 * v)
    y = lax.conv_general_dilated(x, w_reduce, (1, 1), "VALID",
                                 dimension_numbers=dn)
    y = lrelu(y)
    y = lax.conv_general_dilated(y, w_conv, (1, 1), ((1, 1), (1, 1)),
                                 dimension_numbers=dn,
                                 feature_group_count=cardinality)
    y = lrelu(y)
    y = lax.conv_general_dilated(y, w_expand, (1, 1), "VALID",
                                 dimension_numbers=dn)
    Cout = w_expand.shape[0]
    return x[:, :Cout] + y


# --------------------------------------------------------------------------
if __name__ == "__main__":
    key = jax.random.PRNGKey(0)
    configs = [
        # (N, Cin, Cout, H, W, cardinality, tile_rows)
        (2, 64, 64, 16, 16, 8, 8),      # 2 row-tiles per image -> exercises halo
        (1, 64, 64, 12, 10, 8, None),   # ragged H/W -> padding + auto tile pick
    ]
    for (N, Cin, Cout, H, W, card, th) in configs:
        D = Cout // 2
        Cg = D // card
        k_x, k_w1, k_w2, k_w3, key = jax.random.split(key, 5)

        x = jax.random.normal(k_x, (N, Cin, H, W), jnp.float32)
        w_reduce = 0.1 * jax.random.normal(k_w1, (D, Cin, 1, 1), jnp.float32)
        w_conv = 0.1 * jax.random.normal(k_w2, (D, Cg, 3, 3), jnp.float32)
        w_expand = 0.1 * jax.random.normal(k_w3, (Cout, D, 1, 1), jnp.float32)

        params = prepare_resnext_params(w_reduce, w_conv, w_expand, card)
        fwd = jax.jit(functools.partial(resnext_bottleneck, tile_rows=th))
        out = jax.block_until_ready(fwd(x, params))

        ref = resnext_reference(x, w_reduce, w_conv, w_expand, card)
        assert out.shape == (N, Cout, H, W)
        err = float(jnp.max(jnp.abs(out - ref)))
        # bf16 activation stream + bf16 matmul inputs (f32 accumulation).
        assert jnp.allclose(out, ref, rtol=3e-2, atol=3e-2), \
            f"max abs err = {err}"

    print("KERNEL_OK")
</pallas_src>

<mosaic_0001>
module attributes {stable_mosaic.version = 11 : i64} {
  func.func @_resnext_kernel(%arg0: i32, %arg1: i32, %arg2: memref<1x256x64xbf16, #tpu.memory_space<vmem>>, %arg3: memref<1x64x64xbf16, #tpu.memory_space<vmem>>, %arg4: memref<64x32xbf16, #tpu.memory_space<vmem>>, %arg5: memref<9x32x32xbf16, #tpu.memory_space<vmem>>, %arg6: memref<32x64xbf16, #tpu.memory_space<vmem>>, %arg7: memref<1x256x64xf32, #tpu.memory_space<vmem>>) attributes {dimension_semantics = [#tpu.dimension_semantics<parallel>, #tpu.dimension_semantics<parallel>], iteration_bounds = array<i64: 2, 2>, scalar_prefetch = 0 : i64, scratch_operands = 0 : i64, tpu.core_type = #tpu.core_type<tc>, window_params = [{transform_indices = @transform_0, window_bounds = array<i64: 1, 256, 64>}, {transform_indices = @transform_1, window_bounds = array<i64: 1, 64, 64>}, {pipeline_mode = #tpu.pipeline_mode<synchronous>, transform_indices = @transform_2, window_bounds = array<i64: 64, 32>}, {pipeline_mode = #tpu.pipeline_mode<synchronous>, transform_indices = @transform_3, window_bounds = array<i64: 9, 32, 32>}, {pipeline_mode = #tpu.pipeline_mode<synchronous>, transform_indices = @transform_4, window_bounds = array<i64: 32, 64>}, {transform_indices = @transform_5, window_bounds = array<i64: 1, 256, 64>}]} {
    %c0 = arith.constant 0 : index
    %c0_0 = arith.constant 0 : index
    %c0_1 = arith.constant 0 : index
    %0 = vector.load %arg2[%c0, %c0_0, %c0_1] : memref<1x256x64xbf16, #tpu.memory_space<vmem>>, vector<1x256x64xbf16>
    %1 = vector.shape_cast %0 : vector<1x256x64xbf16> to vector<256x64xbf16>
    %c0_2 = arith.constant 0 : index
    %c0_3 = arith.constant 0 : index
    %c0_4 = arith.constant 0 : index
    %2 = vector.load %arg3[%c0_2, %c0_3, %c0_4] : memref<1x64x64xbf16, #tpu.memory_space<vmem>>, vector<1x64x64xbf16>
    %3 = vector.shape_cast %2 : vector<1x64x64xbf16> to vector<64x64xbf16>
    %c0_5 = arith.constant 0 : index
    %c0_6 = arith.constant 0 : index
    %4 = vector.load %arg4[%c0_5, %c0_6] : memref<64x32xbf16, #tpu.memory_space<vmem>>, vector<64x32xbf16>
    %cst = arith.constant dense<0.000000e+00> : vector<256x32xf32>
    %5 = tpu.matmul %1, %4, %cst {dimension_numbers = #tpu.dot_dimension_numbers<[1], [0], [0], [1], [0, 0, 1, 1], [], []>} : vector<256x64xbf16>, vector<64x32xbf16>, vector<256x32xf32> -> vector<256x32xf32>
    %cst_7 = arith.constant 0.000000e+00 : f32
    %6 = vector.broadcast %cst_7 : f32 to vector<256x32xf32>
    %7 = arith.cmpf ogt, %5, %6 : vector<256x32xf32>
    %cst_8 = arith.constant 2.000000e-01 : f32
    %8 = vector.broadcast %cst_8 : f32 to vector<256x32xf32>
    %9 = arith.mulf %8, %5 : vector<256x32xf32>
    %10 = arith.select %7, %5, %9 : vector<256x32xi1>, vector<256x32xf32>
    %11 = arith.truncf %10 : vector<256x32xf32> to vector<256x32xbf16>
    %cst_9 = arith.constant dense<0.000000e+00> : vector<64x32xf32>
    %12 = tpu.matmul %3, %4, %cst_9 {dimension_numbers = #tpu.dot_dimension_numbers<[1], [0], [0], [1], [0, 0, 1, 1], [], []>} : vector<64x64xbf16>, vector<64x32xbf16>, vector<64x32xf32> -> vector<64x32xf32>
    %cst_10 = arith.constant 0.000000e+00 : f32
    %13 = vector.broadcast %cst_10 : f32 to vector<64x32xf32>
    %14 = arith.cmpf ogt, %12, %13 : vector<64x32xf32>
    %cst_11 = arith.constant 2.000000e-01 : f32
    %15 = vector.broadcast %cst_11 : f32 to vector<64x32xf32>
    %16 = arith.mulf %15, %12 : vector<64x32xf32>
    %17 = arith.select %14, %12, %16 : vector<64x32xi1>, vector<64x32xf32>
    %18 = arith.truncf %17 : vector<64x32xf32> to vector<64x32xbf16>
    %19 = tpu.concatenate %11, %18 in 0 : vector<256x32xbf16>, vector<64x32xbf16> -> vector<320x32xbf16>
    %20 = vector.extract_strided_slice %19 {offsets = [319, 0], sizes = [1, 32], strides = [1, 1]} : vector<320x32xbf16> to vector<1x32xbf16>
    %21 = vector.extract_strided_slice %19 {offsets = [0, 0], sizes = [319, 32], strides = [1, 1]} : vector<320x32xbf16> to vector<319x32xbf16>
    %22 = tpu.concatenate %20, %21 in 0 : vector<1x32xbf16>, vector<319x32xbf16> -> vector<320x32xbf16>
    %23 = vector.extract_strided_slice %19 {offsets = [1, 0], sizes = [319, 32], strides = [1, 1]} : vector<320x32xbf16> to vector<319x32xbf16>
    %24 = vector.extract_strided_slice %19 {offsets = [0, 0], sizes = [1, 32], strides = [1, 1]} : vector<320x32xbf16> to vector<1x32xbf16>
    %25 = tpu.concatenate %23, %24 in 0 : vector<319x32xbf16>, vector<1x32xbf16> -> vector<320x32xbf16>
    %cst_12 = arith.constant 0.000000e+00 : f32
    %26 = vector.broadcast %cst_12 : f32 to vector<256x64xf32>
    %cst_13 = arith.constant 0.000000e+00 : f32
    %27 = vector.broadcast %cst_13 : f32 to vector<256x32xf32>
    %28 = vector.extract_strided_slice %22 {offsets = [0, 0], sizes = [256, 32], strides = [1, 1]} : vector<320x32xbf16> to vector<256x32xbf16>
    %c0_14 = arith.constant 0 : index
    %c0_15 = arith.constant 0 : index
    %c0_16 = arith.constant 0 : index
    %29 = vector.load %arg5[%c0_14, %c0_15, %c0_16] : memref<9x32x32xbf16, #tpu.memory_space<vmem>>, vector<1x32x32xbf16>
    %30 = vector.shape_cast %29 : vector<1x32x32xbf16> to vector<32x32xbf16>
    %cst_17 = arith.constant dense<0.000000e+00> : vector<256x32xf32>
    %31 = tpu.matmul %28, %30, %cst_17 {dimension_numbers = #tpu.dot_dimension_numbers<[1], [0], [0], [1], [0, 0, 1, 1], [], []>} : vector<256x32xbf16>, vector<32x32xbf16>, vector<256x32xf32> -> vector<256x32xf32>
    %32 = arith.addf %27, %31 : vector<256x32xf32>
    %33 = vector.extract_strided_slice %19 {offsets = [0, 0], sizes = [256, 32], strides = [1, 1]} : vector<320x32xbf16> to vector<256x32xbf16>
    %c1 = arith.constant 1 : index
    %c0_18 = arith.constant 0 : index
    %c0_19 = arith.constant 0 : index
    %34 = vector.load %arg5[%c1, %c0_18, %c0_19] : memref<9x32x32xbf16, #tpu.memory_space<vmem>>, vector<1x32x32xbf16>
    %35 = vector.shape_cast %34 : vector<1x32x32xbf16> to vector<32x32xbf16>
    %cst_20 = arith.constant dense<0.000000e+00> : vector<256x32xf32>
    %36 = tpu.matmul %33, %35, %cst_20 {dimension_numbers = #tpu.dot_dimension_numbers<[1], [0], [0], [1], [0, 0, 1, 1], [], []>} : vector<256x32xbf16>, vector<32x32xbf16>, vector<256x32xf32> -> vector<256x32xf32>
    %37 = arith.addf %32, %36 : vector<256x32xf32>
    %38 = vector.extract_strided_slice %25 {offsets = [0, 0], sizes = [256, 32], strides = [1, 1]} : vector<320x32xbf16> to vector<256x32xbf16>
    %c2 = arith.constant 2 : index
    %c0_21 = arith.constant 0 : index
    %c0_22 = arith.constant 0 : index
    %39 = vector.load %arg5[%c2, %c0_21, %c0_22] : memref<9x32x32xbf16, #tpu.memory_space<vmem>>, vector<1x32x32xbf16>
    %40 = vector.shape_cast %39 : vector<1x32x32xbf16> to vector<32x32xbf16>
    %cst_23 = arith.constant dense<0.000000e+00> : vector<256x32xf32>
    %41 = tpu.matmul %38, %40, %cst_23 {dimension_numbers = #tpu.dot_dimension_numbers<[1], [0], [0], [1], [0, 0, 1, 1], [], []>} : vector<256x32xbf16>, vector<32x32xbf16>, vector<256x32xf32> -> vector<256x32xf32>
    %42 = arith.addf %37, %41 : vector<256x32xf32>
    %43 = vector.extract_strided_slice %22 {offsets = [32, 0], sizes = [256, 32], strides = [1, 1]} : vector<320x32xbf16> to vector<256x32xbf16>
    %c3 = arith.constant 3 : index
    %c0_24 = arith.constant 0 : index
    %c0_25 = arith.constant 0 : index
    %44 = vector.load %arg5[%c3, %c0_24, %c0_25] : memref<9x32x32xbf16, #tpu.memory_space<vmem>>, vector<1x32x32xbf16>
    %45 = vector.shape_cast %44 : vector<1x32x32xbf16> to vector<32x32xbf16>
    %cst_26 = arith.constant dense<0.000000e+00> : vector<256x32xf32>
    %46 = tpu.matmul %43, %45, %cst_26 {dimension_numbers = #tpu.dot_dimension_numbers<[1], [0], [0], [1], [0, 0, 1, 1], [], []>} : vector<256x32xbf16>, vector<32x32xbf16>, vector<256x32xf32> -> vector<256x32xf32>
    %47 = arith.addf %42, %46 : vector<256x32xf32>
    %48 = vector.extract_strided_slice %19 {offsets = [32, 0], sizes = [256, 32], strides = [1, 1]} : vector<320x32xbf16> to vector<256x32xbf16>
    %c4 = arith.constant 4 : index
    %c0_27 = arith.constant 0 : index
    %c0_28 = arith.constant 0 : index
    %49 = vector.load %arg5[%c4, %c0_27, %c0_28] : memref<9x32x32xbf16, #tpu.memory_space<vmem>>, vector<1x32x32xbf16>
    %50 = vector.shape_cast %49 : vector<1x32x32xbf16> to vector<32x32xbf16>
    %cst_29 = arith.constant dense<0.000000e+00> : vector<256x32xf32>
    %51 = tpu.matmul %48, %50, %cst_29 {dimension_numbers = #tpu.dot_dimension_numbers<[1], [0], [0], [1], [0, 0, 1, 1], [], []>} : vector<256x32xbf16>, vector<32x32xbf16>, vector<256x32xf32> -> vector<256x32xf32>
    %52 = arith.addf %47, %51 : vector<256x32xf32>
    %53 = vector.extract_strided_slice %25 {offsets = [32, 0], sizes = [256, 32], strides = [1, 1]} : vector<320x32xbf16> to vector<256x32xbf16>
    %c5 = arith.constant 5 : index
    %c0_30 = arith.constant 0 : index
    %c0_31 = arith.constant 0 : index
    %54 = vector.load %arg5[%c5, %c0_30, %c0_31] : memref<9x32x32xbf16, #tpu.memory_space<vmem>>, vector<1x32x32xbf16>
    %55 = vector.shape_cast %54 : vector<1x32x32xbf16> to vector<32x32xbf16>
    %cst_32 = arith.constant dense<0.000000e+00> : vector<256x32xf32>
    %56 = tpu.matmul %53, %55, %cst_32 {dimension_numbers = #tpu.dot_dimension_numbers<[1], [0], [0], [1], [0, 0, 1, 1], [], []>} : vector<256x32xbf16>, vector<32x32xbf16>, vector<256x32xf32> -> vector<256x32xf32>
    %57 = arith.addf %52, %56 : vector<256x32xf32>
    %58 = vector.extract_strided_slice %22 {offsets = [64, 0], sizes = [256, 32], strides = [1, 1]} : vector<320x32xbf16> to vector<256x32xbf16>
    %c6 = arith.constant 6 : index
    %c0_33 = arith.constant 0 : index
    %c0_34 = arith.constant 0 : index
    %59 = vector.load %arg5[%c6, %c0_33, %c0_34] : memref<9x32x32xbf16, #tpu.memory_space<vmem>>, vector<1x32x32xbf16>
    %60 = vector.shape_cast %59 : vector<1x32x32xbf16> to vector<32x32xbf16>
    %cst_35 = arith.constant dense<0.000000e+00> : vector<256x32xf32>
    %61 = tpu.matmul %58, %60, %cst_35 {dimension_numbers = #tpu.dot_dimension_numbers<[1], [0], [0], [1], [0, 0, 1, 1], [], []>} : vector<256x32xbf16>, vector<32x32xbf16>, vector<256x32xf32> -> vector<256x32xf32>
    %62 = arith.addf %57, %61 : vector<256x32xf32>
    %63 = vector.extract_strided_slice %19 {offsets = [64, 0], sizes = [256, 32], strides = [1, 1]} : vector<320x32xbf16> to vector<256x32xbf16>
    %c7 = arith.constant 7 : index
    %c0_36 = arith.constant 0 : index
    %c0_37 = arith.constant 0 : index
    %64 = vector.load %arg5[%c7, %c0_36, %c0_37] : memref<9x32x32xbf16, #tpu.memory_space<vmem>>, vector<1x32x32xbf16>
    %65 = vector.shape_cast %64 : vector<1x32x32xbf16> to vector<32x32xbf16>
    %cst_38 = arith.constant dense<0.000000e+00> : vector<256x32xf32>
    %66 = tpu.matmul %63, %65, %cst_38 {dimension_numbers = #tpu.dot_dimension_numbers<[1], [0], [0], [1], [0, 0, 1, 1], [], []>} : vector<256x32xbf16>, vector<32x32xbf16>, vector<256x32xf32> -> vector<256x32xf32>
    %67 = arith.addf %62, %66 : vector<256x32xf32>
    %68 = vector.extract_strided_slice %25 {offsets = [64, 0], sizes = [256, 32], strides = [1, 1]} : vector<320x32xbf16> to vector<256x32xbf16>
    %c8 = arith.constant 8 : index
    %c0_39 = arith.constant 0 : index
    %c0_40 = arith.constant 0 : index
    %69 = vector.load %arg5[%c8, %c0_39, %c0_40] : memref<9x32x32xbf16, #tpu.memory_space<vmem>>, vector<1x32x32xbf16>
    %70 = vector.shape_cast %69 : vector<1x32x32xbf16> to vector<32x32xbf16>
    %cst_41 = arith.constant dense<0.000000e+00> : vector<256x32xf32>
    %71 = tpu.matmul %68, %70, %cst_41 {dimension_numbers = #tpu.dot_dimension_numbers<[1], [0], [0], [1], [0, 0, 1, 1], [], []>} : vector<256x32xbf16>, vector<32x32xbf16>, vector<256x32xf32> -> vector<256x32xf32>
    %72 = arith.addf %67, %71 : vector<256x32xf32>
    %cst_42 = arith.constant 0.000000e+00 : f32
    %73 = vector.broadcast %cst_42 : f32 to vector<256x32xf32>
    %74 = arith.cmpf ogt, %72, %73 : vector<256x32xf32>
    %cst_43 = arith.constant 2.000000e-01 : f32
    %75 = vector.broadcast %cst_43 : f32 to vector<256x32xf32>
    %76 = arith.mulf %75, %72 : vector<256x32xf32>
    %77 = arith.select %74, %72, %76 : vector<256x32xi1>, vector<256x32xf32>
    %78 = arith.truncf %77 : vector<256x32xf32> to vector<256x32xbf16>
    %c0_44 = arith.constant 0 : index
    %c0_45 = arith.constant 0 : index
    %79 = vector.load %arg6[%c0_44, %c0_45] : memref<32x64xbf16, #tpu.memory_space<vmem>>, vector<32x64xbf16>
    %cst_46 = arith.constant dense<0.000000e+00> : vector<256x64xf32>
    %80 = tpu.matmul %78, %79, %cst_46 {dimension_numbers = #tpu.dot_dimension_numbers<[1], [0], [0], [1], [0, 0, 1, 1], [], []>} : vector<256x32xbf16>, vector<32x64xbf16>, vector<256x64xf32> -> vector<256x64xf32>
    %81 = arith.addf %26, %80 : vector<256x64xf32>
    %82 = vector.extract_strided_slice %81 {offsets = [0, 0], sizes = [224, 64], strides = [1, 1]} : vector<256x64xf32> to vector<224x64xf32>
    %83 = vector.extract_strided_slice %1 {offsets = [32, 0], sizes = [224, 64], strides = [1, 1]} : vector<256x64xbf16> to vector<224x64xbf16>
    %84 = arith.extf %83 : vector<224x64xbf16> to vector<224x64xf32>
    %85 = arith.addf %82, %84 : vector<224x64xf32>
    %c0_47 = arith.constant 0 : index
    %c0_48 = arith.constant 0 : index
    %c0_49 = arith.constant 0 : index
    %86 = vector.load %arg7[%c0_47, %c0_48, %c0_49] : memref<1x256x64xf32, #tpu.memory_space<vmem>>, vector<1x224x64xf32>
    %87 = vector.shape_cast %86 : vector<1x224x64xf32> to vector<224x64xf32>
    %88 = vector.shape_cast %85 : vector<224x64xf32> to vector<1x224x64xf32>
    tpu.vector_store %arg7[%c0_47, %c0_48, %c0_49], %88 {strides = array<i32>} : memref<1x256x64xf32, #tpu.memory_space<vmem>>, vector<1x224x64xf32>,
    %89 = vector.extract_strided_slice %81 {offsets = [224, 0], sizes = [32, 64], strides = [1, 1]} : vector<256x64xf32> to vector<32x64xf32>
    %90 = vector.extract_strided_slice %3 {offsets = [0, 0], sizes = [32, 64], strides = [1, 1]} : vector<64x64xbf16> to vector<32x64xbf16>
    %91 = arith.extf %90 : vector<32x64xbf16> to vector<32x64xf32>
    %92 = arith.addf %89, %91 : vector<32x64xf32>
    %c0_50 = arith.constant 0 : index
    %c224 = arith.constant 224 : index
    %c0_51 = arith.constant 0 : index
    %93 = vector.load %arg7[%c0_50, %c224, %c0_51] : memref<1x256x64xf32, #tpu.memory_space<vmem>>, vector<1x32x64xf32>
    %94 = vector.shape_cast %93 : vector<1x32x64xf32> to vector<32x64xf32>
    %95 = vector.shape_cast %92 : vector<32x64xf32> to vector<1x32x64xf32>
    tpu.vector_store %arg7[%c0_50, %c224, %c0_51], %95 {strides = array<i32>} : memref<1x256x64xf32, #tpu.memory_space<vmem>>, vector<1x32x64xf32>,
    return
  }
  func.func @transform_0(%arg0: i32, %arg1: i32) -> (i32, i32, i32) {
    %c0_i32 = arith.constant 0 : i32
    %c0_i32_0 = arith.constant 0 : i32
    return %arg0, %arg1, %c0_i32 : i32, i32, i32
  }
  func.func @transform_1(%arg0: i32, %arg1: i32) -> (i32, i32, i32) {
    %c1_i32 = arith.constant 1 : i32
    %0 = arith.addi %arg1, %c1_i32 : i32
    %c4_i32 = arith.constant 4 : i32
    %1 = arith.muli %0, %c4_i32 : i32
    %c0_i32 = arith.constant 0 : i32
    %c0_i32_0 = arith.constant 0 : i32
    return %arg0, %1, %c0_i32 : i32, i32, i32
  }
  func.func @transform_2(%arg0: i32, %arg1: i32) -> (i32, i32) {
    %c0_i32 = arith.constant 0 : i32
    %c0_i32_0 = arith.constant 0 : i32
    %c0_i32_1 = arith.constant 0 : i32
    return %c0_i32, %c0_i32_0 : i32, i32
  }
  func.func @transform_3(%arg0: i32, %arg1: i32) -> (i32, i32, i32) {
    %c0_i32 = arith.constant 0 : i32
    %c0_i32_0 = arith.constant 0 : i32
    %c0_i32_1 = arith.constant 0 : i32
    %c0_i32_2 = arith.constant 0 : i32
    return %c0_i32, %c0_i32_0, %c0_i32_1 : i32, i32, i32
  }
  func.func @transform_4(%arg0: i32, %arg1: i32) -> (i32, i32) {
    %c0_i32 = arith.constant 0 : i32
    %c0_i32_0 = arith.constant 0 : i32
    %c0_i32_1 = arith.constant 0 : i32
    return %c0_i32, %c0_i32_0 : i32, i32
  }
  func.func @transform_5(%arg0: i32, %arg1: i32) -> (i32, i32, i32) {
    %c0_i32 = arith.constant 0 : i32
    %c0_i32_0 = arith.constant 0 : i32
    return %arg0, %arg1, %c0_i32 : i32, i32, i32
  }
}

</mosaic_0001>

<llo_original>
// kernel: resnext_bottleneck.1
$region0: #{resnext_bottleneck.1}
  #allocation0 [shape = 'u32[]', space=smem, size = 0x4, offset = 0x4, fixed_abs, tag = 'smem constant byte address 0x4 - core index']
  #allocation1 [shape = 'u32[144,128]{1,0:T(1,128)}', space=vmem, size = 0x12000, scoped, tag = 'internal scratch']
  %s0 = inlined_call_operand.hbm [shape: bf16[2,576,64], index: 0, kind: input, shape index: {}, may-alias: {0,1}]
  %s1 = inlined_call_operand.hbm [shape: bf16[2,576,64], index: 1, kind: input, shape index: {}, may-alias: {0,1}]
  %s2 = inlined_call_operand.hbm [shape: bf16[64,32], index: 2, kind: input, shape index: {}]
  %s3 = inlined_call_operand.hbm [shape: bf16[9,32,32], index: 3, kind: input, shape index: {}]
  %s4 = inlined_call_operand.hbm [shape: bf16[32,64], index: 4, kind: input, shape index: {}]
  %s5 = inlined_call_operand.hbm [shape: f32[2,512,64], index: 5, kind: output, shape index: {}]
  %s6 = sld [smem:[#allocation0]]
  $region73: #{resnext_bottleneck.1} parent=0
    _
  %s8 = ssub.s32 1, %s6
  %s9 = scalar_select 0, %s8, %s6
  $region1: #{resnext_bottleneck.1} parent=0
    #allocation2 [shape = 'u8[131072]{0}', space=vmem, size = 0x20000, scoped, tag = 'input window, operand 0']
    #allocation3 [shape = 's32[2]{0}', space=sflag, size = 0x8, scoped, tag = 'scoped memory for resnext_bottleneck.1']
    #allocation4 [shape = 's32[2]{0}', space=sflag, size = 0x8, scoped, tag = 'scoped memory for resnext_bottleneck.1']
    #allocation5 [shape = 'u8[32768]{0}', space=vmem, size = 0x8000, scoped, tag = 'input window, operand 1']
    #allocation6 [shape = 's32[2]{0}', space=sflag, size = 0x8, scoped, tag = 'scoped memory for resnext_bottleneck.1']
    #allocation7 [shape = 'u8[16384]{0}', space=vmem, size = 0x4000, scoped, tag = 'input window, operand 2, single buffered']
    #allocation8 [shape = 'u8[73728]{0}', space=vmem, size = 0x12000, scoped, tag = 'input window, operand 3, single buffered']
    #allocation9 [shape = 's32[1]{0}', space=sflag, size = 0x4, scoped, tag = 'scoped memory for resnext_bottleneck.1']
    #allocation10 [shape = 'u8[8192]{0}', space=vmem, size = 0x2000, scoped, tag = 'input window, operand 4, single buffered']
    #allocation11 [shape = 'u8[262144]{0}', space=vmem, size = 0x40000, scoped, tag = 'output window, operand 0']
    %10 = vsyncpa [#allocation3], 0
    %s11 = scalar_lea.sflag [#allocation3], 1
    %12 = vsyncpa %s11, 0
    %13 = vsyncpa [#allocation6], 0
    %s14 = scalar_lea.sflag [#allocation6], 1
    %15 = vsyncpa %s14, 0
    %16 = vsyncpa [#allocation9], 0
    %17 = vsyncpa [#allocation4], 0
    %s18 = scalar_lea.sflag [#allocation4], 1
    %19 = vsyncpa %s18, 0
    loop: start=0, step=1, limit=6
    $region2: #{resnext_bottleneck.1} parent=1 // loop_pre_header
      _
    $region3: #{resnext_bottleneck.1} parent=1 // loop_header
      %s21 = sphi 0, %s25
      %p22 = scmp.ge.s32.totalorder %s21, 6
      %s28 = sphi 0, %s40
      %s29 = sphi 0, %s36
      %s30 = sphi 0, %s28
      %s31 = sphi 0, %s29
      %s32 = sphi 0, %s30
      %s33 = sphi 0, %s31
      %s45 = sphi 0, %s47
      %s48 = sphi 0, %s45
      %s49 = sphi 0, %s48
      %s65 = sphi 0, %s49
      %s77 = sphi 0, %s79
      %s80 = sphi 0, %s77
      %s81 = sphi 0, %s80
      %s97 = sphi 0, %s81
      %s101 = sphi 0, %s101
      %s103 = sphi 0, %s101
      %s104 = sphi 0, %s103
      %s118 = sphi 0, %s104
      %s122 = sphi 0, %s122
      %s124 = sphi 0, %s122
      %s125 = sphi 0, %s124
      %s139 = sphi 0, %s125
      %s143 = sphi 0, %s143
      %s145 = sphi 0, %s143
      %s146 = sphi 0, %s145
      %s160 = sphi 0, %s146
      %s168 = sphi 0, %s170
      %s171 = sphi 0, %s168
      %s172 = sphi 0, %s171
      %s188 = sphi 0, %s172
    $region4: #{resnext_bottleneck.1} parent=1 // loop_header_branch
      %24 = sbr.rel (%p22) target = $region8
    $region5: #{resnext_bottleneck.1} parent=1 // loop_body
      %s26 = ssub.s32 %s21, 1
      %s27 = ssub.s32 %s21, 2
      %s34 = sadd.s32 1, %s29
      %p35 = scmp.ge.s32.totalorder %s34, 2
      %s36 = scalar_select %p35, 0, %s34
      %s37 = sadd.s32 1, %s28
      %s38 = scalar_select %p35, %s37, %s28
      %p39 = scmp.ge.s32.totalorder %s38, 2
      %s40 = scalar_select %p39, 0, %s38
      %s41 = ssub.s32 %s28, %s40
      %s42 = ssub.s32 %s29, %s36
      %s43 = sor.u32 %s41, %s42
      %p44 = scmp.eq.s32.totalorder %s43, 0
      %s46 = sadd.s32 %s45, 1
      %s47 = scalar_select %p44, %s45, %s46
      %p50 = pneg %p44
      %p51 = scmp.eq.s32.totalorder %s21, 3
      %p52 = por %p50, %p51
      %p53 = scmp.ne.s32.totalorder %s45, %s48
      %p54 = scmp.eq.s32.totalorder %s21, 0
      %p55 = por %p53, %p54
      %p56 = scmp.ne.s32.totalorder %s45, %s48
      %p57 = scmp.eq.s32.totalorder %s26, 3
      %p58 = por %p56, %p57
      %p59 = scmp.ne.s32.totalorder %s48, %s49
      %p60 = scmp.eq.s32.totalorder %s26, 0
      %p61 = por %p59, %p60
      %p62 = scmp.ne.s32.totalorder %s48, %s49
      %p63 = scmp.eq.s32.totalorder %s27, 3
      %p64 = por %p62, %p63
      %p66 = scmp.ne.s32.totalorder %s49, %s65
      %p67 = scmp.eq.s32.totalorder %s27, 0
      %p68 = por %p66, %p67
      %s69 = sadd.s32 %s29, 1
      %s70 = smul.u32 %s69, 4
      %s71 = sadd.s32 %s36, 1
      %s72 = smul.u32 %s71, 4
      %s73 = ssub.s32 %s28, %s40
      %s74 = ssub.s32 %s70, %s72
      %s75 = sor.u32 %s73, %s74
      %p76 = scmp.eq.s32.totalorder %s75, 0
      %s78 = sadd.s32 %s77, 1
      %s79 = scalar_select %p76, %s77, %s78
      %p82 = pneg %p76
      %p83 = scmp.eq.s32.totalorder %s21, 3
      %p84 = por %p82, %p83
      %p85 = scmp.ne.s32.totalorder %s77, %s80
      %p86 = scmp.eq.s32.totalorder %s21, 0
      %p87 = por %p85, %p86
      %p88 = scmp.ne.s32.totalorder %s77, %s80
      %p89 = scmp.eq.s32.totalorder %s26, 3
      %p90 = por %p88, %p89
      %p91 = scmp.ne.s32.totalorder %s80, %s81
      %p92 = scmp.eq.s32.totalorder %s26, 0
      %p93 = por %p91, %p92
      %p94 = scmp.ne.s32.totalorder %s80, %s81
      %p95 = scmp.eq.s32.totalorder %s27, 3
      %p96 = por %p94, %p95
      %p98 = scmp.ne.s32.totalorder %s81, %s97
      %p99 = scmp.eq.s32.totalorder %s27, 0
      %p100 = por %p98, %p99
      %s102 = sadd.s32 %s101, 1
      %p105 = scmp.eq.s32.totalorder %s21, 3
      %p106 = scmp.ne.s32.totalorder %s101, %s103
      %p107 = scmp.eq.s32.totalorder %s21, 0
      %p108 = por %p106, %p107
      %p109 = scmp.ne.s32.totalorder %s101, %s103
      %p110 = scmp.eq.s32.totalorder %s26, 3
      %p111 = por %p109, %p110
      %p112 = scmp.ne.s32.totalorder %s103, %s104
      %p113 = scmp.eq.s32.totalorder %s26, 0
      %p114 = por %p112, %p113
      %p115 = scmp.ne.s32.totalorder %s103, %s104
      %p116 = scmp.eq.s32.totalorder %s27, 3
      %p117 = por %p115, %p116
      %p119 = scmp.ne.s32.totalorder %s104, %s118
      %p120 = scmp.eq.s32.totalorder %s27, 0
      %p121 = por %p119, %p120
      %s123 = sadd.s32 %s122, 1
      %p126 = scmp.eq.s32.totalorder %s21, 3
      %p127 = scmp.ne.s32.totalorder %s122, %s124
      %p128 = scmp.eq.s32.totalorder %s21, 0
      %p129 = por %p127, %p128
      %p130 = scmp.ne.s32.totalorder %s122, %s124
      %p131 = scmp.eq.s32.totalorder %s26, 3
      %p132 = por %p130, %p131
      %p133 = scmp.ne.s32.totalorder %s124, %s125
      %p134 = scmp.eq.s32.totalorder %s26, 0
      %p135 = por %p133, %p134
      %p136 = scmp.ne.s32.totalorder %s124, %s125
      %p137 = scmp.eq.s32.totalorder %s27, 3
      %p138 = por %p136, %p137
      %p140 = scmp.ne.s32.totalorder %s125, %s139
      %p141 = scmp.eq.s32.totalorder %s27, 0
      %p142 = por %p140, %p141
      %s144 = sadd.s32 %s143, 1
      %p147 = scmp.eq.s32.totalorder %s21, 3
      %p148 = scmp.ne.s32.totalorder %s143, %s145
      %p149 = scmp.eq.s32.totalorder %s21, 0
      %p150 = por %p148, %p149
      %p151 = scmp.ne.s32.totalorder %s143, %s145
      %p152 = scmp.eq.s32.totalorder %s26, 3
      %p153 = por %p151, %p152
      %p154 = scmp.ne.s32.totalorder %s145, %s146
      %p155 = scmp.eq.s32.totalorder %s26, 0
      %p156 = por %p154, %p155
      %p157 = scmp.ne.s32.totalorder %s145, %s146
      %p158 = scmp.eq.s32.totalorder %s27, 3
      %p159 = por %p157, %p158
      %p161 = scmp.ne.s32.totalorder %s146, %s160
      %p162 = scmp.eq.s32.totalorder %s27, 0
      %p163 = por %p161, %p162
      %s164 = ssub.s32 %s28, %s40
      %s165 = ssub.s32 %s29, %s36
      %s166 = sor.u32 %s164, %s165
      %p167 = scmp.eq.s32.totalorder %s166, 0
      %s169 = sadd.s32 %s168, 1
      %s170 = scalar_select %p167, %s168, %s169
      %p173 = pneg %p167
      %p174 = scmp.eq.s32.totalorder %s21, 3
      %p175 = por %p173, %p174
      %p176 = scmp.ne.s32.totalorder %s168, %s171
      %p177 = scmp.eq.s32.totalorder %s21, 0
      %p178 = por %p176, %p177
      %p179 = scmp.ne.s32.totalorder %s168, %s171
      %p180 = scmp.eq.s32.totalorder %s26, 3
      %p181 = por %p179, %p180
      %p182 = scmp.ne.s32.totalorder %s171, %s172
      %p183 = scmp.eq.s32.totalorder %s26, 0
      %p184 = por %p182, %p183
      %p185 = scmp.ne.s32.totalorder %s171, %s172
      %p186 = scmp.eq.s32.totalorder %s27, 3
      %p187 = por %p185, %p186
      %p189 = scmp.ne.s32.totalorder %s172, %s188
      %p190 = scmp.eq.s32.totalorder %s27, 0
      %p191 = por %p189, %p190
      %p192 = scmp.le.s32.totalorder 1, %s21
      %p193 = scmp.lt.s32.totalorder %s21, 5
      %p194 = pnand %p192, %p193
      %p195 = pneg %p194
      // Predicated region
      $region9: #{resnext_bottleneck.1} parent=5 // pred_check
        _
      $region10: #{resnext_bottleneck.1} parent=5 // pred_check_branch
        %197 = sbr.rel (%p194) target = $region12
      $region11: #{resnext_bottleneck.1} parent=5 // pred_region
        %s198 = ssub.s32 %s21, 1
        // Predicated region
        $region13: #{resnext_bottleneck.1} parent=11 // pred_check
          %p199 = pneg %p114
        $region14: #{resnext_bottleneck.1} parent=11 // pred_check_branch
          %201 = sbr.rel (%p199) target = $region16
        $region15: #{resnext_bottleneck.1} parent=11 // pred_region
          %s203 = ssub.s32 512, 512
          %204 = vsyncadd [#allocation6], %s203
          %s205 = sshll.u32 [#allocation7], 4
          %s206 = int_to_ptr.vmem [resolvable:$true] %s205
          %211 = dma.hbm_to_vmem [thread:$0]  %s2, 512, %s206, [#allocation6], 64, 64, 4
        $region16: #{resnext_bottleneck.1} parent=11 // pred_fallthru
          _
        // Predicated region
        $region17: #{resnext_bottleneck.1} parent=11 // pred_check
          %p212 = pneg %p135
        $region18: #{resnext_bottleneck.1} parent=11 // pred_check_branch
          %214 = sbr.rel (%p212) target = $region20
        $region19: #{resnext_bottleneck.1} parent=11 // pred_region
          %s216 = ssub.s32 2304, 2304
          %217 = vsyncadd [#allocation9], %s216
          %s218 = sshll.u32 [#allocation8], 4
          %s219 = int_to_ptr.vmem [resolvable:$true] %s218
          %224 = dma.hbm_to_vmem [thread:$0]  %s3, 2304, %s219, [#allocation9], 64, 64, 4
        $region20: #{resnext_bottleneck.1} parent=11 // pred_fallthru
          _
        // Predicated region
        $region21: #{resnext_bottleneck.1} parent=11 // pred_check
          %p225 = pneg %p156
        $region22: #{resnext_bottleneck.1} parent=11 // pred_check_branch
          %227 = sbr.rel (%p225) target = $region24
        $region23: #{resnext_bottleneck.1} parent=11 // pred_region
          %s229 = ssub.s32 256, 256
          %230 = vsyncadd [#allocation9], %s229
          %s231 = sshll.u32 [#allocation10], 4
          %s232 = int_to_ptr.vmem [resolvable:$true] %s231
          %237 = dma.hbm_to_vmem [thread:$0]  %s4, 256, %s232, [#allocation9], 64, 64, 4
        $region24: #{resnext_bottleneck.1} parent=11 // pred_fallthru
          _
      $region12: #{resnext_bottleneck.1} parent=5 // pred_fallthru
        _
      %p238 = scmp.lt.s32.totalorder %s21, 4
      // Predicated region
      $region25: #{resnext_bottleneck.1} parent=5 // pred_check
        %p239 = pneg %p238
      $region26: #{resnext_bottleneck.1} parent=5 // pred_check_branch
        %241 = sbr.rel (%p239) target = $region28
      $region27: #{resnext_bottleneck.1} parent=5 // pred_region
        // Predicated region
        $region29: #{resnext_bottleneck.1} parent=27 // pred_check
          %p242 = pneg %p55
        $region30: #{resnext_bottleneck.1} parent=27 // pred_check_branch
          %244 = sbr.rel (%p242) target = $region32
        $region31: #{resnext_bottleneck.1} parent=27 // pred_region
          %s245 = sand.u32 %s45, 1
          %s246 = scalar_lea.sflag [#allocation3], %s245
          %s247 = sand.u32 %s45, 1
          %s248 = smul.addr %s247, 128
          %s249 = scalar_lea.vmem [#allocation2], %s248
          %s250 = smul.u32 32, %s29
          %s251 = ssub.s32 72, %s250
          %p252 = scmp.lt.s32.totalorder %s251, 32
          %s253 = scalar_select %p252, %s251, 32
          %s254 = smul.u32 64, %s253
          %s256 = ssub.s32 2048, %s254
          %257 = vsyncadd %s246, %s256
          %p258 = scmp.ne.s32.totalorder 0, %s254
          %s259 = smul.addr %s28, 72
          %s260 = sadd.s32 %s250, %s259
          %s261 = smul.addr %s260, 64
          %s262 = scalar_lea.hbm %s0, %s261
          %s263 = smul.u32 4, %s253
          %s264 = sshll.u32 %s249, 4
          %s265 = int_to_ptr.vmem [resolvable:$true] %s264
          %s266 = sshll.u32 %s263, 4
          %270 = dma.hbm_to_vmem [thread:$0]  (%p258), %s262, %s266, %s265, %s246, 64, 64, 4
        $region32: #{resnext_bottleneck.1} parent=27 // pred_fallthru
          _
        // Predicated region
        $region33: #{resnext_bottleneck.1} parent=27 // pred_check
          %p271 = pneg %p87
        $region34: #{resnext_bottleneck.1} parent=27 // pred_check_branch
          %273 = sbr.rel (%p271) target = $region36
        $region35: #{resnext_bottleneck.1} parent=27 // pred_region
          %s274 = sand.u32 %s21, 1
          %s275 = scalar_lea.sflag [#allocation6], %s274
          %s276 = sand.u32 %s77, 1
          %s277 = smul.addr %s276, 32
          %s278 = scalar_lea.vmem [#allocation5], %s277
          %s279 = sadd.s32 %s29, 1
          %s280 = smul.u32 %s279, 4
          %s281 = smul.u32 8, %s280
          %s283 = ssub.s32 512, 512
          %284 = vsyncadd %s275, %s283
          %s285 = smul.addr %s28, 72
          %s286 = sadd.s32 %s281, %s285
          %s287 = smul.addr %s286, 64
          %s288 = scalar_lea.hbm %s1, %s287
          %s289 = sshll.u32 %s278, 4
          %s290 = int_to_ptr.vmem [resolvable:$true] %s289
          %295 = dma.hbm_to_vmem [thread:$0]  %s288, 512, %s290, %s275, 64, 64, 4
        $region36: #{resnext_bottleneck.1} parent=27 // pred_fallthru
          _
      $region28: #{resnext_bottleneck.1} parent=5 // pred_fallthru
        _
      %p296 = scmp.le.s32.totalorder 1, %s21
      %p297 = scmp.lt.s32.totalorder %s21, 5
      %p298 = pnand %p296, %p297
      %p299 = pneg %p298
      // Predicated region
      $region37: #{resnext_bottleneck.1} parent=5 // pred_check
        _
      $region38: #{resnext_bottleneck.1} parent=5 // pred_check_branch
        %301 = sbr.rel (%p298) target = $region40
      $region39: #{resnext_bottleneck.1} parent=5 // pred_region
        %s302 = ssub.s32 %s21, 1
        %s303 = sand.u32 %s48, 1
        %s304 = scalar_lea.sflag [#allocation3], %s303
        %s305 = sand.u32 %s48, 1
        %s306 = smul.addr %s305, 128
        %s307 = scalar_lea.vmem [#allocation2], %s306
        // Predicated region
        $region41: #{resnext_bottleneck.1} parent=39 // pred_check
          %p308 = pneg %p61
        $region42: #{resnext_bottleneck.1} parent=39 // pred_check_branch
          %310 = sbr.rel (%p308) target = $region44
        $region43: #{resnext_bottleneck.1} parent=39 // pred_region
          %311 = dma.done %s304, 2048
        $region44: #{resnext_bottleneck.1} parent=39 // pred_fallthru
          _
        %s312 = sand.u32 %s26, 1
        %s313 = scalar_lea.sflag [#allocation6], %s312
        %s314 = sand.u32 %s80, 1
        %s315 = smul.addr %s314, 32
        %s316 = scalar_lea.vmem [#allocation5], %s315
        // Predicated region
        $region45: #{resnext_bottleneck.1} parent=39 // pred_check
          %p317 = pneg %p93
        $region46: #{resnext_bottleneck.1} parent=39 // pred_check_branch
          %319 = sbr.rel (%p317) target = $region48
        $region47: #{resnext_bottleneck.1} parent=39 // pred_region
          %320 = dma.done %s313, 512
        $region48: #{resnext_bottleneck.1} parent=39 // pred_fallthru
          _
        // Predicated region
        $region49: #{resnext_bottleneck.1} parent=39 // pred_check
          %p321 = pneg %p114
        $region50: #{resnext_bottleneck.1} parent=39 // pred_check_branch
          %323 = sbr.rel (%p321) target = $region52
        $region51: #{resnext_bottleneck.1} parent=39 // pred_region
          %324 = dma.done [#allocation6], 512
        $region52: #{resnext_bottleneck.1} parent=39 // pred_fallthru
          _
        // Predicated region
        $region53: #{resnext_bottleneck.1} parent=39 // pred_check
          %p325 = pneg %p135
        $region54: #{resnext_bottleneck.1} parent=39 // pred_check_branch
          %327 = sbr.rel (%p325) target = $region56
        $region55: #{resnext_bottleneck.1} parent=39 // pred_region
          %328 = dma.done [#allocation9], 2304
        $region56: #{resnext_bottleneck.1} parent=39 // pred_fallthru
          _
        // Predicated region
        $region57: #{resnext_bottleneck.1} parent=39 // pred_check
          %p329 = pneg %p156
        $region58: #{resnext_bottleneck.1} parent=39 // pred_check_branch
          %331 = sbr.rel (%p329) target = $region60
        $region59: #{resnext_bottleneck.1} parent=39 // pred_region
          %332 = dma.done [#allocation9], 256
        $region60: #{resnext_bottleneck.1} parent=39 // pred_fallthru
          _
        %s333 = sand.u32 %s48, 1
        %s334 = scalar_lea.sflag [#allocation3], %s333
        %s335 = sand.u32 %s48, 1
        %s336 = smul.addr %s335, 128
        %s337 = scalar_lea.vmem [#allocation2], %s336
        %p338 = pneg %p61
        %p339 = pneg %p58
        %s340 = sand.u32 %s26, 1
        %s341 = scalar_lea.sflag [#allocation6], %s340
        %s342 = sand.u32 %s80, 1
        %s343 = smul.addr %s342, 32
        %s344 = scalar_lea.vmem [#allocation5], %s343
        %p345 = pneg %p93
        %p346 = pneg %p90
        %p347 = pneg %p114
        %p348 = pneg %p111
        %p349 = pneg %p135
        %p350 = pneg %p132
        %p351 = pneg %p156
        %p352 = pneg %p153
        %p353 = pneg %p184
        %p354 = pneg %p181
        %s355 = sand.u32 %s171, 1
        %s356 = scalar_lea.sflag [#allocation4], %s355
        %s357 = sand.u32 %s171, 1
        %s358 = smul.addr %s357, 256
        %s359 = scalar_lea.vmem [#allocation11], %s358
        %s360 = smul.u32 32, %s31
        %s361 = ssub.s32 72, %s360
        %p362 = scmp.lt.s32.totalorder %s361, 32
        %s363 = scalar_select %p362, %s361, 32
        %s364 = smul.u32 64, %s363
        %s365 = sadd.s32 %s31, 1
        %s366 = smul.u32 %s365, 4
        %s367 = smul.u32 8, %s366
        %s368 = smul.u32 32, %s31
        %v370 = vld [vmem:[%s307] sm:$0xf]
        %v371 = vld [vmem:[%s307 + $0x4] sm:$0xf]
        %v372 = vld [vmem:[%s307 + $0x8] sm:$0xf]
        %v373 = vld [vmem:[%s307 + $0xc] sm:$0xf]
        %v374 = vld [vmem:[%s307 + $0x10] sm:$0xf]
        %v375 = vld [vmem:[%s307 + $0x14] sm:$0xf]
        %v376 = vld [vmem:[%s307 + $0x18] sm:$0xf]
        %v377 = vld [vmem:[%s307 + $0x1c] sm:$0xf]
        %v378 = vld [vmem:[%s307 + $0x20] sm:$0xf]
        %v379 = vld [vmem:[%s307 + $0x24] sm:$0xf]
        %v380 = vld [vmem:[%s307 + $0x28] sm:$0xf]
        %v381 = vld [vmem:[%s307 + $0x2c] sm:$0xf]
        %v382 = vld [vmem:[%s307 + $0x30] sm:$0xf]
        %v383 = vld [vmem:[%s307 + $0x34] sm:$0xf]
        %v384 = vld [vmem:[%s307 + $0x38] sm:$0xf]
        %v385 = vld [vmem:[%s307 + $0x3c] sm:$0xf]
        %v386 = vld [vmem:[%s307 + $0x40] sm:$0xf]
        %v387 = vld [vmem:[%s307 + $0x44] sm:$0xf]
        %v388 = vld [vmem:[%s307 + $0x48] sm:$0xf]
        %v389 = vld [vmem:[%s307 + $0x4c] sm:$0xf]
        %v390 = vld [vmem:[%s307 + $0x50] sm:$0xf]
        %v391 = vld [vmem:[%s307 + $0x54] sm:$0xf]
        %v392 = vld [vmem:[%s307 + $0x58] sm:$0xf]
        %v393 = vld [vmem:[%s307 + $0x5c] sm:$0xf]
        %v394 = vld [vmem:[%s307 + $0x60] sm:$0xf]
        %v395 = vld [vmem:[%s307 + $0x64] sm:$0xf]
        %v396 = vld [vmem:[%s307 + $0x68] sm:$0xf]
        %v397 = vld [vmem:[%s307 + $0x6c] sm:$0xf]
        %v398 = vld [vmem:[%s307 + $0x70] sm:$0xf]
        %v399 = vld [vmem:[%s307 + $0x74] sm:$0xf]
        %v400 = vld [vmem:[%s307 + $0x78] sm:$0xf]
        %v401 = vld [vmem:[%s307 + $0x7c] sm:$0xf]
        %v402 = vld [vmem:[%s316] sm:$0xf]
        %v403 = vld [vmem:[%s316 + $0x4] sm:$0xf]
        %v404 = vld [vmem:[%s316 + $0x8] sm:$0xf]
        %v405 = vld [vmem:[%s316 + $0xc] sm:$0xf]
        %v406 = vld [vmem:[%s316 + $0x10] sm:$0xf]
        %v407 = vld [vmem:[%s316 + $0x14] sm:$0xf]
        %v408 = vld [vmem:[%s316 + $0x18] sm:$0xf]
        %v409 = vld [vmem:[%s316 + $0x1c] sm:$0xf]
        %v410 = vld [vmem:[#allocation7] sm:$0xf]
        %v411 = vld [vmem:[#allocation7 + $0x4] sm:$0xf]
        %v412 = vld [vmem:[#allocation7 + $0x8] sm:$0xf]
        %v413 = vld [vmem:[#allocation7 + $0xc] sm:$0xf]
        %v414 = vld [vmem:[#allocation7 + $0x10] sm:$0xf]
        %v415 = vld [vmem:[#allocation7 + $0x14] sm:$0xf]
        %v416 = vld [vmem:[#allocation7 + $0x18] sm:$0xf]
        %v417 = vld [vmem:[#allocation7 + $0x1c] sm:$0xf]
        %v450 = vunpack.c.l.b16 %v370
        %v451 = vunpack.c.l.b16 %v371
        %v452 = vunpack.c.l.b16 %v372
        %v453 = vunpack.c.l.b16 %v373
        %v454 = vunpack.c.l.b16 %v374
        %v455 = vunpack.c.l.b16 %v375
        %v456 = vunpack.c.l.b16 %v376
        %v457 = vunpack.c.l.b16 %v377
        %v458 = vunpack.c.l.b16 %v378
        %v459 = vunpack.c.l.b16 %v379
        %v460 = vunpack.c.l.b16 %v380
        %v461 = vunpack.c.l.b16 %v381
        %v462 = vunpack.c.l.b16 %v382
        %v463 = vunpack.c.l.b16 %v383
        %v464 = vunpack.c.l.b16 %v384
        %v465 = vunpack.c.l.b16 %v385
        %v466 = vunpack.c.l.b16 %v386
        %v467 = vunpack.c.l.b16 %v387
        %v468 = vunpack.c.l.b16 %v388
        %v469 = vunpack.c.l.b16 %v389
        %v470 = vunpack.c.l.b16 %v390
        %v471 = vunpack.c.l.b16 %v391
        %v472 = vunpack.c.l.b16 %v392
        %v473 = vunpack.c.l.b16 %v393
        %v474 = vunpack.c.l.b16 %v394
        %v475 = vunpack.c.l.b16 %v395
        %v476 = vunpack.c.l.b16 %v396
        %v477 = vunpack.c.l.b16 %v397
        %v478 = vunpack.c.l.b16 %v398
        %v479 = vunpack.c.l.b16 %v399
        %v480 = vunpack.c.l.b16 %v400
        %v481 = vunpack.c.l.b16 %v401
        %v482 = vpack.c.b16 %v451, %v450
        %v483 = vpack.c.b16 %v453, %v452
        %v484 = vpack.c.b16 %v455, %v454
        %v485 = vpack.c.b16 %v457, %v456
        %v486 = vpack.c.b16 %v459, %v458
        %v487 = vpack.c.b16 %v461, %v460
        %v488 = vpack.c.b16 %v463, %v462
        %v489 = vpack.c.b16 %v465, %v464
        %v490 = vpack.c.b16 %v467, %v466
        %v491 = vpack.c.b16 %v469, %v468
        %v492 = vpack.c.b16 %v471, %v470
        %v493 = vpack.c.b16 %v473, %v472
        %v494 = vpack.c.b16 %v475, %v474
        %v495 = vpack.c.b16 %v477, %v476
        %v496 = vpack.c.b16 %v479, %v478
        %v497 = vpack.c.b16 %v481, %v480
        %v506 = vunpack.c.l.b16 %v410
        %v507 = vunpack.c.l.b16 %v411
        %v508 = vunpack.c.l.b16 %v412
        %v509 = vunpack.c.l.b16 %v413
        %v510 = vunpack.c.l.b16 %v414
        %v511 = vunpack.c.l.b16 %v415
        %v512 = vunpack.c.l.b16 %v416
        %v513 = vunpack.c.l.b16 %v417
        %v514 = vpack.c.b16 %v507, %v506
        %v515 = vpack.c.b16 %v509, %v508
        %v516 = vpack.c.b16 %v511, %v510
        %v517 = vpack.c.b16 %v513, %v512
        %vm522 = vcmask 523264
        %v524 = vsel %vm522, %v482, 0
        %v527 = vsel %vm522, %v483, 0
        %v530 = vsel %vm522, %v484, 0
        %v533 = vsel %vm522, %v485, 0
        %v536 = vsel %vm522, %v486, 0
        %v539 = vsel %vm522, %v487, 0
        %v542 = vsel %vm522, %v488, 0
        %v545 = vsel %vm522, %v489, 0
        %v548 = vsel %vm522, %v490, 0
        %v551 = vsel %vm522, %v491, 0
        %v554 = vsel %vm522, %v492, 0
        %v557 = vsel %vm522, %v493, 0
        %v560 = vsel %vm522, %v494, 0
        %v563 = vsel %vm522, %v495, 0
        %v566 = vsel %vm522, %v496, 0
        %v569 = vsel %vm522, %v497, 0
        %571 = vmatprep.subr.bf16.mxu0 0
        %572 = vmatpush1.bf16.msra.mxu0 %v514
        %573 = vmatprep.subr.bf16.mxu0 0
        %574 = vmatpush1.bf16.msra.mxu0 %v515
        %575 = vmatprep.subr.bf16.mxu0 0
        %576 = vmatpush1.bf16.msra.mxu0 %v516
        %577 = vmatprep.subr.bf16.mxu0 0
        %578 = vmatpush1.bf16.msra.mxu0 %v517
        %579 = vmatprep.subr.bf16.mxu0 0
        %580 = vmatpush1.bf16.msra.mxu0 0
        %581 = vmatprep.subr.bf16.mxu0 0
        %582 = vmatpush1.bf16.msra.mxu0 0
        %583 = vmatprep.subr.bf16.mxu0 0
        %584 = vmatpush1.bf16.msra.mxu0 0
        %585 = vmatprep.subr.bf16.mxu0 0
        %586 = vmatpush1.bf16.msra.mxu0 0
        %587 = vmatprep.subr.bf16.mxu0 0
        %588 = vmatpush1.bf16.msra.mxu0 0
        %589 = vmatprep.subr.bf16.mxu0 0
        %590 = vmatpush1.bf16.msra.mxu0 0
        %591 = vmatprep.subr.bf16.mxu0 0
        %592 = vmatpush1.bf16.msra.mxu0 0
        %593 = vmatprep.subr.bf16.mxu0 0
        %594 = vmatpush1.bf16.msra.mxu0 0
        %595 = vmatprep.subr.bf16.mxu0 0
        %596 = vmatpush1.bf16.msra.mxu0 0
        %597 = vmatprep.subr.bf16.mxu0 0
        %598 = vmatpush1.bf16.msra.mxu0 0
        %599 = vmatprep.subr.bf16.mxu0 0
        %600 = vmatpush1.bf16.msra.mxu0 0
        %601 = vmatprep.subr.bf16.mxu0 0
        %602 = vmatpush1.bf16.msra.mxu0 0
        %603 = vmatprep.mubr.bf16.mxu0 0
        %604 = vmatmul.mubr.bf16.gmra.mrb[0].mxu0 %v524
        %v605 = vpop.f32.mrb[0].mxu0
        %v606 = vadd.f32 0.0, %v605
        %v607 = vpop.f32.mrb[0].mxu0
        %v608 = vpop.f32.mrb[0].mxu0
        %v609 = vadd.f32 0.0, %v608
        %v610 = vpop.f32.mrb[0].mxu0
        %611 = vmatprep.mubr.bf16.mxu0 0
        %612 = vmatmul.mubr.bf16.gmra.mrb[0].mxu0 %v527
        %v613 = vpop.f32.mrb[0].mxu0
        %v614 = vadd.f32 0.0, %v613
        %v615 = vpop.f32.mrb[0].mxu0
        %v616 = vpop.f32.mrb[0].mxu0
        %v617 = vadd.f32 0.0, %v616
        %v618 = vpop.f32.mrb[0].mxu0
        %619 = vmatprep.mubr.bf16.mxu0 0
        %620 = vmatmul.mubr.bf16.gmra.mrb[0].mxu0 %v530
        %v621 = vpop.f32.mrb[0].mxu0
        %v622 = vadd.f32 0.0, %v621
        %v623 = vpop.f32.mrb[0].mxu0
        %v624 = vpop.f32.mrb[0].mxu0
        %v625 = vadd.f32 0.0, %v624
        %v626 = vpop.f32.mrb[0].mxu0
        %627 = vmatprep.mubr.bf16.mxu0 0
        %628 = vmatmul.mubr.bf16.gmra.mrb[0].mxu0 %v533
        %v629 = vpop.f32.mrb[0].mxu0
        %v630 = vadd.f32 0.0, %v629
        %v631 = vpop.f32.mrb[0].mxu0
        %v632 = vpop.f32.mrb[0].mxu0
        %v633 = vadd.f32 0.0, %v632
        %v634 = vpop.f32.mrb[0].mxu0
        %635 = vmatprep.mubr.bf16.mxu0 0
        %636 = vmatmul.mubr.bf16.gmra.mrb[0].mxu0 %v536
        %v637 = vpop.f32.mrb[0].mxu0
        %v638 = vadd.f32 0.0, %v637
        %v639 = vpop.f32.mrb[0].mxu0
        %v640 = vpop.f32.mrb[0].mxu0
        %v641 = vadd.f32 0.0, %v640
        %v642 = vpop.f32.mrb[0].mxu0
        %643 = vmatprep.mubr.bf16.mxu0 0
        %644 = vmatmul.mubr.bf16.gmra.mrb[0].mxu0 %v539
        %v645 = vpop.f32.mrb[0].mxu0
        %v646 = vadd.f32 0.0, %v645
        %v647 = vpop.f32.mrb[0].mxu0
        %v648 = vpop.f32.mrb[0].mxu0
        %v649 = vadd.f32 0.0, %v648
        %v650 = vpop.f32.mrb[0].mxu0
        %651 = vmatprep.mubr.bf16.mxu0 0
        %652 = vmatmul.mubr.bf16.gmra.mrb[0].mxu0 %v542
        %v653 = vpop.f32.mrb[0].mxu0
        %v654 = vadd.f32 0.0, %v653
        %v655 = vpop.f32.mrb[0].mxu0
        %v656 = vpop.f32.mrb[0].mxu0
        %v657 = vadd.f32 0.0, %v656
        %v658 = vpop.f32.mrb[0].mxu0
        %659 = vmatprep.mubr.bf16.mxu0 0
        %660 = vmatmul.mubr.bf16.gmra.mrb[0].mxu0 %v545
        %v661 = vpop.f32.mrb[0].mxu0
        %v662 = vadd.f32 0.0, %v661
        %v663 = vpop.f32.mrb[0].mxu0
        %v664 = vpop.f32.mrb[0].mxu0
        %v665 = vadd.f32 0.0, %v664
        %v666 = vpop.f32.mrb[0].mxu0
        %667 = vmatprep.mubr.bf16.mxu0 0
        %668 = vmatmul.mubr.bf16.gmra.mrb[0].mxu0 %v548
        %v669 = vpop.f32.mrb[0].mxu0
        %v670 = vadd.f32 0.0, %v669
        %v671 = vpop.f32.mrb[0].mxu0
        %v672 = vpop.f32.mrb[0].mxu0
        %v673 = vadd.f32 0.0, %v672
        %v674 = vpop.f32.mrb[0].mxu0
        %675 = vmatprep.mubr.bf16.mxu0 0
        %676 = vmatmul.mubr.bf16.gmra.mrb[0].mxu0 %v551
        %v677 = vpop.f32.mrb[0].mxu0
        %v678 = vadd.f32 0.0, %v677
        %v679 = vpop.f32.mrb[0].mxu0
        %v680 = vpop.f32.mrb[0].mxu0
        %v681 = vadd.f32 0.0, %v680
        %v682 = vpop.f32.mrb[0].mxu0
        %683 = vmatprep.mubr.bf16.mxu0 0
        %684 = vmatmul.mubr.bf16.gmra.mrb[0].mxu0 %v554
        %v685 = vpop.f32.mrb[0].mxu0
        %v686 = vadd.f32 0.0, %v685
        %v687 = vpop.f32.mrb[0].mxu0
        %v688 = vpop.f32.mrb[0].mxu0
        %v689 = vadd.f32 0.0, %v688
        %v690 = vpop.f32.mrb[0].mxu0
        %691 = vmatprep.mubr.bf16.mxu0 0
        %692 = vmatmul.mubr.bf16.gmra.mrb[0].mxu0 %v557
        %v693 = vpop.f32.mrb[0].mxu0
        %v694 = vadd.f32 0.0, %v693
        %v695 = vpop.f32.mrb[0].mxu0
        %v696 = vpop.f32.mrb[0].mxu0
        %v697 = vadd.f32 0.0, %v696
        %v698 = vpop.f32.mrb[0].mxu0
        %699 = vmatprep.mubr.bf16.mxu0 0
        %700 = vmatmul.mubr.bf16.gmra.mrb[0].mxu0 %v560
        %v701 = vpop.f32.mrb[0].mxu0
        %v702 = vadd.f32 0.0, %v701
        %v703 = vpop.f32.mrb[0].mxu0
        %v704 = vpop.f32.mrb[0].mxu0
        %v705 = vadd.f32 0.0, %v704
        %v706 = vpop.f32.mrb[0].mxu0
        %707 = vmatprep.mubr.bf16.mxu0 0
        %708 = vmatmul.mubr.bf16.gmra.mrb[0].mxu0 %v563
        %v709 = vpop.f32.mrb[0].mxu0
        %v710 = vadd.f32 0.0, %v709
        %v711 = vpop.f32.mrb[0].mxu0
        %v712 = vpop.f32.mrb[0].mxu0
        %v713 = vadd.f32 0.0, %v712
        %v714 = vpop.f32.mrb[0].mxu0
        %715 = vmatprep.mubr.bf16.mxu0 0
        %716 = vmatmul.mubr.bf16.gmra.mrb[0].mxu0 %v566
        %v717 = vpop.f32.mrb[0].mxu0
        %v718 = vadd.f32 0.0, %v717
        %v719 = vpop.f32.mrb[0].mxu0
        %v720 = vpop.f32.mrb[0].mxu0
        %v721 = vadd.f32 0.0, %v720
        %v722 = vpop.f32.mrb[0].mxu0
        %723 = vmatprep.mubr.bf16.mxu0 0
        %724 = vmatmul.mubr.bf16.gmra.mrb[0].mxu0 %v569
        %v725 = vpop.f32.mrb[0].mxu0
        %v726 = vadd.f32 0.0, %v725
        %v727 = vpop.f32.mrb[0].mxu0
        %v728 = vpop.f32.mrb[0].mxu0
        %v729 = vadd.f32 0.0, %v728
        %v730 = vpop.f32.mrb[0].mxu0
        %731 = vdwg.mxu0
        %vm732 = vcmp.gt.f32.partialorder %v606, 0.0
        %vm733 = vcmp.gt.f32.partialorder %v609, 0.0
        %vm734 = vcmp.gt.f32.partialorder %v614, 0.0
        %vm735 = vcmp.gt.f32.partialorder %v617, 0.0
        %vm736 = vcmp.gt.f32.partialorder %v622, 0.0
        %vm737 = vcmp.gt.f32.partialorder %v625, 0.0
        %vm738 = vcmp.gt.f32.partialorder %v630, 0.0
        %vm739 = vcmp.gt.f32.partialorder %v633, 0.0
        %vm740 = vcmp.gt.f32.partialorder %v638, 0.0
        %vm741 = vcmp.gt.f32.partialorder %v641, 0.0
        %vm742 = vcmp.gt.f32.partialorder %v646, 0.0
        %vm743 = vcmp.gt.f32.partialorder %v649, 0.0
        %vm744 = vcmp.gt.f32.partialorder %v654, 0.0
        %vm745 = vcmp.gt.f32.partialorder %v657, 0.0
        %vm746 = vcmp.gt.f32.partialorder %v662, 0.0
        %vm747 = vcmp.gt.f32.partialorder %v665, 0.0
        %vm748 = vcmp.gt.f32.partialorder %v670, 0.0
        %vm749 = vcmp.gt.f32.partialorder %v673, 0.0
        %vm750 = vcmp.gt.f32.partialorder %v678, 0.0
        %vm751 = vcmp.gt.f32.partialorder %v681, 0.0
        %vm752 = vcmp.gt.f32.partialorder %v686, 0.0
        %vm753 = vcmp.gt.f32.partialorder %v689, 0.0
        %vm754 = vcmp.gt.f32.partialorder %v694, 0.0
        %vm755 = vcmp.gt.f32.partialorder %v697, 0.0
        %vm756 = vcmp.gt.f32.partialorder %v702, 0.0
        %vm757 = vcmp.gt.f32.partialorder %v705, 0.0
        %vm758 = vcmp.gt.f32.partialorder %v710, 0.0
        %vm759 = vcmp.gt.f32.partialorder %v713, 0.0
        %vm760 = vcmp.gt.f32.partialorder %v718, 0.0
        %vm761 = vcmp.gt.f32.partialorder %v721, 0.0
        %vm762 = vcmp.gt.f32.partialorder %v726, 0.0
        %vm763 = vcmp.gt.f32.partialorder %v729, 0.0
        %v764 = vmul.f32 %v606, 0.2
        %v765 = vmul.f32 %v609, 0.2
        %v766 = vmul.f32 %v614, 0.2
        %v767 = vmul.f32 %v617, 0.2
        %v768 = vmul.f32 %v622, 0.2
        %v769 = vmul.f32 %v625, 0.2
        %v770 = vmul.f32 %v630, 0.2
        %v771 = vmul.f32 %v633, 0.2
        %v772 = vmul.f32 %v638, 0.2
        %v773 = vmul.f32 %v641, 0.2
        %v774 = vmul.f32 %v646, 0.2
        %v775 = vmul.f32 %v649, 0.2
        %v776 = vmul.f32 %v654, 0.2
        %v777 = vmul.f32 %v657, 0.2
        %v778 = vmul.f32 %v662, 0.2
        %v779 = vmul.f32 %v665, 0.2
        %v780 = vmul.f32 %v670, 0.2
        %v781 = vmul.f32 %v673, 0.2
        %v782 = vmul.f32 %v678, 0.2
        %v783 = vmul.f32 %v681, 0.2
        %v784 = vmul.f32 %v686, 0.2
        %v785 = vmul.f32 %v689, 0.2
        %v786 = vmul.f32 %v694, 0.2
        %v787 = vmul.f32 %v697, 0.2
        %v788 = vmul.f32 %v702, 0.2
        %v789 = vmul.f32 %v705, 0.2
        %v790 = vmul.f32 %v710, 0.2
        %v791 = vmul.f32 %v713, 0.2
        %v792 = vmul.f32 %v718, 0.2
        %v793 = vmul.f32 %v721, 0.2
        %v794 = vmul.f32 %v726, 0.2
        %v795 = vmul.f32 %v729, 0.2
        %v796 = vsel %vm732, %v606, %v764
        %v797 = vsel %vm733, %v609, %v765
        %v798 = vsel %vm734, %v614, %v766
        %v799 = vsel %vm735, %v617, %v767
        %v800 = vsel %vm736, %v622, %v768
        %v801 = vsel %vm737, %v625, %v769
        %v802 = vsel %vm738, %v630, %v770
        %v803 = vsel %vm739, %v633, %v771
        %v804 = vsel %vm740, %v638, %v772
        %v805 = vsel %vm741, %v641, %v773
        %v806 = vsel %vm742, %v646, %v774
        %v807 = vsel %vm743, %v649, %v775
        %v808 = vsel %vm744, %v654, %v776
        %v809 = vsel %vm745, %v657, %v777
        %v810 = vsel %vm746, %v662, %v778
        %v811 = vsel %vm747, %v665, %v779
        %v812 = vsel %vm748, %v670, %v780
        %v813 = vsel %vm749, %v673, %v781
        %v814 = vsel %vm750, %v678, %v782
        %v815 = vsel %vm751, %v681, %v783
        %v816 = vsel %vm752, %v686, %v784
        %v817 = vsel %vm753, %v689, %v785
        %v818 = vsel %vm754, %v694, %v786
        %v819 = vsel %vm755, %v697, %v787
        %v820 = vsel %vm756, %v702, %v788
        %v821 = vsel %vm757, %v705, %v789
        %v822 = vsel %vm758, %v710, %v790
        %v823 = vsel %vm759, %v713, %v791
        %v824 = vsel %vm760, %v718, %v792
        %v825 = vsel %vm761, %v721, %v793
        %v826 = vsel %vm762, %v726, %v794
        %v827 = vsel %vm763, %v729, %v795
        %v828 = vpack.c.bf16 %v797, %v796
        %v829 = vpack.c.bf16 %v799, %v798
        %v830 = vpack.c.bf16 %v801, %v800
        %v831 = vpack.c.bf16 %v803, %v802
        %v832 = vpack.c.bf16 %v805, %v804
        %v833 = vpack.c.bf16 %v807, %v806
        %v834 = vpack.c.bf16 %v809, %v808
        %v835 = vpack.c.bf16 %v811, %v810
        %v836 = vpack.c.bf16 %v813, %v812
        %v837 = vpack.c.bf16 %v815, %v814
        %v838 = vpack.c.bf16 %v817, %v816
        %v839 = vpack.c.bf16 %v819, %v818
        %v840 = vpack.c.bf16 %v821, %v820
        %v841 = vpack.c.bf16 %v823, %v822
        %v842 = vpack.c.bf16 %v825, %v824
        %v843 = vpack.c.bf16 %v827, %v826
        %v852 = vunpack.c.l.b16 %v402
        %v853 = vunpack.c.l.b16 %v403
        %v854 = vunpack.c.l.b16 %v404
        %v855 = vunpack.c.l.b16 %v405
        %v856 = vunpack.c.l.b16 %v406
        %v857 = vunpack.c.l.b16 %v407
        %v858 = vunpack.c.l.b16 %v408
        %v859 = vunpack.c.l.b16 %v409
        %v860 = vpack.c.b16 %v853, %v852
        %v861 = vpack.c.b16 %v855, %v854
        %v862 = vpack.c.b16 %v857, %v856
        %v863 = vpack.c.b16 %v859, %v858
        %v865 = vsel %vm522, %v860, 0
        %v868 = vsel %vm522, %v861, 0
        %v871 = vsel %vm522, %v862, 0
        %v874 = vsel %vm522, %v863, 0
        %876 = vmatprep.subr.bf16.mxu0 0
        %877 = vmatpush1.bf16.msra.mxu0 %v514
        %878 = vmatprep.subr.bf16.mxu0 0
        %879 = vmatpush1.bf16.msra.mxu0 %v515
        %880 = vmatprep.subr.bf16.mxu0 0
        %881 = vmatpush1.bf16.msra.mxu0 %v516
        %882 = vmatprep.subr.bf16.mxu0 0
        %883 = vmatpush1.bf16.msra.mxu0 %v517
        %884 = vmatprep.subr.bf16.mxu0 0
        %885 = vmatpush1.bf16.msra.mxu0 0
        %886 = vmatprep.subr.bf16.mxu0 0
        %887 = vmatpush1.bf16.msra.mxu0 0
        %888 = vmatprep.subr.bf16.mxu0 0
        %889 = vmatpush1.bf16.msra.mxu0 0
        %890 = vmatprep.subr.bf16.mxu0 0
        %891 = vmatpush1.bf16.msra.mxu0 0
        %892 = vmatprep.subr.bf16.mxu0 0
        %893 = vmatpush1.bf16.msra.mxu0 0
        %894 = vmatprep.subr.bf16.mxu0 0
        %895 = vmatpush1.bf16.msra.mxu0 0
        %896 = vmatprep.subr.bf16.mxu0 0
        %897 = vmatpush1.bf16.msra.mxu0 0
        %898 = vmatprep.subr.bf16.mxu0 0
        %899 = vmatpush1.bf16.msra.mxu0 0
        %900 = vmatprep.subr.bf16.mxu0 0
        %901 = vmatpush1.bf16.msra.mxu0 0
        %902 = vmatprep.subr.bf16.mxu0 0
        %903 = vmatpush1.bf16.msra.mxu0 0
        %904 = vmatprep.subr.bf16.mxu0 0
        %905 = vmatpush1.bf16.msra.mxu0 0
        %906 = vmatprep.subr.bf16.mxu0 0
        %907 = vmatpush1.bf16.msra.mxu0 0
        %908 = vmatprep.mubr.bf16.mxu0 0
        %909 = vmatmul.mubr.bf16.gmra.mrb[0].mxu0 %v865
        %v910 = vpop.f32.mrb[0].mxu0
        %v911 = vadd.f32 0.0, %v910
        %v912 = vpop.f32.mrb[0].mxu0
        %v913 = vpop.f32.mrb[0].mxu0
        %v914 = vadd.f32 0.0, %v913
        %v915 = vpop.f32.mrb[0].mxu0
        %916 = vmatprep.mubr.bf16.mxu0 0
        %917 = vmatmul.mubr.bf16.gmra.mrb[0].mxu0 %v868
        %v918 = vpop.f32.mrb[0].mxu0
        %v919 = vadd.f32 0.0, %v918
        %v920 = vpop.f32.mrb[0].mxu0
        %v921 = vpop.f32.mrb[0].mxu0
        %v922 = vadd.f32 0.0, %v921
        %v923 = vpop.f32.mrb[0].mxu0
        %924 = vmatprep.mubr.bf16.mxu0 0
        %925 = vmatmul.mubr.bf16.gmra.mrb[0].mxu0 %v871
        %v926 = vpop.f32.mrb[0].mxu0
        %v927 = vadd.f32 0.0, %v926
        %v928 = vpop.f32.mrb[0].mxu0
        %v929 = vpop.f32.mrb[0].mxu0
        %v930 = vadd.f32 0.0, %v929
        %v931 = vpop.f32.mrb[0].mxu0
        %932 = vmatprep.mubr.bf16.mxu0 0
        %933 = vmatmul.mubr.bf16.gmra.mrb[0].mxu0 %v874
        %v934 = vpop.f32.mrb[0].mxu0
        %v935 = vadd.f32 0.0, %v934
        %v936 = vpop.f32.mrb[0].mxu0
        %v937 = vpop.f32.mrb[0].mxu0
        %v938 = vadd.f32 0.0, %v937
        %v939 = vpop.f32.mrb[0].mxu0
        %940 = vdwg.mxu0
        %vm941 = vcmp.gt.f32.partialorder %v911, 0.0
        %vm942 = vcmp.gt.f32.partialorder %v914, 0.0
        %vm943 = vcmp.gt.f32.partialorder %v919, 0.0
        %vm944 = vcmp.gt.f32.partialorder %v922, 0.0
        %vm945 = vcmp.gt.f32.partialorder %v927, 0.0
        %vm946 = vcmp.gt.f32.partialorder %v930, 0.0
        %vm947 = vcmp.gt.f32.partialorder %v935, 0.0
        %vm948 = vcmp.gt.f32.partialorder %v938, 0.0
        %v949 = vmul.f32 %v911, 0.2
        %v950 = vmul.f32 %v914, 0.2
        %v951 = vmul.f32 %v919, 0.2
        %v952 = vmul.f32 %v922, 0.2
        %v953 = vmul.f32 %v927, 0.2
        %v954 = vmul.f32 %v930, 0.2
        %v955 = vmul.f32 %v935, 0.2
        %v956 = vmul.f32 %v938, 0.2
        %v957 = vsel %vm941, %v911, %v949
        %v958 = vsel %vm942, %v914, %v950
        %v959 = vsel %vm943, %v919, %v951
        %v960 = vsel %vm944, %v922, %v952
        %v961 = vsel %vm945, %v927, %v953
        %v962 = vsel %vm946, %v930, %v954
        %v963 = vsel %vm947, %v935, %v955
        %v964 = vsel %vm948, %v938, %v956
        %v965 = vpack.c.bf16 %v958, %v957
        %v966 = vpack.c.bf16 %v960, %v959
        %v967 = vpack.c.bf16 %v962, %v961
        %v968 = vpack.c.bf16 %v964, %v963
        %v970 = vshrl.u32 %v968, 16
        %v972 = vrot.slane %v970, 7
        %vm974 = vsmask.f32 256
        %v976 = vshrl.u32 %v828, 16
        %v978 = vrot.slane %v976, 7
        %v979 = vshll.u32 %v828, 16
        %v981 = vor.u32 %v978, %v979
        %v983 = vshrl.u32 %v829, 16
        %v985 = vrot.slane %v983, 7
        %v986 = vshll.u32 %v829, 16
        %v988 = vor.u32 %v985, %v986
        %v989 = vsel %vm974, %v978, %v988
        %v991 = vshrl.u32 %v830, 16
        %v993 = vrot.slane %v991, 7
        %v994 = vshll.u32 %v830, 16
        %v996 = vor.u32 %v993, %v994
        %v997 = vsel %vm974, %v985, %v996
        %v999 = vshrl.u32 %v831, 16
        %v1001 = vrot.slane %v999, 7
        %v1002 = vshll.u32 %v831, 16
        %v1004 = vor.u32 %v1001, %v1002
        %v1005 = vsel %vm974, %v993, %v1004
        %v1007 = vshrl.u32 %v832, 16
        %v1009 = vrot.slane %v1007, 7
        %v1010 = vshll.u32 %v832, 16
        %v1012 = vor.u32 %v1009, %v1010
        %v1013 = vsel %vm974, %v1001, %v1012
        %v1015 = vshrl.u32 %v833, 16
        %v1017 = vrot.slane %v1015, 7
        %v1018 = vshll.u32 %v833, 16
        %v1020 = vor.u32 %v1017, %v1018
        %v1021 = vsel %vm974, %v1009, %v1020
        %v1023 = vshrl.u32 %v834, 16
        %v1025 = vrot.slane %v1023, 7
        %v1026 = vshll.u32 %v834, 16
        %v1028 = vor.u32 %v1025, %v1026
        %v1029 = vsel %vm974, %v1017, %v1028
        %v1031 = vshrl.u32 %v835, 16
        %v1033 = vrot.slane %v1031, 7
        %v1034 = vshll.u32 %v835, 16
        %v1036 = vor.u32 %v1033, %v1034
        %v1037 = vsel %vm974, %v1025, %v1036
        %v1039 = vshrl.u32 %v836, 16
        %v1041 = vrot.slane %v1039, 7
        %v1042 = vshll.u32 %v836, 16
        %v1044 = vor.u32 %v1041, %v1042
        %v1045 = vsel %vm974, %v1033, %v1044
        %v1047 = vshrl.u32 %v837, 16
        %v1049 = vrot.slane %v1047, 7
        %v1050 = vshll.u32 %v837, 16
        %v1052 = vor.u32 %v1049, %v1050
        %v1053 = vsel %vm974, %v1041, %v1052
        %v1055 = vshrl.u32 %v838, 16
        %v1057 = vrot.slane %v1055, 7
        %v1058 = vshll.u32 %v838, 16
        %v1060 = vor.u32 %v1057, %v1058
        %v1061 = vsel %vm974, %v1049, %v1060
        %v1063 = vshrl.u32 %v839, 16
        %v1065 = vrot.slane %v1063, 7
        %v1066 = vshll.u32 %v839, 16
        %v1068 = vor.u32 %v1065, %v1066
        %v1069 = vsel %vm974, %v1057, %v1068
        %v1071 = vshrl.u32 %v840, 16
        %v1073 = vrot.slane %v1071, 7
        %v1074 = vshll.u32 %v840, 16
        %v1076 = vor.u32 %v1073, %v1074
        %v1077 = vsel %vm974, %v1065, %v1076
        %v1079 = vshrl.u32 %v841, 16
        %v1081 = vrot.slane %v1079, 7
        %v1082 = vshll.u32 %v841, 16
        %v1084 = vor.u32 %v1081, %v1082
        %v1085 = vsel %vm974, %v1073, %v1084
        %v1087 = vshrl.u32 %v842, 16
        %v1089 = vrot.slane %v1087, 7
        %v1090 = vshll.u32 %v842, 16
        %v1092 = vor.u32 %v1089, %v1090
        %v1093 = vsel %vm974, %v1081, %v1092
        %v1095 = vshrl.u32 %v843, 16
        %v1097 = vrot.slane %v1095, 7
        %v1098 = vshll.u32 %v843, 16
        %v1100 = vor.u32 %v1097, %v1098
        %v1101 = vsel %vm974, %v1089, %v1100
        %v1103 = vshrl.u32 %v965, 16
        %v1105 = vrot.slane %v1103, 7
        %v1106 = vshll.u32 %v965, 16
        %v1108 = vor.u32 %v1105, %v1106
        %v1109 = vsel %vm974, %v1097, %v1108
        %v1111 = vshrl.u32 %v966, 16
        %v1113 = vrot.slane %v1111, 7
        %v1114 = vshll.u32 %v966, 16
        %v1116 = vor.u32 %v1113, %v1114
        %v1117 = vsel %vm974, %v1105, %v1116
        %v1119 = vshrl.u32 %v967, 16
        %v1121 = vrot.slane %v1119, 7
        %v1122 = vshll.u32 %v967, 16
        %v1124 = vor.u32 %v1121, %v1122
        %v1125 = vsel %vm974, %v1113, %v1124
        %v1126 = vshll.u32 %v968, 16
        %v1128 = vor.u32 %v972, %v1126
        %v1129 = vsel %vm974, %v1121, %v1128
        %vm1131 = vcmask 1040384
        %vm1132 = vmand %vm1131, %vm974
        %v1133 = vsel %vm1132, %v972, %v981
        %vm1134 = vsmask.f32 7424
        %v1135 = vrot.slane %v979, 1
        %v1136 = vor.u32 %v976, %v1135
        %v1137 = vrot.slane %v986, 1
        %v1138 = vsel %vm1134, %v1136, %v1137
        %v1139 = vor.u32 %v983, %v1137
        %v1140 = vrot.slane %v994, 1
        %v1141 = vsel %vm1134, %v1139, %v1140
        %v1142 = vor.u32 %v991, %v1140
        %v1143 = vrot.slane %v1002, 1
        %v1144 = vsel %vm1134, %v1142, %v1143
        %v1145 = vor.u32 %v999, %v1143
        %v1146 = vrot.slane %v1010, 1
        %v1147 = vsel %vm1134, %v1145, %v1146
        %v1148 = vor.u32 %v1007, %v1146
        %v1149 = vrot.slane %v1018, 1
        %v1150 = vsel %vm1134, %v1148, %v1149
        %v1151 = vor.u32 %v1015, %v1149
        %v1152 = vrot.slane %v1026, 1
        %v1153 = vsel %vm1134, %v1151, %v1152
        %v1154 = vor.u32 %v1023, %v1152
        %v1155 = vrot.slane %v1034, 1
        %v1156 = vsel %vm1134, %v1154, %v1155
        %v1157 = vor.u32 %v1031, %v1155
        %v1158 = vrot.slane %v1042, 1
        %v1159 = vsel %vm1134, %v1157, %v1158
        %v1160 = vor.u32 %v1039, %v1158
        %v1161 = vrot.slane %v1050, 1
        %v1162 = vsel %vm1134, %v1160, %v1161
        %v1163 = vor.u32 %v1047, %v1161
        %v1164 = vrot.slane %v1058, 1
        %v1165 = vsel %vm1134, %v1163, %v1164
        %v1166 = vor.u32 %v1055, %v1164
        %v1167 = vrot.slane %v1066, 1
        %v1168 = vsel %vm1134, %v1166, %v1167
        %v1169 = vor.u32 %v1063, %v1167
        %v1170 = vrot.slane %v1074, 1
        %v1171 = vsel %vm1134, %v1169, %v1170
        %v1172 = vor.u32 %v1071, %v1170
        %v1173 = vrot.slane %v1082, 1
        %v1174 = vsel %vm1134, %v1172, %v1173
        %v1175 = vor.u32 %v1079, %v1173
        %v1176 = vrot.slane %v1090, 1
        %v1177 = vsel %vm1134, %v1175, %v1176
        %v1178 = vor.u32 %v1087, %v1176
        %v1179 = vrot.slane %v1098, 1
        %v1180 = vsel %vm1134, %v1178, %v1179
        %v1181 = vor.u32 %v1095, %v1179
        %v1182 = vrot.slane %v1106, 1
        %v1183 = vsel %vm1134, %v1181, %v1182
        %v1184 = vor.u32 %v1103, %v1182
        %v1185 = vrot.slane %v1114, 1
        %v1186 = vsel %vm1134, %v1184, %v1185
        %v1187 = vor.u32 %v1111, %v1185
        %v1188 = vrot.slane %v1122, 1
        %v1189 = vsel %vm1134, %v1187, %v1188
        %v1190 = vor.u32 %v1119, %v1188
        %v1191 = vrot.slane %v1126, 1
        %v1192 = vsel %vm1134, %v1190, %v1191
        %v1193 = vor.u32 %v970, %v1191
        %vm1196 = vcmask 1047552
        %vm1197 = vmand %vm1196, %vm1134
        %v1198 = vsel %vm1197, %v1193, %v1135
        %v1199 = vld [vmem:[#allocation8] sm:$0xf]
        %v1200 = vld [vmem:[#allocation8 + $0x4] sm:$0xf]
        %v1201 = vld [vmem:[#allocation8 + $0x8] sm:$0xf]
        %v1202 = vld [vmem:[#allocation8 + $0xc] sm:$0xf]
        %s1203 = scalar_lea.vmem [#allocation8], 16
        %v1204 = vld [vmem:[%s1203] sm:$0xf]
        %v1205 = vld [vmem:[%s1203 + $0x4] sm:$0xf]
        %v1206 = vld [vmem:[%s1203 + $0x8] sm:$0xf]
        %v1207 = vld [vmem:[%s1203 + $0xc] sm:$0xf]
        %v1212 = vunpack.c.l.b16 %v1204
        %v1213 = vunpack.c.l.b16 %v1205
        %v1214 = vunpack.c.l.b16 %v1206
        %v1215 = vunpack.c.l.b16 %v1207
        %v1216 = vpack.c.b16 %v1213, %v1212
        %v1217 = vpack.c.b16 %v1215, %v1214
        %vm1220 = vcmask 261120
        %v1221 = vsel %vm1220, %v828, 0
        %v1223 = vsel %vm1220, %v829, 0
        %v1225 = vsel %vm1220, %v830, 0
        %v1227 = vsel %vm1220, %v831, 0
        %v1229 = vsel %vm1220, %v832, 0
        %v1231 = vsel %vm1220, %v833, 0
        %v1233 = vsel %vm1220, %v834, 0
        %v1235 = vsel %vm1220, %v835, 0
        %v1237 = vsel %vm1220, %v836, 0
        %v1239 = vsel %vm1220, %v837, 0
        %v1241 = vsel %vm1220, %v838, 0
        %v1243 = vsel %vm1220, %v839, 0
        %v1245 = vsel %vm1220, %v840, 0
        %v1247 = vsel %vm1220, %v841, 0
        %v1249 = vsel %vm1220, %v842, 0
        %v1251 = vsel %vm1220, %v843, 0
        %1253 = vmatprep.subr.bf16.mxu0 0
        %1254 = vmatpush1.bf16.msra.mxu0 %v1216
        %1255 = vmatprep.subr.bf16.mxu0 0
        %1256 = vmatpush1.bf16.msra.mxu0 %v1217
        %1257 = vmatprep.subr.bf16.mxu0 0
        %1258 = vmatpush1.bf16.msra.mxu0 0
        %1259 = vmatprep.subr.bf16.mxu0 0
        %1260 = vmatpush1.bf16.msra.mxu0 0
        %1261 = vmatprep.subr.bf16.mxu0 0
        %1262 = vmatpush1.bf16.msra.mxu0 0
        %1263 = vmatprep.subr.bf16.mxu0 0
        %1264 = vmatpush1.bf16.msra.mxu0 0
        %1265 = vmatprep.subr.bf16.mxu0 0
        %1266 = vmatpush1.bf16.msra.mxu0 0
        %1267 = vmatprep.subr.bf16.mxu0 0
        %1268 = vmatpush1.bf16.msra.mxu0 0
        %1269 = vmatprep.subr.bf16.mxu0 0
        %1270 = vmatpush1.bf16.msra.mxu0 0
        %1271 = vmatprep.subr.bf16.mxu0 0
        %1272 = vmatpush1.bf16.msra.mxu0 0
        %1273 = vmatprep.subr.bf16.mxu0 0
        %1274 = vmatpush1.bf16.msra.mxu0 0
        %1275 = vmatprep.subr.bf16.mxu0 0
        %1276 = vmatpush1.bf16.msra.mxu0 0
        %1277 = vmatprep.subr.bf16.mxu0 0
        %1278 = vmatpush1.bf16.msra.mxu0 0
        %1279 = vmatprep.subr.bf16.mxu0 0
        %1280 = vmatpush1.bf16.msra.mxu0 0
        %1281 = vmatprep.subr.bf16.mxu0 0
        %1282 = vmatpush1.bf16.msra.mxu0 0
        %1283 = vmatprep.subr.bf16.mxu0 0
        %1284 = vmatpush1.bf16.msra.mxu0 0
        %1285 = vmatprep.mubr.bf16.mxu0 0
        %1286 = vmatmul.mubr.bf16.gmra.mrb[0].mxu0 %v1221
        %v1287 = vpop.f32.mrb[0].mxu0
        %v1288 = vadd.f32 0.0, %v1287
        %v1289 = vpop.f32.mrb[0].mxu0
        %v1290 = vpop.f32.mrb[0].mxu0
        %v1291 = vadd.f32 0.0, %v1290
        %v1292 = vpop.f32.mrb[0].mxu0
        %1293 = vmatprep.mubr.bf16.mxu0 0
        %1294 = vmatmul.mubr.bf16.gmra.mrb[0].mxu0 %v1223
        %v1295 = vpop.f32.mrb[0].mxu0
        %v1296 = vadd.f32 0.0, %v1295
        %v1297 = vpop.f32.mrb[0].mxu0
        %v1298 = vpop.f32.mrb[0].mxu0
        %v1299 = vadd.f32 0.0, %v1298
        %v1300 = vpop.f32.mrb[0].mxu0
        %1301 = vmatprep.mubr.bf16.mxu0 0
        %1302 = vmatmul.mubr.bf16.gmra.mrb[0].mxu0 %v1225
        %v1303 = vpop.f32.mrb[0].mxu0
        %v1304 = vadd.f32 0.0, %v1303
        %v1305 = vpop.f32.mrb[0].mxu0
        %v1306 = vpop.f32.mrb[0].mxu0
        %v1307 = vadd.f32 0.0, %v1306
        %v1308 = vpop.f32.mrb[0].mxu0
        %1309 = vmatprep.mubr.bf16.mxu0 0
        %1310 = vmatmul.mubr.bf16.gmra.mrb[0].mxu0 %v1227
        %v1311 = vpop.f32.mrb[0].mxu0
        %v1312 = vadd.f32 0.0, %v1311
        %v1313 = vpop.f32.mrb[0].mxu0
        %v1314 = vpop.f32.mrb[0].mxu0
        %v1315 = vadd.f32 0.0, %v1314
        %v1316 = vpop.f32.mrb[0].mxu0
        %1317 = vmatprep.mubr.bf16.mxu0 0
        %1318 = vmatmul.mubr.bf16.gmra.mrb[0].mxu0 %v1229
        %v1319 = vpop.f32.mrb[0].mxu0
        %v1320 = vadd.f32 0.0, %v1319
        %v1321 = vpop.f32.mrb[0].mxu0
        %v1322 = vpop.f32.mrb[0].mxu0
        %v1323 = vadd.f32 0.0, %v1322
        %v1324 = vpop.f32.mrb[0].mxu0
        %1325 = vmatprep.mubr.bf16.mxu0 0
        %1326 = vmatmul.mubr.bf16.gmra.mrb[0].mxu0 %v1231
        %v1327 = vpop.f32.mrb[0].mxu0
        %v1328 = vadd.f32 0.0, %v1327
        %v1329 = vpop.f32.mrb[0].mxu0
        %v1330 = vpop.f32.mrb[0].mxu0
        %v1331 = vadd.f32 0.0, %v1330
        %v1332 = vpop.f32.mrb[0].mxu0
        %1333 = vmatprep.mubr.bf16.mxu0 0
        %1334 = vmatmul.mubr.bf16.gmra.mrb[0].mxu0 %v1233
        %v1335 = vpop.f32.mrb[0].mxu0
        %v1336 = vadd.f32 0.0, %v1335
        %v1337 = vpop.f32.mrb[0].mxu0
        %v1338 = vpop.f32.mrb[0].mxu0
        %v1339 = vadd.f32 0.0, %v1338
        %v1340 = vpop.f32.mrb[0].mxu0
        %1341 = vmatprep.mubr.bf16.mxu0 0
        %1342 = vmatmul.mubr.bf16.gmra.mrb[0].mxu0 %v1235
        %v1343 = vpop.f32.mrb[0].mxu0
        %v1344 = vadd.f32 0.0, %v1343
        %v1345 = vpop.f32.mrb[0].mxu0
        %v1346 = vpop.f32.mrb[0].mxu0
        %v1347 = vadd.f32 0.0, %v1346
        %v1348 = vpop.f32.mrb[0].mxu0
        %1349 = vmatprep.mubr.bf16.mxu0 0
        %1350 = vmatmul.mubr.bf16.gmra.mrb[0].mxu0 %v1237
        %v1351 = vpop.f32.mrb[0].mxu0
        %v1352 = vadd.f32 0.0, %v1351
        %v1353 = vpop.f32.mrb[0].mxu0
        %v1354 = vpop.f32.mrb[0].mxu0
        %v1355 = vadd.f32 0.0, %v1354
        %v1356 = vpop.f32.mrb[0].mxu0
        %1357 = vmatprep.mubr.bf16.mxu0 0
        %1358 = vmatmul.mubr.bf16.gmra.mrb[0].mxu0 %v1239
        %v1359 = vpop.f32.mrb[0].mxu0
        %v1360 = vadd.f32 0.0, %v1359
        %v1361 = vpop.f32.mrb[0].mxu0
        %v1362 = vpop.f32.mrb[0].mxu0
        %v1363 = vadd.f32 0.0, %v1362
        %v1364 = vpop.f32.mrb[0].mxu0
        %1365 = vmatprep.mubr.bf16.mxu0 0
        %1366 = vmatmul.mubr.bf16.gmra.mrb[0].mxu0 %v1241
        %v1367 = vpop.f32.mrb[0].mxu0
        %v1368 = vadd.f32 0.0, %v1367
        %v1369 = vpop.f32.mrb[0].mxu0
        %v1370 = vpop.f32.mrb[0].mxu0
        %v1371 = vadd.f32 0.0, %v1370
        %v1372 = vpop.f32.mrb[0].mxu0
        %1373 = vmatprep.mubr.bf16.mxu0 0
        %1374 = vmatmul.mubr.bf16.gmra.mrb[0].mxu0 %v1243
        %v1375 = vpop.f32.mrb[0].mxu0
        %v1376 = vadd.f32 0.0, %v1375
        %v1377 = vpop.f32.mrb[0].mxu0
        %v1378 = vpop.f32.mrb[0].mxu0
        %v1379 = vadd.f32 0.0, %v1378
        %v1380 = vpop.f32.mrb[0].mxu0
        %1381 = vmatprep.mubr.bf16.mxu0 0
        %1382 = vmatmul.mubr.bf16.gmra.mrb[0].mxu0 %v1245
        %v1383 = vpop.f32.mrb[0].mxu0
        %v1384 = vadd.f32 0.0, %v1383
        %v1385 = vpop.f32.mrb[0].mxu0
        %v1386 = vpop.f32.mrb[0].mxu0
        %v1387 = vadd.f32 0.0, %v1386
        %v1388 = vpop.f32.mrb[0].mxu0
        %1389 = vmatprep.mubr.bf16.mxu0 0
        %1390 = vmatmul.mubr.bf16.gmra.mrb[0].mxu0 %v1247
        %v1391 = vpop.f32.mrb[0].mxu0
        %v1392 = vadd.f32 0.0, %v1391
        %v1393 = vpop.f32.mrb[0].mxu0
        %v1394 = vpop.f32.mrb[0].mxu0
        %v1395 = vadd.f32 0.0, %v1394
        %v1396 = vpop.f32.mrb[0].mxu0
        %1397 = vmatprep.mubr.bf16.mxu0 0
        %1398 = vmatmul.mubr.bf16.gmra.mrb[0].mxu0 %v1249
        %v1399 = vpop.f32.mrb[0].mxu0
        %v1400 = vadd.f32 0.0, %v1399
        %v1401 = vpop.f32.mrb[0].mxu0
        %v1402 = vpop.f32.mrb[0].mxu0
        %v1403 = vadd.f32 0.0, %v1402
        %v1404 = vpop.f32.mrb[0].mxu0
        %1405 = vmatprep.mubr.bf16.mxu0 0
        %1406 = vmatmul.mubr.bf16.gmra.mrb[0].mxu0 %v1251
        %v1407 = vpop.f32.mrb[0].mxu0
        %v1408 = vadd.f32 0.0, %v1407
        %v1409 = vpop.f32.mrb[0].mxu0
        %v1410 = vpop.f32.mrb[0].mxu0
        %v1411 = vadd.f32 0.0, %v1410
        %v1412 = vpop.f32.mrb[0].mxu0
        %1413 = vdwg.mxu0
        %v1418 = vunpack.c.l.b16 %v1199
        %v1419 = vunpack.c.l.b16 %v1200
        %v1420 = vunpack.c.l.b16 %v1201
        %v1421 = vunpack.c.l.b16 %v1202
        %v1422 = vpack.c.b16 %v1419, %v1418
        %v1423 = vpack.c.b16 %v1421, %v1420
        %v1427 = vsel %vm1220, %v1133, 0
        %v1430 = vsel %vm1220, %v989, 0
        %v1433 = vsel %vm1220, %v997, 0
        %v1436 = vsel %vm1220, %v1005, 0
        %v1439 = vsel %vm1220, %v1013, 0
        %v1442 = vsel %vm1220, %v1021, 0
        %v1445 = vsel %vm1220, %v1029, 0
        %v1448 = vsel %vm1220, %v1037, 0
        %v1451 = vsel %vm1220, %v1045, 0
        %v1454 = vsel %vm1220, %v1053, 0
        %v1457 = vsel %vm1220, %v1061, 0
        %v1460 = vsel %vm1220, %v1069, 0
        %v1463 = vsel %vm1220, %v1077, 0
        %v1466 = vsel %vm1220, %v1085, 0
        %v1469 = vsel %vm1220, %v1093, 0
        %v1472 = vsel %vm1220, %v1101, 0
        %1474 = vmatprep.subr.bf16.mxu0 0
        %1475 = vmatpush1.bf16.msra.mxu0 %v1422
        %1476 = vmatprep.subr.bf16.mxu0 0
        %1477 = vmatpush1.bf16.msra.mxu0 %v1423
        %1478 = vmatprep.subr.bf16.mxu0 0
        %1479 = vmatpush1.bf16.msra.mxu0 0
        %1480 = vmatprep.subr.bf16.mxu0 0
        %1481 = vmatpush1.bf16.msra.mxu0 0
        %1482 = vmatprep.subr.bf16.mxu0 0
        %1483 = vmatpush1.bf16.msra.mxu0 0
        %1484 = vmatprep.subr.bf16.mxu0 0
        %1485 = vmatpush1.bf16.msra.mxu0 0
        %1486 = vmatprep.subr.bf16.mxu0 0
        %1487 = vmatpush1.bf16.msra.mxu0 0
        %1488 = vmatprep.subr.bf16.mxu0 0
        %1489 = vmatpush1.bf16.msra.mxu0 0
        %1490 = vmatprep.subr.bf16.mxu0 0
        %1491 = vmatpush1.bf16.msra.mxu0 0
        %1492 = vmatprep.subr.bf16.mxu0 0
        %1493 = vmatpush1.bf16.msra.mxu0 0
        %1494 = vmatprep.subr.bf16.mxu0 0
        %1495 = vmatpush1.bf16.msra.mxu0 0
        %1496 = vmatprep.subr.bf16.mxu0 0
        %1497 = vmatpush1.bf16.msra.mxu0 0
        %1498 = vmatprep.subr.bf16.mxu0 0
        %1499 = vmatpush1.bf16.msra.mxu0 0
        %1500 = vmatprep.subr.bf16.mxu0 0
        %1501 = vmatpush1.bf16.msra.mxu0 0
        %1502 = vmatprep.subr.bf16.mxu0 0
        %1503 = vmatpush1.bf16.msra.mxu0 0
        %1504 = vmatprep.subr.bf16.mxu0 0
        %1505 = vmatpush1.bf16.msra.mxu0 0
        %1506 = vmatprep.mubr.bf16.mxu0 0
        %1507 = vmatmul.mubr.bf16.gmra.mrb[0].mxu0 %v1427
        %v1508 = vpop.f32.mrb[0].mxu0
        %v1509 = vadd.f32 %v1288, %v1508
        %v1510 = vpop.f32.mrb[0].mxu0
        %v1511 = vpop.f32.mrb[0].mxu0
        %v1512 = vadd.f32 %v1291, %v1511
        %v1513 = vpop.f32.mrb[0].mxu0
        %1514 = vmatprep.mubr.bf16.mxu0 0
        %1515 = vmatmul.mubr.bf16.gmra.mrb[0].mxu0 %v1430
        %v1516 = vpop.f32.mrb[0].mxu0
        %v1517 = vadd.f32 %v1296, %v1516
        %v1518 = vpop.f32.mrb[0].mxu0
        %v1519 = vpop.f32.mrb[0].mxu0
        %v1520 = vadd.f32 %v1299, %v1519
        %v1521 = vpop.f32.mrb[0].mxu0
        %1522 = vmatprep.mubr.bf16.mxu0 0
        %1523 = vmatmul.mubr.bf16.gmra.mrb[0].mxu0 %v1433
        %v1524 = vpop.f32.mrb[0].mxu0
        %v1525 = vadd.f32 %v1304, %v1524
        %v1526 = vpop.f32.mrb[0].mxu0
        %v1527 = vpop.f32.mrb[0].mxu0
        %v1528 = vadd.f32 %v1307, %v1527
        %v1529 = vpop.f32.mrb[0].mxu0
        %1530 = vmatprep.mubr.bf16.mxu0 0
        %1531 = vmatmul.mubr.bf16.gmra.mrb[0].mxu0 %v1436
        %v1532 = vpop.f32.mrb[0].mxu0
        %v1533 = vadd.f32 %v1312, %v1532
        %v1534 = vpop.f32.mrb[0].mxu0
        %v1535 = vpop.f32.mrb[0].mxu0
        %v1536 = vadd.f32 %v1315, %v1535
        %v1537 = vpop.f32.mrb[0].mxu0
        %1538 = vmatprep.mubr.bf16.mxu0 0
        %1539 = vmatmul.mubr.bf16.gmra.mrb[0].mxu0 %v1439
        %v1540 = vpop.f32.mrb[0].mxu0
        %v1541 = vadd.f32 %v1320, %v1540
        %v1542 = vpop.f32.mrb[0].mxu0
        %v1543 = vpop.f32.mrb[0].mxu0
        %v1544 = vadd.f32 %v1323, %v1543
        %v1545 = vpop.f32.mrb[0].mxu0
        %1546 = vmatprep.mubr.bf16.mxu0 0
        %1547 = vmatmul.mubr.bf16.gmra.mrb[0].mxu0 %v1442
        %v1548 = vpop.f32.mrb[0].mxu0
        %v1549 = vadd.f32 %v1328, %v1548
        %v1550 = vpop.f32.mrb[0].mxu0
        %v1551 = vpop.f32.mrb[0].mxu0
        %v1552 = vadd.f32 %v1331, %v1551
        %v1553 = vpop.f32.mrb[0].mxu0
        %1554 = vmatprep.mubr.bf16.mxu0 0
        %1555 = vmatmul.mubr.bf16.gmra.mrb[0].mxu0 %v1445
        %v1556 = vpop.f32.mrb[0].mxu0
        %v1557 = vadd.f32 %v1336, %v1556
        %v1558 = vpop.f32.mrb[0].mxu0
        %v1559 = vpop.f32.mrb[0].mxu0
        %v1560 = vadd.f32 %v1339, %v1559
        %v1561 = vpop.f32.mrb[0].mxu0
        %1562 = vmatprep.mubr.bf16.mxu0 0
        %1563 = vmatmul.mubr.bf16.gmra.mrb[0].mxu0 %v1448
        %v1564 = vpop.f32.mrb[0].mxu0
        %v1565 = vadd.f32 %v1344, %v1564
        %v1566 = vpop.f32.mrb[0].mxu0
        %v1567 = vpop.f32.mrb[0].mxu0
        %v1568 = vadd.f32 %v1347, %v1567
        %v1569 = vpop.f32.mrb[0].mxu0
        %1570 = vmatprep.mubr.bf16.mxu0 0
        %1571 = vmatmul.mubr.bf16.gmra.mrb[0].mxu0 %v1451
        %v1572 = vpop.f32.mrb[0].mxu0
        %v1573 = vadd.f32 %v1352, %v1572
        %v1574 = vpop.f32.mrb[0].mxu0
        %v1575 = vpop.f32.mrb[0].mxu0
        %v1576 = vadd.f32 %v1355, %v1575
        %v1577 = vpop.f32.mrb[0].mxu0
        %1578 = vmatprep.mubr.bf16.mxu0 0
        %1579 = vmatmul.mubr.bf16.gmra.mrb[0].mxu0 %v1454
        %v1580 = vpop.f32.mrb[0].mxu0
        %v1581 = vadd.f32 %v1360, %v1580
        %v1582 = vpop.f32.mrb[0].mxu0
        %v1583 = vpop.f32.mrb[0].mxu0
        %v1584 = vadd.f32 %v1363, %v1583
        %v1585 = vpop.f32.mrb[0].mxu0
        %1586 = vmatprep.mubr.bf16.mxu0 0
        %1587 = vmatmul.mubr.bf16.gmra.mrb[0].mxu0 %v1457
        %v1588 = vpop.f32.mrb[0].mxu0
        %v1589 = vadd.f32 %v1368, %v1588
        %v1590 = vpop.f32.mrb[0].mxu0
        %v1591 = vpop.f32.mrb[0].mxu0
        %v1592 = vadd.f32 %v1371, %v1591
        %v1593 = vpop.f32.mrb[0].mxu0
        %1594 = vmatprep.mubr.bf16.mxu0 0
        %1595 = vmatmul.mubr.bf16.gmra.mrb[0].mxu0 %v1460
        %v1596 = vpop.f32.mrb[0].mxu0
        %v1597 = vadd.f32 %v1376, %v1596
        %v1598 = vpop.f32.mrb[0].mxu0
        %v1599 = vpop.f32.mrb[0].mxu0
        %v1600 = vadd.f32 %v1379, %v1599
        %v1601 = vpop.f32.mrb[0].mxu0
        %1602 = vmatprep.mubr.bf16.mxu0 0
        %1603 = vmatmul.mubr.bf16.gmra.mrb[0].mxu0 %v1463
        %v1604 = vpop.f32.mrb[0].mxu0
        %v1605 = vadd.f32 %v1384, %v1604
        %v1606 = vpop.f32.mrb[0].mxu0
        %v1607 = vpop.f32.mrb[0].mxu0
        %v1608 = vadd.f32 %v1387, %v1607
        %v1609 = vpop.f32.mrb[0].mxu0
        %1610 = vmatprep.mubr.bf16.mxu0 0
        %1611 = vmatmul.mubr.bf16.gmra.mrb[0].mxu0 %v1466
        %v1612 = vpop.f32.mrb[0].mxu0
        %v1613 = vadd.f32 %v1392, %v1612
        %v1614 = vpop.f32.mrb[0].mxu0
        %v1615 = vpop.f32.mrb[0].mxu0
        %v1616 = vadd.f32 %v1395, %v1615
        %v1617 = vpop.f32.mrb[0].mxu0
        %1618 = vmatprep.mubr.bf16.mxu0 0
        %1619 = vmatmul.mubr.bf16.gmra.mrb[0].mxu0 %v1469
        %v1620 = vpop.f32.mrb[0].mxu0
        %v1621 = vadd.f32 %v1400, %v1620
        %v1622 = vpop.f32.mrb[0].mxu0
        %v1623 = vpop.f32.mrb[0].mxu0
        %v1624 = vadd.f32 %v1403, %v1623
        %v1625 = vpop.f32.mrb[0].mxu0
        %1626 = vmatprep.mubr.bf16.mxu0 0
        %1627 = vmatmul.mubr.bf16.gmra.mrb[0].mxu0 %v1472
        %v1628 = vpop.f32.mrb[0].mxu0
        %v1629 = vadd.f32 %v1408, %v1628
        %v1630 = vpop.f32.mrb[0].mxu0
        %v1631 = vpop.f32.mrb[0].mxu0
        %v1632 = vadd.f32 %v1411, %v1631
        %v1633 = vpop.f32.mrb[0].mxu0
        %1634 = vdwg.mxu0
        %s1635 = scalar_lea.vmem [#allocation8], 32
        %v1636 = vld [vmem:[%s1635] sm:$0xf]
        %v1637 = vld [vmem:[%s1635 + $0x4] sm:$0xf]
        %v1638 = vld [vmem:[%s1635 + $0x8] sm:$0xf]
        %v1639 = vld [vmem:[%s1635 + $0xc] sm:$0xf]
        %v1644 = vunpack.c.l.b16 %v1636
        %v1645 = vunpack.c.l.b16 %v1637
        %v1646 = vunpack.c.l.b16 %v1638
        %v1647 = vunpack.c.l.b16 %v1639
        %v1648 = vpack.c.b16 %v1645, %v1644
        %v1649 = vpack.c.b16 %v1647, %v1646
        %v1653 = vsel %vm1220, %v1138, 0
        %v1656 = vsel %vm1220, %v1141, 0
        %v1659 = vsel %vm1220, %v1144, 0
        %v1662 = vsel %vm1220, %v1147, 0
        %v1665 = vsel %vm1220, %v1150, 0
        %v1668 = vsel %vm1220, %v1153, 0
        %v1671 = vsel %vm1220, %v1156, 0
        %v1674 = vsel %vm1220, %v1159, 0
        %v1677 = vsel %vm1220, %v1162, 0
        %v1680 = vsel %vm1220, %v1165, 0
        %v1683 = vsel %vm1220, %v1168, 0
        %v1686 = vsel %vm1220, %v1171, 0
        %v1689 = vsel %vm1220, %v1174, 0
        %v1692 = vsel %vm1220, %v1177, 0
        %v1695 = vsel %vm1220, %v1180, 0
        %v1698 = vsel %vm1220, %v1183, 0
        %1700 = vmatprep.subr.bf16.mxu0 0
        %1701 = vmatpush1.bf16.msra.mxu0 %v1648
        %1702 = vmatprep.subr.bf16.mxu0 0
        %1703 = vmatpush1.bf16.msra.mxu0 %v1649
        %1704 = vmatprep.subr.bf16.mxu0 0
        %1705 = vmatpush1.bf16.msra.mxu0 0
        %1706 = vmatprep.subr.bf16.mxu0 0
        %1707 = vmatpush1.bf16.msra.mxu0 0
        %1708 = vmatprep.subr.bf16.mxu0 0
        %1709 = vmatpush1.bf16.msra.mxu0 0
        %1710 = vmatprep.subr.bf16.mxu0 0
        %1711 = vmatpush1.bf16.msra.mxu0 0
        %1712 = vmatprep.subr.bf16.mxu0 0
        %1713 = vmatpush1.bf16.msra.mxu0 0
        %1714 = vmatprep.subr.bf16.mxu0 0
        %1715 = vmatpush1.bf16.msra.mxu0 0
        %1716 = vmatprep.subr.bf16.mxu0 0
        %1717 = vmatpush1.bf16.msra.mxu0 0
        %1718 = vmatprep.subr.bf16.mxu0 0
        %1719 = vmatpush1.bf16.msra.mxu0 0
        %1720 = vmatprep.subr.bf16.mxu0 0
        %1721 = vmatpush1.bf16.msra.mxu0 0
        %1722 = vmatprep.subr.bf16.mxu0 0
        %1723 = vmatpush1.bf16.msra.mxu0 0
        %1724 = vmatprep.subr.bf16.mxu0 0
        %1725 = vmatpush1.bf16.msra.mxu0 0
        %1726 = vmatprep.subr.bf16.mxu0 0
        %1727 = vmatpush1.bf16.msra.mxu0 0
        %1728 = vmatprep.subr.bf16.mxu0 0
        %1729 = vmatpush1.bf16.msra.mxu0 0
        %1730 = vmatprep.subr.bf16.mxu0 0
        %1731 = vmatpush1.bf16.msra.mxu0 0
        %1732 = vmatprep.mubr.bf16.mxu0 0
        %1733 = vmatmul.mubr.bf16.gmra.mrb[0].mxu0 %v1653
        %v1734 = vpop.f32.mrb[0].mxu0
        %v1735 = vadd.f32 0.0, %v1734
        %v1736 = vpop.f32.mrb[0].mxu0
        %v1737 = vpop.f32.mrb[0].mxu0
        %v1738 = vadd.f32 0.0, %v1737
        %v1739 = vpop.f32.mrb[0].mxu0
        %1740 = vmatprep.mubr.bf16.mxu0 0
        %1741 = vmatmul.mubr.bf16.gmra.mrb[0].mxu0 %v1656
        %v1742 = vpop.f32.mrb[0].mxu0
        %v1743 = vadd.f32 0.0, %v1742
        %v1744 = vpop.f32.mrb[0].mxu0
        %v1745 = vpop.f32.mrb[0].mxu0
        %v1746 = vadd.f32 0.0, %v1745
        %v1747 = vpop.f32.mrb[0].mxu0
        %1748 = vmatprep.mubr.bf16.mxu0 0
        %1749 = vmatmul.mubr.bf16.gmra.mrb[0].mxu0 %v1659
        %v1750 = vpop.f32.mrb[0].mxu0
        %v1751 = vadd.f32 0.0, %v1750
        %v1752 = vpop.f32.mrb[0].mxu0
        %v1753 = vpop.f32.mrb[0].mxu0
        %v1754 = vadd.f32 0.0, %v1753
        %v1755 = vpop.f32.mrb[0].mxu0
        %1756 = vmatprep.mubr.bf16.mxu0 0
        %1757 = vmatmul.mubr.bf16.gmra.mrb[0].mxu0 %v1662
        %v1758 = vpop.f32.mrb[0].mxu0
        %v1759 = vadd.f32 0.0, %v1758
        %v1760 = vpop.f32.mrb[0].mxu0
        %v1761 = vpop.f32.mrb[0].mxu0
        %v1762 = vadd.f32 0.0, %v1761
        %v1763 = vpop.f32.mrb[0].mxu0
        %1764 = vmatprep.mubr.bf16.mxu0 0
        %1765 = vmatmul.mubr.bf16.gmra.mrb[0].mxu0 %v1665
        %v1766 = vpop.f32.mrb[0].mxu0
        %v1767 = vadd.f32 0.0, %v1766
        %v1768 = vpop.f32.mrb[0].mxu0
        %v1769 = vpop.f32.mrb[0].mxu0
        %v1770 = vadd.f32 0.0, %v1769
        %v1771 = vpop.f32.mrb[0].mxu0
        %1772 = vmatprep.mubr.bf16.mxu0 0
        %1773 = vmatmul.mubr.bf16.gmra.mrb[0].mxu0 %v1668
        %v1774 = vpop.f32.mrb[0].mxu0
        %v1775 = vadd.f32 0.0, %v1774
        %v1776 = vpop.f32.mrb[0].mxu0
        %v1777 = vpop.f32.mrb[0].mxu0
        %v1778 = vadd.f32 0.0, %v1777
        %v1779 = vpop.f32.mrb[0].mxu0
        %1780 = vmatprep.mubr.bf16.mxu0 0
        %1781 = vmatmul.mubr.bf16.gmra.mrb[0].mxu0 %v1671
        %v1782 = vpop.f32.mrb[0].mxu0
        %v1783 = vadd.f32 0.0, %v1782
        %v1784 = vpop.f32.mrb[0].mxu0
        %v1785 = vpop.f32.mrb[0].mxu0
        %v1786 = vadd.f32 0.0, %v1785
        %v1787 = vpop.f32.mrb[0].mxu0
        %1788 = vmatprep.mubr.bf16.mxu0 0
        %1789 = vmatmul.mubr.bf16.gmra.mrb[0].mxu0 %v1674
        %v1790 = vpop.f32.mrb[0].mxu0
        %v1791 = vadd.f32 0.0, %v1790
        %v1792 = vpop.f32.mrb[0].mxu0
        %v1793 = vpop.f32.mrb[0].mxu0
        %v1794 = vadd.f32 0.0, %v1793
        %v1795 = vpop.f32.mrb[0].mxu0
        %1796 = vmatprep.mubr.bf16.mxu0 0
        %1797 = vmatmul.mubr.bf16.gmra.mrb[0].mxu0 %v1677
        %v1798 = vpop.f32.mrb[0].mxu0
        %v1799 = vadd.f32 0.0, %v1798
        %v1800 = vpop.f32.mrb[0].mxu0
        %v1801 = vpop.f32.mrb[0].mxu0
        %v1802 = vadd.f32 0.0, %v1801
        %v1803 = vpop.f32.mrb[0].mxu0
        %1804 = vmatprep.mubr.bf16.mxu0 0
        %1805 = vmatmul.mubr.bf16.gmra.mrb[0].mxu0 %v1680
        %v1806 = vpop.f32.mrb[0].mxu0
        %v1807 = vadd.f32 0.0, %v1806
        %v1808 = vpop.f32.mrb[0].mxu0
        %v1809 = vpop.f32.mrb[0].mxu0
        %v1810 = vadd.f32 0.0, %v1809
        %v1811 = vpop.f32.mrb[0].mxu0
        %1812 = vmatprep.mubr.bf16.mxu0 0
        %1813 = vmatmul.mubr.bf16.gmra.mrb[0].mxu0 %v1683
        %v1814 = vpop.f32.mrb[0].mxu0
        %v1815 = vadd.f32 0.0, %v1814
        %v1816 = vpop.f32.mrb[0].mxu0
        %v1817 = vpop.f32.mrb[0].mxu0
        %v1818 = vadd.f32 0.0, %v1817
        %v1819 = vpop.f32.mrb[0].mxu0
        %1820 = vmatprep.mubr.bf16.mxu0 0
        %1821 = vmatmul.mubr.bf16.gmra.mrb[0].mxu0 %v1686
        %v1822 = vpop.f32.mrb[0].mxu0
        %v1823 = vadd.f32 0.0, %v1822
        %v1824 = vpop.f32.mrb[0].mxu0
        %v1825 = vpop.f32.mrb[0].mxu0
        %v1826 = vadd.f32 0.0, %v1825
        %v1827 = vpop.f32.mrb[0].mxu0
        %1828 = vmatprep.mubr.bf16.mxu0 0
        %1829 = vmatmul.mubr.bf16.gmra.mrb[0].mxu0 %v1689
        %v1830 = vpop.f32.mrb[0].mxu0
        %v1831 = vadd.f32 0.0, %v1830
        %v1832 = vpop.f32.mrb[0].mxu0
        %v1833 = vpop.f32.mrb[0].mxu0
        %v1834 = vadd.f32 0.0, %v1833
        %v1835 = vpop.f32.mrb[0].mxu0
        %1836 = vmatprep.mubr.bf16.mxu0 0
        %1837 = vmatmul.mubr.bf16.gmra.mrb[0].mxu0 %v1692
        %v1838 = vpop.f32.mrb[0].mxu0
        %v1839 = vadd.f32 0.0, %v1838
        %v1840 = vpop.f32.mrb[0].mxu0
        %v1841 = vpop.f32.mrb[0].mxu0
        %v1842 = vadd.f32 0.0, %v1841
        %v1843 = vpop.f32.mrb[0].mxu0
        %1844 = vmatprep.mubr.bf16.mxu0 0
        %1845 = vmatmul.mubr.bf16.gmra.mrb[0].mxu0 %v1695
        %v1846 = vpop.f32.mrb[0].mxu0
        %v1847 = vadd.f32 0.0, %v1846
        %v1848 = vpop.f32.mrb[0].mxu0
        %v1849 = vpop.f32.mrb[0].mxu0
        %v1850 = vadd.f32 0.0, %v1849
        %v1851 = vpop.f32.mrb[0].mxu0
        %1852 = vmatprep.mubr.bf16.mxu0 0
        %1853 = vmatmul.mubr.bf16.gmra.mrb[0].mxu0 %v1698
        %v1854 = vpop.f32.mrb[0].mxu0
        %v1855 = vadd.f32 0.0, %v1854
        %v1856 = vpop.f32.mrb[0].mxu0
        %v1857 = vpop.f32.mrb[0].mxu0
        %v1858 = vadd.f32 0.0, %v1857
        %v1859 = vpop.f32.mrb[0].mxu0
        %1860 = vdwg.mxu0
        %v1861 = vadd.f32 %v1509, %v1735
        %v1862 = vadd.f32 %v1512, %v1738
        %v1863 = vadd.f32 %v1517, %v1743
        %v1864 = vadd.f32 %v1520, %v1746
        %v1865 = vadd.f32 %v1525, %v1751
        %v1866 = vadd.f32 %v1528, %v1754
        %v1867 = vadd.f32 %v1533, %v1759
        %v1868 = vadd.f32 %v1536, %v1762
        %v1869 = vadd.f32 %v1541, %v1767
        %v1870 = vadd.f32 %v1544, %v1770
        %v1871 = vadd.f32 %v1549, %v1775
        %v1872 = vadd.f32 %v1552, %v1778
        %v1873 = vadd.f32 %v1557, %v1783
        %v1874 = vadd.f32 %v1560, %v1786
        %v1875 = vadd.f32 %v1565, %v1791
        %v1876 = vadd.f32 %v1568, %v1794
        %v1877 = vadd.f32 %v1573, %v1799
        %v1878 = vadd.f32 %v1576, %v1802
        %v1879 = vadd.f32 %v1581, %v1807
        %v1880 = vadd.f32 %v1584, %v1810
        %v1881 = vadd.f32 %v1589, %v1815
        %v1882 = vadd.f32 %v1592, %v1818
        %v1883 = vadd.f32 %v1597, %v1823
        %v1884 = vadd.f32 %v1600, %v1826
        %v1885 = vadd.f32 %v1605, %v1831
        %v1886 = vadd.f32 %v1608, %v1834
        %v1887 = vadd.f32 %v1613, %v1839
        %v1888 = vadd.f32 %v1616, %v1842
        %v1889 = vadd.f32 %v1621, %v1847
        %v1890 = vadd.f32 %v1624, %v1850
        %v1891 = vadd.f32 %v1629, %v1855
        %v1892 = vadd.f32 %v1632, %v1858
        %s1893 = scalar_lea.vmem [#allocation8], 48
        %v1894 = vld [vmem:[%s1893] sm:$0xf]
        %v1895 = vld [vmem:[%s1893 + $0x4] sm:$0xf]
        %v1896 = vld [vmem:[%s1893 + $0x8] sm:$0xf]
        %v1897 = vld [vmem:[%s1893 + $0xc] sm:$0xf]
        %v1902 = vunpack.c.l.b16 %v1894
        %v1903 = vunpack.c.l.b16 %v1895
        %v1904 = vunpack.c.l.b16 %v1896
        %v1905 = vunpack.c.l.b16 %v1897
        %v1906 = vpack.c.b16 %v1903, %v1902
        %v1907 = vpack.c.b16 %v1905, %v1904
        %v1911 = vsel %vm1220, %v1109, 0
        %v1914 = vsel %vm1220, %v1117, 0
        %1916 = vmatprep.subr.bf16.mxu0 0
        %1917 = vmatpush1.bf16.msra.mxu0 %v1906
        %1918 = vmatprep.subr.bf16.mxu0 0
        %1919 = vmatpush1.bf16.msra.mxu0 %v1907
        %1920 = vmatprep.subr.bf16.mxu0 0
        %1921 = vmatpush1.bf16.msra.mxu0 0
        %1922 = vmatprep.subr.bf16.mxu0 0
        %1923 = vmatpush1.bf16.msra.mxu0 0
        %1924 = vmatprep.subr.bf16.mxu0 0
        %1925 = vmatpush1.bf16.msra.mxu0 0
        %1926 = vmatprep.subr.bf16.mxu0 0
        %1927 = vmatpush1.bf16.msra.mxu0 0
        %1928 = vmatprep.subr.bf16.mxu0 0
        %1929 = vmatpush1.bf16.msra.mxu0 0
        %1930 = vmatprep.subr.bf16.mxu0 0
        %1931 = vmatpush1.bf16.msra.mxu0 0
        %1932 = vmatprep.subr.bf16.mxu0 0
        %1933 = vmatpush1.bf16.msra.mxu0 0
        %1934 = vmatprep.subr.bf16.mxu0 0
        %1935 = vmatpush1.bf16.msra.mxu0 0
        %1936 = vmatprep.subr.bf16.mxu0 0
        %1937 = vmatpush1.bf16.msra.mxu0 0
        %1938 = vmatprep.subr.bf16.mxu0 0
        %1939 = vmatpush1.bf16.msra.mxu0 0
        %1940 = vmatprep.subr.bf16.mxu0 0
        %1941 = vmatpush1.bf16.msra.mxu0 0
        %1942 = vmatprep.subr.bf16.mxu0 0
        %1943 = vmatpush1.bf16.msra.mxu0 0
        %1944 = vmatprep.subr.bf16.mxu0 0
        %1945 = vmatpush1.bf16.msra.mxu0 0
        %1946 = vmatprep.subr.bf16.mxu0 0
        %1947 = vmatpush1.bf16.msra.mxu0 0
        %1948 = vmatprep.mubr.bf16.mxu0 0
        %1949 = vmatmul.mubr.bf16.gmra.mrb[0].mxu0 %v1433
        %v1950 = vpop.f32.mrb[0].mxu0
        %v1951 = vadd.f32 0.0, %v1950
        %v1952 = vpop.f32.mrb[0].mxu0
        %v1953 = vpop.f32.mrb[0].mxu0
        %v1954 = vadd.f32 0.0, %v1953
        %v1955 = vpop.f32.mrb[0].mxu0
        %1956 = vmatprep.mubr.bf16.mxu0 0
        %1957 = vmatmul.mubr.bf16.gmra.mrb[0].mxu0 %v1436
        %v1958 = vpop.f32.mrb[0].mxu0
        %v1959 = vadd.f32 0.0, %v1958
        %v1960 = vpop.f32.mrb[0].mxu0
        %v1961 = vpop.f32.mrb[0].mxu0
        %v1962 = vadd.f32 0.0, %v1961
        %v1963 = vpop.f32.mrb[0].mxu0
        %1964 = vmatprep.mubr.bf16.mxu0 0
        %1965 = vmatmul.mubr.bf16.gmra.mrb[0].mxu0 %v1439
        %v1966 = vpop.f32.mrb[0].mxu0
        %v1967 = vadd.f32 0.0, %v1966
        %v1968 = vpop.f32.mrb[0].mxu0
        %v1969 = vpop.f32.mrb[0].mxu0
        %v1970 = vadd.f32 0.0, %v1969
        %v1971 = vpop.f32.mrb[0].mxu0
        %1972 = vmatprep.mubr.bf16.mxu0 0
        %1973 = vmatmul.mubr.bf16.gmra.mrb[0].mxu0 %v1442
        %v1974 = vpop.f32.mrb[0].mxu0
        %v1975 = vadd.f32 0.0, %v1974
        %v1976 = vpop.f32.mrb[0].mxu0
        %v1977 = vpop.f32.mrb[0].mxu0
        %v1978 = vadd.f32 0.0, %v1977
        %v1979 = vpop.f32.mrb[0].mxu0
        %1980 = vmatprep.mubr.bf16.mxu0 0
        %1981 = vmatmul.mubr.bf16.gmra.mrb[0].mxu0 %v1445
        %v1982 = vpop.f32.mrb[0].mxu0
        %v1983 = vadd.f32 0.0, %v1982
        %v1984 = vpop.f32.mrb[0].mxu0
        %v1985 = vpop.f32.mrb[0].mxu0
        %v1986 = vadd.f32 0.0, %v1985
        %v1987 = vpop.f32.mrb[0].mxu0
        %1988 = vmatprep.mubr.bf16.mxu0 0
        %1989 = vmatmul.mubr.bf16.gmra.mrb[0].mxu0 %v1448
        %v1990 = vpop.f32.mrb[0].mxu0
        %v1991 = vadd.f32 0.0, %v1990
        %v1992 = vpop.f32.mrb[0].mxu0
        %v1993 = vpop.f32.mrb[0].mxu0
        %v1994 = vadd.f32 0.0, %v1993
        %v1995 = vpop.f32.mrb[0].mxu0
        %1996 = vmatprep.mubr.bf16.mxu0 0
        %1997 = vmatmul.mubr.bf16.gmra.mrb[0].mxu0 %v1451
        %v1998 = vpop.f32.mrb[0].mxu0
        %v1999 = vadd.f32 0.0, %v1998
        %v2000 = vpop.f32.mrb[0].mxu0
        %v2001 = vpop.f32.mrb[0].mxu0
        %v2002 = vadd.f32 0.0, %v2001
        %v2003 = vpop.f32.mrb[0].mxu0
        %2004 = vmatprep.mubr.bf16.mxu0 0
        %2005 = vmatmul.mubr.bf16.gmra.mrb[0].mxu0 %v1454
        %v2006 = vpop.f32.mrb[0].mxu0
        %v2007 = vadd.f32 0.0, %v2006
        %v2008 = vpop.f32.mrb[0].mxu0
        %v2009 = vpop.f32.mrb[0].mxu0
        %v2010 = vadd.f32 0.0, %v2009
        %v2011 = vpop.f32.mrb[0].mxu0
        %2012 = vmatprep.mubr.bf16.mxu0 0
        %2013 = vmatmul.mubr.bf16.gmra.mrb[0].mxu0 %v1457
        %v2014 = vpop.f32.mrb[0].mxu0
        %v2015 = vadd.f32 0.0, %v2014
        %v2016 = vpop.f32.mrb[0].mxu0
        %v2017 = vpop.f32.mrb[0].mxu0
        %v2018 = vadd.f32 0.0, %v2017
        %v2019 = vpop.f32.mrb[0].mxu0
        %2020 = vmatprep.mubr.bf16.mxu0 0
        %2021 = vmatmul.mubr.bf16.gmra.mrb[0].mxu0 %v1460
        %v2022 = vpop.f32.mrb[0].mxu0
        %v2023 = vadd.f32 0.0, %v2022
        %v2024 = vpop.f32.mrb[0].mxu0
        %v2025 = vpop.f32.mrb[0].mxu0
        %v2026 = vadd.f32 0.0, %v2025
        %v2027 = vpop.f32.mrb[0].mxu0
        %2028 = vmatprep.mubr.bf16.mxu0 0
        %2029 = vmatmul.mubr.bf16.gmra.mrb[0].mxu0 %v1463
        %v2030 = vpop.f32.mrb[0].mxu0
        %v2031 = vadd.f32 0.0, %v2030
        %v2032 = vpop.f32.mrb[0].mxu0
        %v2033 = vpop.f32.mrb[0].mxu0
        %v2034 = vadd.f32 0.0, %v2033
        %v2035 = vpop.f32.mrb[0].mxu0
        %2036 = vmatprep.mubr.bf16.mxu0 0
        %2037 = vmatmul.mubr.bf16.gmra.mrb[0].mxu0 %v1466
        %v2038 = vpop.f32.mrb[0].mxu0
        %v2039 = vadd.f32 0.0, %v2038
        %v2040 = vpop.f32.mrb[0].mxu0
        %v2041 = vpop.f32.mrb[0].mxu0
        %v2042 = vadd.f32 0.0, %v2041
        %v2043 = vpop.f32.mrb[0].mxu0
        %2044 = vmatprep.mubr.bf16.mxu0 0
        %2045 = vmatmul.mubr.bf16.gmra.mrb[0].mxu0 %v1469
        %v2046 = vpop.f32.mrb[0].mxu0
        %v2047 = vadd.f32 0.0, %v2046
        %v2048 = vpop.f32.mrb[0].mxu0
        %v2049 = vpop.f32.mrb[0].mxu0
        %v2050 = vadd.f32 0.0, %v2049
        %v2051 = vpop.f32.mrb[0].mxu0
        %2052 = vmatprep.mubr.bf16.mxu0 0
        %2053 = vmatmul.mubr.bf16.gmra.mrb[0].mxu0 %v1472
        %v2054 = vpop.f32.mrb[0].mxu0
        %v2055 = vadd.f32 0.0, %v2054
        %v2056 = vpop.f32.mrb[0].mxu0
        %v2057 = vpop.f32.mrb[0].mxu0
        %v2058 = vadd.f32 0.0, %v2057
        %v2059 = vpop.f32.mrb[0].mxu0
        %2060 = vmatprep.mubr.bf16.mxu0 0
        %2061 = vmatmul.mubr.bf16.gmra.mrb[0].mxu0 %v1911
        %v2062 = vpop.f32.mrb[0].mxu0
        %v2063 = vadd.f32 0.0, %v2062
        %v2064 = vpop.f32.mrb[0].mxu0
        %v2065 = vpop.f32.mrb[0].mxu0
        %v2066 = vadd.f32 0.0, %v2065
        %v2067 = vpop.f32.mrb[0].mxu0
        %2068 = vmatprep.mubr.bf16.mxu0 0
        %2069 = vmatmul.mubr.bf16.gmra.mrb[0].mxu0 %v1914
        %v2070 = vpop.f32.mrb[0].mxu0
        %v2071 = vadd.f32 0.0, %v2070
        %v2072 = vpop.f32.mrb[0].mxu0
        %v2073 = vpop.f32.mrb[0].mxu0
        %v2074 = vadd.f32 0.0, %v2073
        %v2075 = vpop.f32.mrb[0].mxu0
        %2076 = vdwg.mxu0
        %v2077 = vadd.f32 %v1861, %v1951
        %v2078 = vadd.f32 %v1862, %v1954
        %v2079 = vadd.f32 %v1863, %v1959
        %v2080 = vadd.f32 %v1864, %v1962
        %v2081 = vadd.f32 %v1865, %v1967
        %v2082 = vadd.f32 %v1866, %v1970
        %v2083 = vadd.f32 %v1867, %v1975
        %v2084 = vadd.f32 %v1868, %v1978
        %v2085 = vadd.f32 %v1869, %v1983
        %v2086 = vadd.f32 %v1870, %v1986
        %v2087 = vadd.f32 %v1871, %v1991
        %v2088 = vadd.f32 %v1872, %v1994
        %v2089 = vadd.f32 %v1873, %v1999
        %v2090 = vadd.f32 %v1874, %v2002
        %v2091 = vadd.f32 %v1875, %v2007
        %v2092 = vadd.f32 %v1876, %v2010
        %v2093 = vadd.f32 %v1877, %v2015
        %v2094 = vadd.f32 %v1878, %v2018
        %v2095 = vadd.f32 %v1879, %v2023
        %v2096 = vadd.f32 %v1880, %v2026
        %v2097 = vadd.f32 %v1881, %v2031
        %v2098 = vadd.f32 %v1882, %v2034
        %v2099 = vadd.f32 %v1883, %v2039
        %v2100 = vadd.f32 %v1884, %v2042
        %v2101 = vadd.f32 %v1885, %v2047
        %v2102 = vadd.f32 %v1886, %v2050
        %v2103 = vadd.f32 %v1887, %v2055
        %v2104 = vadd.f32 %v1888, %v2058
        %v2105 = vadd.f32 %v1889, %v2063
        %v2106 = vadd.f32 %v1890, %v2066
        %v2107 = vadd.f32 %v1891, %v2071
        %v2108 = vadd.f32 %v1892, %v2074
        %s2109 = scalar_lea.vmem [#allocation8], 64
        %v2110 = vld [vmem:[%s2109] sm:$0xf]
        %v2111 = vld [vmem:[%s2109 + $0x4] sm:$0xf]
        %v2112 = vld [vmem:[%s2109 + $0x8] sm:$0xf]
        %v2113 = vld [vmem:[%s2109 + $0xc] sm:$0xf]
        %v2118 = vunpack.c.l.b16 %v2110
        %v2119 = vunpack.c.l.b16 %v2111
        %v2120 = vunpack.c.l.b16 %v2112
        %v2121 = vunpack.c.l.b16 %v2113
        %v2122 = vpack.c.b16 %v2119, %v2118
        %v2123 = vpack.c.b16 %v2121, %v2120
        %v2126 = vsel %vm1220, %v965, 0
        %v2128 = vsel %vm1220, %v966, 0
        %2130 = vmatprep.subr.bf16.mxu0 0
        %2131 = vmatpush1.bf16.msra.mxu0 %v2122
        %2132 = vmatprep.subr.bf16.mxu0 0
        %2133 = vmatpush1.bf16.msra.mxu0 %v2123
        %2134 = vmatprep.subr.bf16.mxu0 0
        %2135 = vmatpush1.bf16.msra.mxu0 0
        %2136 = vmatprep.subr.bf16.mxu0 0
        %2137 = vmatpush1.bf16.msra.mxu0 0
        %2138 = vmatprep.subr.bf16.mxu0 0
        %2139 = vmatpush1.bf16.msra.mxu0 0
        %2140 = vmatprep.subr.bf16.mxu0 0
        %2141 = vmatpush1.bf16.msra.mxu0 0
        %2142 = vmatprep.subr.bf16.mxu0 0
        %2143 = vmatpush1.bf16.msra.mxu0 0
        %2144 = vmatprep.subr.bf16.mxu0 0
        %2145 = vmatpush1.bf16.msra.mxu0 0
        %2146 = vmatprep.subr.bf16.mxu0 0
        %2147 = vmatpush1.bf16.msra.mxu0 0
        %2148 = vmatprep.subr.bf16.mxu0 0
        %2149 = vmatpush1.bf16.msra.mxu0 0
        %2150 = vmatprep.subr.bf16.mxu0 0
        %2151 = vmatpush1.bf16.msra.mxu0 0
        %2152 = vmatprep.subr.bf16.mxu0 0
        %2153 = vmatpush1.bf16.msra.mxu0 0
        %2154 = vmatprep.subr.bf16.mxu0 0
        %2155 = vmatpush1.bf16.msra.mxu0 0
        %2156 = vmatprep.subr.bf16.mxu0 0
        %2157 = vmatpush1.bf16.msra.mxu0 0
        %2158 = vmatprep.subr.bf16.mxu0 0
        %2159 = vmatpush1.bf16.msra.mxu0 0
        %2160 = vmatprep.subr.bf16.mxu0 0
        %2161 = vmatpush1.bf16.msra.mxu0 0
        %2162 = vmatprep.mubr.bf16.mxu0 0
        %2163 = vmatmul.mubr.bf16.gmra.mrb[0].mxu0 %v1225
        %v2164 = vpop.f32.mrb[0].mxu0
        %v2165 = vadd.f32 0.0, %v2164
        %v2166 = vpop.f32.mrb[0].mxu0
        %v2167 = vpop.f32.mrb[0].mxu0
        %v2168 = vadd.f32 0.0, %v2167
        %v2169 = vpop.f32.mrb[0].mxu0
        %2170 = vmatprep.mubr.bf16.mxu0 0
        %2171 = vmatmul.mubr.bf16.gmra.mrb[0].mxu0 %v1227
        %v2172 = vpop.f32.mrb[0].mxu0
        %v2173 = vadd.f32 0.0, %v2172
        %v2174 = vpop.f32.mrb[0].mxu0
        %v2175 = vpop.f32.mrb[0].mxu0
        %v2176 = vadd.f32 0.0, %v2175
        %v2177 = vpop.f32.mrb[0].mxu0
        %2178 = vmatprep.mubr.bf16.mxu0 0
        %2179 = vmatmul.mubr.bf16.gmra.mrb[0].mxu0 %v1229
        %v2180 = vpop.f32.mrb[0].mxu0
        %v2181 = vadd.f32 0.0, %v2180
        %v2182 = vpop.f32.mrb[0].mxu0
        %v2183 = vpop.f32.mrb[0].mxu0
        %v2184 = vadd.f32 0.0, %v2183
        %v2185 = vpop.f32.mrb[0].mxu0
        %2186 = vmatprep.mubr.bf16.mxu0 0
        %2187 = vmatmul.mubr.bf16.gmra.mrb[0].mxu0 %v1231
        %v2188 = vpop.f32.mrb[0].mxu0
        %v2189 = vadd.f32 0.0, %v2188
        %v2190 = vpop.f32.mrb[0].mxu0
        %v2191 = vpop.f32.mrb[0].mxu0
        %v2192 = vadd.f32 0.0, %v2191
        %v2193 = vpop.f32.mrb[0].mxu0
        %2194 = vmatprep.mubr.bf16.mxu0 0
        %2195 = vmatmul.mubr.bf16.gmra.mrb[0].mxu0 %v1233
        %v2196 = vpop.f32.mrb[0].mxu0
        %v2197 = vadd.f32 0.0, %v2196
        %v2198 = vpop.f32.mrb[0].mxu0
        %v2199 = vpop.f32.mrb[0].mxu0
        %v2200 = vadd.f32 0.0, %v2199
        %v2201 = vpop.f32.mrb[0].mxu0
        %2202 = vmatprep.mubr.bf16.mxu0 0
        %2203 = vmatmul.mubr.bf16.gmra.mrb[0].mxu0 %v1235
        %v2204 = vpop.f32.mrb[0].mxu0
        %v2205 = vadd.f32 0.0, %v2204
        %v2206 = vpop.f32.mrb[0].mxu0
        %v2207 = vpop.f32.mrb[0].mxu0
        %v2208 = vadd.f32 0.0, %v2207
        %v2209 = vpop.f32.mrb[0].mxu0
        %2210 = vmatprep.mubr.bf16.mxu0 0
        %2211 = vmatmul.mubr.bf16.gmra.mrb[0].mxu0 %v1237
        %v2212 = vpop.f32.mrb[0].mxu0
        %v2213 = vadd.f32 0.0, %v2212
        %v2214 = vpop.f32.mrb[0].mxu0
        %v2215 = vpop.f32.mrb[0].mxu0
        %v2216 = vadd.f32 0.0, %v2215
        %v2217 = vpop.f32.mrb[0].mxu0
        %2218 = vmatprep.mubr.bf16.mxu0 0
        %2219 = vmatmul.mubr.bf16.gmra.mrb[0].mxu0 %v1239
        %v2220 = vpop.f32.mrb[0].mxu0
        %v2221 = vadd.f32 0.0, %v2220
        %v2222 = vpop.f32.mrb[0].mxu0
        %v2223 = vpop.f32.mrb[0].mxu0
        %v2224 = vadd.f32 0.0, %v2223
        %v2225 = vpop.f32.mrb[0].mxu0
        %2226 = vmatprep.mubr.bf16.mxu0 0
        %2227 = vmatmul.mubr.bf16.gmra.mrb[0].mxu0 %v1241
        %v2228 = vpop.f32.mrb[0].mxu0
        %v2229 = vadd.f32 0.0, %v2228
        %v2230 = vpop.f32.mrb[0].mxu0
        %v2231 = vpop.f32.mrb[0].mxu0
        %v2232 = vadd.f32 0.0, %v2231
        %v2233 = vpop.f32.mrb[0].mxu0
        %2234 = vmatprep.mubr.bf16.mxu0 0
        %2235 = vmatmul.mubr.bf16.gmra.mrb[0].mxu0 %v1243
        %v2236 = vpop.f32.mrb[0].mxu0
        %v2237 = vadd.f32 0.0, %v2236
        %v2238 = vpop.f32.mrb[0].mxu0
        %v2239 = vpop.f32.mrb[0].mxu0
        %v2240 = vadd.f32 0.0, %v2239
        %v2241 = vpop.f32.mrb[0].mxu0
        %2242 = vmatprep.mubr.bf16.mxu0 0
        %2243 = vmatmul.mubr.bf16.gmra.mrb[0].mxu0 %v1245
        %v2244 = vpop.f32.mrb[0].mxu0
        %v2245 = vadd.f32 0.0, %v2244
        %v2246 = vpop.f32.mrb[0].mxu0
        %v2247 = vpop.f32.mrb[0].mxu0
        %v2248 = vadd.f32 0.0, %v2247
        %v2249 = vpop.f32.mrb[0].mxu0
        %2250 = vmatprep.mubr.bf16.mxu0 0
        %2251 = vmatmul.mubr.bf16.gmra.mrb[0].mxu0 %v1247
        %v2252 = vpop.f32.mrb[0].mxu0
        %v2253 = vadd.f32 0.0, %v2252
        %v2254 = vpop.f32.mrb[0].mxu0
        %v2255 = vpop.f32.mrb[0].mxu0
        %v2256 = vadd.f32 0.0, %v2255
        %v2257 = vpop.f32.mrb[0].mxu0
        %2258 = vmatprep.mubr.bf16.mxu0 0
        %2259 = vmatmul.mubr.bf16.gmra.mrb[0].mxu0 %v1249
        %v2260 = vpop.f32.mrb[0].mxu0
        %v2261 = vadd.f32 0.0, %v2260
        %v2262 = vpop.f32.mrb[0].mxu0
        %v2263 = vpop.f32.mrb[0].mxu0
        %v2264 = vadd.f32 0.0, %v2263
        %v2265 = vpop.f32.mrb[0].mxu0
        %2266 = vmatprep.mubr.bf16.mxu0 0
        %2267 = vmatmul.mubr.bf16.gmra.mrb[0].mxu0 %v1251
        %v2268 = vpop.f32.mrb[0].mxu0
        %v2269 = vadd.f32 0.0, %v2268
        %v2270 = vpop.f32.mrb[0].mxu0
        %v2271 = vpop.f32.mrb[0].mxu0
        %v2272 = vadd.f32 0.0, %v2271
        %v2273 = vpop.f32.mrb[0].mxu0
        %2274 = vmatprep.mubr.bf16.mxu0 0
        %2275 = vmatmul.mubr.bf16.gmra.mrb[0].mxu0 %v2126
        %v2276 = vpop.f32.mrb[0].mxu0
        %v2277 = vadd.f32 0.0, %v2276
        %v2278 = vpop.f32.mrb[0].mxu0
        %v2279 = vpop.f32.mrb[0].mxu0
        %v2280 = vadd.f32 0.0, %v2279
        %v2281 = vpop.f32.mrb[0].mxu0
        %2282 = vmatprep.mubr.bf16.mxu0 0
        %2283 = vmatmul.mubr.bf16.gmra.mrb[0].mxu0 %v2128
        %v2284 = vpop.f32.mrb[0].mxu0
        %v2285 = vadd.f32 0.0, %v2284
        %v2286 = vpop.f32.mrb[0].mxu0
        %v2287 = vpop.f32.mrb[0].mxu0
        %v2288 = vadd.f32 0.0, %v2287
        %v2289 = vpop.f32.mrb[0].mxu0
        %2290 = vdwg.mxu0
        %v2291 = vadd.f32 %v2077, %v2165
        %v2292 = vadd.f32 %v2078, %v2168
        %v2293 = vadd.f32 %v2079, %v2173
        %v2294 = vadd.f32 %v2080, %v2176
        %v2295 = vadd.f32 %v2081, %v2181
        %v2296 = vadd.f32 %v2082, %v2184
        %v2297 = vadd.f32 %v2083, %v2189
        %v2298 = vadd.f32 %v2084, %v2192
        %v2299 = vadd.f32 %v2085, %v2197
        %v2300 = vadd.f32 %v2086, %v2200
        %v2301 = vadd.f32 %v2087, %v2205
        %v2302 = vadd.f32 %v2088, %v2208
        %v2303 = vadd.f32 %v2089, %v2213
        %v2304 = vadd.f32 %v2090, %v2216
        %v2305 = vadd.f32 %v2091, %v2221
        %v2306 = vadd.f32 %v2092, %v2224
        %v2307 = vadd.f32 %v2093, %v2229
        %v2308 = vadd.f32 %v2094, %v2232
        %v2309 = vadd.f32 %v2095, %v2237
        %v2310 = vadd.f32 %v2096, %v2240
        %v2311 = vadd.f32 %v2097, %v2245
        %v2312 = vadd.f32 %v2098, %v2248
        %v2313 = vadd.f32 %v2099, %v2253
        %v2314 = vadd.f32 %v2100, %v2256
        %v2315 = vadd.f32 %v2101, %v2261
        %v2316 = vadd.f32 %v2102, %v2264
        %v2317 = vadd.f32 %v2103, %v2269
        %v2318 = vadd.f32 %v2104, %v2272
        %v2319 = vadd.f32 %v2105, %v2277
        %v2320 = vadd.f32 %v2106, %v2280
        %v2321 = vadd.f32 %v2107, %v2285
        %v2322 = vadd.f32 %v2108, %v2288
        %s2323 = scalar_lea.vmem [#allocation8], 80
        %v2324 = vld [vmem:[%s2323] sm:$0xf]
        %v2325 = vld [vmem:[%s2323 + $0x4] sm:$0xf]
        %v2326 = vld [vmem:[%s2323 + $0x8] sm:$0xf]
        %v2327 = vld [vmem:[%s2323 + $0xc] sm:$0xf]
        %v2332 = vunpack.c.l.b16 %v2324
        %v2333 = vunpack.c.l.b16 %v2325
        %v2334 = vunpack.c.l.b16 %v2326
        %v2335 = vunpack.c.l.b16 %v2327
        %v2336 = vpack.c.b16 %v2333, %v2332
        %v2337 = vpack.c.b16 %v2335, %v2334
        %v2341 = vsel %vm1220, %v1186, 0
        %v2344 = vsel %vm1220, %v1189, 0
        %2346 = vmatprep.subr.bf16.mxu0 0
        %2347 = vmatpush1.bf16.msra.mxu0 %v2336
        %2348 = vmatprep.subr.bf16.mxu0 0
        %2349 = vmatpush1.bf16.msra.mxu0 %v2337
        %2350 = vmatprep.subr.bf16.mxu0 0
        %2351 = vmatpush1.bf16.msra.mxu0 0
        %2352 = vmatprep.subr.bf16.mxu0 0
        %2353 = vmatpush1.bf16.msra.mxu0 0
        %2354 = vmatprep.subr.bf16.mxu0 0
        %2355 = vmatpush1.bf16.msra.mxu0 0
        %2356 = vmatprep.subr.bf16.mxu0 0
        %2357 = vmatpush1.bf16.msra.mxu0 0
        %2358 = vmatprep.subr.bf16.mxu0 0
        %2359 = vmatpush1.bf16.msra.mxu0 0
        %2360 = vmatprep.subr.bf16.mxu0 0
        %2361 = vmatpush1.bf16.msra.mxu0 0
        %2362 = vmatprep.subr.bf16.mxu0 0
        %2363 = vmatpush1.bf16.msra.mxu0 0
        %2364 = vmatprep.subr.bf16.mxu0 0
        %2365 = vmatpush1.bf16.msra.mxu0 0
        %2366 = vmatprep.subr.bf16.mxu0 0
        %2367 = vmatpush1.bf16.msra.mxu0 0
        %2368 = vmatprep.subr.bf16.mxu0 0
        %2369 = vmatpush1.bf16.msra.mxu0 0
        %2370 = vmatprep.subr.bf16.mxu0 0
        %2371 = vmatpush1.bf16.msra.mxu0 0
        %2372 = vmatprep.subr.bf16.mxu0 0
        %2373 = vmatpush1.bf16.msra.mxu0 0
        %2374 = vmatprep.subr.bf16.mxu0 0
        %2375 = vmatpush1.bf16.msra.mxu0 0
        %2376 = vmatprep.subr.bf16.mxu0 0
        %2377 = vmatpush1.bf16.msra.mxu0 0
        %2378 = vmatprep.mubr.bf16.mxu0 0
        %2379 = vmatmul.mubr.bf16.gmra.mrb[0].mxu0 %v1659
        %v2380 = vpop.f32.mrb[0].mxu0
        %v2381 = vadd.f32 0.0, %v2380
        %v2382 = vpop.f32.mrb[0].mxu0
        %v2383 = vpop.f32.mrb[0].mxu0
        %v2384 = vadd.f32 0.0, %v2383
        %v2385 = vpop.f32.mrb[0].mxu0
        %2386 = vmatprep.mubr.bf16.mxu0 0
        %2387 = vmatmul.mubr.bf16.gmra.mrb[0].mxu0 %v1662
        %v2388 = vpop.f32.mrb[0].mxu0
        %v2389 = vadd.f32 0.0, %v2388
        %v2390 = vpop.f32.mrb[0].mxu0
        %v2391 = vpop.f32.mrb[0].mxu0
        %v2392 = vadd.f32 0.0, %v2391
        %v2393 = vpop.f32.mrb[0].mxu0
        %2394 = vmatprep.mubr.bf16.mxu0 0
        %2395 = vmatmul.mubr.bf16.gmra.mrb[0].mxu0 %v1665
        %v2396 = vpop.f32.mrb[0].mxu0
        %v2397 = vadd.f32 0.0, %v2396
        %v2398 = vpop.f32.mrb[0].mxu0
        %v2399 = vpop.f32.mrb[0].mxu0
        %v2400 = vadd.f32 0.0, %v2399
        %v2401 = vpop.f32.mrb[0].mxu0
        %2402 = vmatprep.mubr.bf16.mxu0 0
        %2403 = vmatmul.mubr.bf16.gmra.mrb[0].mxu0 %v1668
        %v2404 = vpop.f32.mrb[0].mxu0
        %v2405 = vadd.f32 0.0, %v2404
        %v2406 = vpop.f32.mrb[0].mxu0
        %v2407 = vpop.f32.mrb[0].mxu0
        %v2408 = vadd.f32 0.0, %v2407
        %v2409 = vpop.f32.mrb[0].mxu0
        %2410 = vmatprep.mubr.bf16.mxu0 0
        %2411 = vmatmul.mubr.bf16.gmra.mrb[0].mxu0 %v1671
        %v2412 = vpop.f32.mrb[0].mxu0
        %v2413 = vadd.f32 0.0, %v2412
        %v2414 = vpop.f32.mrb[0].mxu0
        %v2415 = vpop.f32.mrb[0].mxu0
        %v2416 = vadd.f32 0.0, %v2415
        %v2417 = vpop.f32.mrb[0].mxu0
        %2418 = vmatprep.mubr.bf16.mxu0 0
        %2419 = vmatmul.mubr.bf16.gmra.mrb[0].mxu0 %v1674
        %v2420 = vpop.f32.mrb[0].mxu0
        %v2421 = vadd.f32 0.0, %v2420
        %v2422 = vpop.f32.mrb[0].mxu0
        %v2423 = vpop.f32.mrb[0].mxu0
        %v2424 = vadd.f32 0.0, %v2423
        %v2425 = vpop.f32.mrb[0].mxu0
        %2426 = vmatprep.mubr.bf16.mxu0 0
        %2427 = vmatmul.mubr.bf16.gmra.mrb[0].mxu0 %v1677
        %v2428 = vpop.f32.mrb[0].mxu0
        %v2429 = vadd.f32 0.0, %v2428
        %v2430 = vpop.f32.mrb[0].mxu0
        %v2431 = vpop.f32.mrb[0].mxu0
        %v2432 = vadd.f32 0.0, %v2431
        %v2433 = vpop.f32.mrb[0].mxu0
        %2434 = vmatprep.mubr.bf16.mxu0 0
        %2435 = vmatmul.mubr.bf16.gmra.mrb[0].mxu0 %v1680
        %v2436 = vpop.f32.mrb[0].mxu0
        %v2437 = vadd.f32 0.0, %v2436
        %v2438 = vpop.f32.mrb[0].mxu0
        %v2439 = vpop.f32.mrb[0].mxu0
        %v2440 = vadd.f32 0.0, %v2439
        %v2441 = vpop.f32.mrb[0].mxu0
        %2442 = vmatprep.mubr.bf16.mxu0 0
        %2443 = vmatmul.mubr.bf16.gmra.mrb[0].mxu0 %v1683
        %v2444 = vpop.f32.mrb[0].mxu0
        %v2445 = vadd.f32 0.0, %v2444
        %v2446 = vpop.f32.mrb[0].mxu0
        %v2447 = vpop.f32.mrb[0].mxu0
        %v2448 = vadd.f32 0.0, %v2447
        %v2449 = vpop.f32.mrb[0].mxu0
        %2450 = vmatprep.mubr.bf16.mxu0 0
        %2451 = vmatmul.mubr.bf16.gmra.mrb[0].mxu0 %v1686
        %v2452 = vpop.f32.mrb[0].mxu0
        %v2453 = vadd.f32 0.0, %v2452
        %v2454 = vpop.f32.mrb[0].mxu0
        %v2455 = vpop.f32.mrb[0].mxu0
        %v2456 = vadd.f32 0.0, %v2455
        %v2457 = vpop.f32.mrb[0].mxu0
        %2458 = vmatprep.mubr.bf16.mxu0 0
        %2459 = vmatmul.mubr.bf16.gmra.mrb[0].mxu0 %v1689
        %v2460 = vpop.f32.mrb[0].mxu0
        %v2461 = vadd.f32 0.0, %v2460
        %v2462 = vpop.f32.mrb[0].mxu0
        %v2463 = vpop.f32.mrb[0].mxu0
        %v2464 = vadd.f32 0.0, %v2463
        %v2465 = vpop.f32.mrb[0].mxu0
        %2466 = vmatprep.mubr.bf16.mxu0 0
        %2467 = vmatmul.mubr.bf16.gmra.mrb[0].mxu0 %v1692
        %v2468 = vpop.f32.mrb[0].mxu0
        %v2469 = vadd.f32 0.0, %v2468
        %v2470 = vpop.f32.mrb[0].mxu0
        %v2471 = vpop.f32.mrb[0].mxu0
        %v2472 = vadd.f32 0.0, %v2471
        %v2473 = vpop.f32.mrb[0].mxu0
        %2474 = vmatprep.mubr.bf16.mxu0 0
        %2475 = vmatmul.mubr.bf16.gmra.mrb[0].mxu0 %v1695
        %v2476 = vpop.f32.mrb[0].mxu0
        %v2477 = vadd.f32 0.0, %v2476
        %v2478 = vpop.f32.mrb[0].mxu0
        %v2479 = vpop.f32.mrb[0].mxu0
        %v2480 = vadd.f32 0.0, %v2479
        %v2481 = vpop.f32.mrb[0].mxu0
        %2482 = vmatprep.mubr.bf16.mxu0 0
        %2483 = vmatmul.mubr.bf16.gmra.mrb[0].mxu0 %v1698
        %v2484 = vpop.f32.mrb[0].mxu0
        %v2485 = vadd.f32 0.0, %v2484
        %v2486 = vpop.f32.mrb[0].mxu0
        %v2487 = vpop.f32.mrb[0].mxu0
        %v2488 = vadd.f32 0.0, %v2487
        %v2489 = vpop.f32.mrb[0].mxu0
        %2490 = vmatprep.mubr.bf16.mxu0 0
        %2491 = vmatmul.mubr.bf16.gmra.mrb[0].mxu0 %v2341
        %v2492 = vpop.f32.mrb[0].mxu0
        %v2493 = vadd.f32 0.0, %v2492
        %v2494 = vpop.f32.mrb[0].mxu0
        %v2495 = vpop.f32.mrb[0].mxu0
        %v2496 = vadd.f32 0.0, %v2495
        %v2497 = vpop.f32.mrb[0].mxu0
        %2498 = vmatprep.mubr.bf16.mxu0 0
        %2499 = vmatmul.mubr.bf16.gmra.mrb[0].mxu0 %v2344
        %v2500 = vpop.f32.mrb[0].mxu0
        %v2501 = vadd.f32 0.0, %v2500
        %v2502 = vpop.f32.mrb[0].mxu0
        %v2503 = vpop.f32.mrb[0].mxu0
        %v2504 = vadd.f32 0.0, %v2503
        %v2505 = vpop.f32.mrb[0].mxu0
        %2506 = vdwg.mxu0
        %v2507 = vadd.f32 %v2291, %v2381
        %v2508 = vadd.f32 %v2292, %v2384
        %v2509 = vadd.f32 %v2293, %v2389
        %v2510 = vadd.f32 %v2294, %v2392
        %v2511 = vadd.f32 %v2295, %v2397
        %v2512 = vadd.f32 %v2296, %v2400
        %v2513 = vadd.f32 %v2297, %v2405
        %v2514 = vadd.f32 %v2298, %v2408
        %v2515 = vadd.f32 %v2299, %v2413
        %v2516 = vadd.f32 %v2300, %v2416
        %v2517 = vadd.f32 %v2301, %v2421
        %v2518 = vadd.f32 %v2302, %v2424
        %v2519 = vadd.f32 %v2303, %v2429
        %v2520 = vadd.f32 %v2304, %v2432
        %v2521 = vadd.f32 %v2305, %v2437
        %v2522 = vadd.f32 %v2306, %v2440
        %v2523 = vadd.f32 %v2307, %v2445
        %v2524 = vadd.f32 %v2308, %v2448
        %v2525 = vadd.f32 %v2309, %v2453
        %v2526 = vadd.f32 %v2310, %v2456
        %v2527 = vadd.f32 %v2311, %v2461
        %v2528 = vadd.f32 %v2312, %v2464
        %v2529 = vadd.f32 %v2313, %v2469
        %v2530 = vadd.f32 %v2314, %v2472
        %v2531 = vadd.f32 %v2315, %v2477
        %v2532 = vadd.f32 %v2316, %v2480
        %v2533 = vadd.f32 %v2317, %v2485
        %v2534 = vadd.f32 %v2318, %v2488
        %v2535 = vadd.f32 %v2319, %v2493
        %v2536 = vadd.f32 %v2320, %v2496
        %v2537 = vadd.f32 %v2321, %v2501
        %v2538 = vadd.f32 %v2322, %v2504
        %s2539 = scalar_lea.vmem [#allocation8], 96
        %v2540 = vld [vmem:[%s2539] sm:$0xf]
        %v2541 = vld [vmem:[%s2539 + $0x4] sm:$0xf]
        %v2542 = vld [vmem:[%s2539 + $0x8] sm:$0xf]
        %v2543 = vld [vmem:[%s2539 + $0xc] sm:$0xf]
        %v2548 = vunpack.c.l.b16 %v2540
        %v2549 = vunpack.c.l.b16 %v2541
        %v2550 = vunpack.c.l.b16 %v2542
        %v2551 = vunpack.c.l.b16 %v2543
        %v2552 = vpack.c.b16 %v2549, %v2548
        %v2553 = vpack.c.b16 %v2551, %v2550
        %v2557 = vsel %vm1220, %v1125, 0
        %v2560 = vsel %vm1220, %v1129, 0
        %2562 = vmatprep.subr.bf16.mxu0 0
        %2563 = vmatpush1.bf16.msra.mxu0 %v2552
        %2564 = vmatprep.subr.bf16.mxu0 0
        %2565 = vmatpush1.bf16.msra.mxu0 %v2553
        %2566 = vmatprep.subr.bf16.mxu0 0
        %2567 = vmatpush1.bf16.msra.mxu0 0
        %2568 = vmatprep.subr.bf16.mxu0 0
        %2569 = vmatpush1.bf16.msra.mxu0 0
        %2570 = vmatprep.subr.bf16.mxu0 0
        %2571 = vmatpush1.bf16.msra.mxu0 0
        %2572 = vmatprep.subr.bf16.mxu0 0
        %2573 = vmatpush1.bf16.msra.mxu0 0
        %2574 = vmatprep.subr.bf16.mxu0 0
        %2575 = vmatpush1.bf16.msra.mxu0 0
        %2576 = vmatprep.subr.bf16.mxu0 0
        %2577 = vmatpush1.bf16.msra.mxu0 0
        %2578 = vmatprep.subr.bf16.mxu0 0
        %2579 = vmatpush1.bf16.msra.mxu0 0
        %2580 = vmatprep.subr.bf16.mxu0 0
        %2581 = vmatpush1.bf16.msra.mxu0 0
        %2582 = vmatprep.subr.bf16.mxu0 0
        %2583 = vmatpush1.bf16.msra.mxu0 0
        %2584 = vmatprep.subr.bf16.mxu0 0
        %2585 = vmatpush1.bf16.msra.mxu0 0
        %2586 = vmatprep.subr.bf16.mxu0 0
        %2587 = vmatpush1.bf16.msra.mxu0 0
        %2588 = vmatprep.subr.bf16.mxu0 0
        %2589 = vmatpush1.bf16.msra.mxu0 0
        %2590 = vmatprep.subr.bf16.mxu0 0
        %2591 = vmatpush1.bf16.msra.mxu0 0
        %2592 = vmatprep.subr.bf16.mxu0 0
        %2593 = vmatpush1.bf16.msra.mxu0 0
        %2594 = vmatprep.mubr.bf16.mxu0 0
        %2595 = vmatmul.mubr.bf16.gmra.mrb[0].mxu0 %v1439
        %v2596 = vpop.f32.mrb[0].mxu0
        %v2597 = vadd.f32 0.0, %v2596
        %v2598 = vpop.f32.mrb[0].mxu0
        %v2599 = vpop.f32.mrb[0].mxu0
        %v2600 = vadd.f32 0.0, %v2599
        %v2601 = vpop.f32.mrb[0].mxu0
        %2602 = vmatprep.mubr.bf16.mxu0 0
        %2603 = vmatmul.mubr.bf16.gmra.mrb[0].mxu0 %v1442
        %v2604 = vpop.f32.mrb[0].mxu0
        %v2605 = vadd.f32 0.0, %v2604
        %v2606 = vpop.f32.mrb[0].mxu0
        %v2607 = vpop.f32.mrb[0].mxu0
        %v2608 = vadd.f32 0.0, %v2607
        %v2609 = vpop.f32.mrb[0].mxu0
        %2610 = vmatprep.mubr.bf16.mxu0 0
        %2611 = vmatmul.mubr.bf16.gmra.mrb[0].mxu0 %v1445
        %v2612 = vpop.f32.mrb[0].mxu0
        %v2613 = vadd.f32 0.0, %v2612
        %v2614 = vpop.f32.mrb[0].mxu0
        %v2615 = vpop.f32.mrb[0].mxu0
        %v2616 = vadd.f32 0.0, %v2615
        %v2617 = vpop.f32.mrb[0].mxu0
        %2618 = vmatprep.mubr.bf16.mxu0 0
        %2619 = vmatmul.mubr.bf16.gmra.mrb[0].mxu0 %v1448
        %v2620 = vpop.f32.mrb[0].mxu0
        %v2621 = vadd.f32 0.0, %v2620
        %v2622 = vpop.f32.mrb[0].mxu0
        %v2623 = vpop.f32.mrb[0].mxu0
        %v2624 = vadd.f32 0.0, %v2623
        %v2625 = vpop.f32.mrb[0].mxu0
        %2626 = vmatprep.mubr.bf16.mxu0 0
        %2627 = vmatmul.mubr.bf16.gmra.mrb[0].mxu0 %v1451
        %v2628 = vpop.f32.mrb[0].mxu0
        %v2629 = vadd.f32 0.0, %v2628
        %v2630 = vpop.f32.mrb[0].mxu0
        %v2631 = vpop.f32.mrb[0].mxu0
        %v2632 = vadd.f32 0.0, %v2631
        %v2633 = vpop.f32.mrb[0].mxu0
        %2634 = vmatprep.mubr.bf16.mxu0 0
        %2635 = vmatmul.mubr.bf16.gmra.mrb[0].mxu0 %v1454
        %v2636 = vpop.f32.mrb[0].mxu0
        %v2637 = vadd.f32 0.0, %v2636
        %v2638 = vpop.f32.mrb[0].mxu0
        %v2639 = vpop.f32.mrb[0].mxu0
        %v2640 = vadd.f32 0.0, %v2639
        %v2641 = vpop.f32.mrb[0].mxu0
        %2642 = vmatprep.mubr.bf16.mxu0 0
        %2643 = vmatmul.mubr.bf16.gmra.mrb[0].mxu0 %v1457
        %v2644 = vpop.f32.mrb[0].mxu0
        %v2645 = vadd.f32 0.0, %v2644
        %v2646 = vpop.f32.mrb[0].mxu0
        %v2647 = vpop.f32.mrb[0].mxu0
        %v2648 = vadd.f32 0.0, %v2647
        %v2649 = vpop.f32.mrb[0].mxu0
        %2650 = vmatprep.mubr.bf16.mxu0 0
        %2651 = vmatmul.mubr.bf16.gmra.mrb[0].mxu0 %v1460
        %v2652 = vpop.f32.mrb[0].mxu0
        %v2653 = vadd.f32 0.0, %v2652
        %v2654 = vpop.f32.mrb[0].mxu0
        %v2655 = vpop.f32.mrb[0].mxu0
        %v2656 = vadd.f32 0.0, %v2655
        %v2657 = vpop.f32.mrb[0].mxu0
        %2658 = vmatprep.mubr.bf16.mxu0 0
        %2659 = vmatmul.mubr.bf16.gmra.mrb[0].mxu0 %v1463
        %v2660 = vpop.f32.mrb[0].mxu0
        %v2661 = vadd.f32 0.0, %v2660
        %v2662 = vpop.f32.mrb[0].mxu0
        %v2663 = vpop.f32.mrb[0].mxu0
        %v2664 = vadd.f32 0.0, %v2663
        %v2665 = vpop.f32.mrb[0].mxu0
        %2666 = vmatprep.mubr.bf16.mxu0 0
        %2667 = vmatmul.mubr.bf16.gmra.mrb[0].mxu0 %v1466
        %v2668 = vpop.f32.mrb[0].mxu0
        %v2669 = vadd.f32 0.0, %v2668
        %v2670 = vpop.f32.mrb[0].mxu0
        %v2671 = vpop.f32.mrb[0].mxu0
        %v2672 = vadd.f32 0.0, %v2671
        %v2673 = vpop.f32.mrb[0].mxu0
        %2674 = vmatprep.mubr.bf16.mxu0 0
        %2675 = vmatmul.mubr.bf16.gmra.mrb[0].mxu0 %v1469
        %v2676 = vpop.f32.mrb[0].mxu0
        %v2677 = vadd.f32 0.0, %v2676
        %v2678 = vpop.f32.mrb[0].mxu0
        %v2679 = vpop.f32.mrb[0].mxu0
        %v2680 = vadd.f32 0.0, %v2679
        %v2681 = vpop.f32.mrb[0].mxu0
        %2682 = vmatprep.mubr.bf16.mxu0 0
        %2683 = vmatmul.mubr.bf16.gmra.mrb[0].mxu0 %v1472
        %v2684 = vpop.f32.mrb[0].mxu0
        %v2685 = vadd.f32 0.0, %v2684
        %v2686 = vpop.f32.mrb[0].mxu0
        %v2687 = vpop.f32.mrb[0].mxu0
        %v2688 = vadd.f32 0.0, %v2687
        %v2689 = vpop.f32.mrb[0].mxu0
        %2690 = vmatprep.mubr.bf16.mxu0 0
        %2691 = vmatmul.mubr.bf16.gmra.mrb[0].mxu0 %v1911
        %v2692 = vpop.f32.mrb[0].mxu0
        %v2693 = vadd.f32 0.0, %v2692
        %v2694 = vpop.f32.mrb[0].mxu0
        %v2695 = vpop.f32.mrb[0].mxu0
        %v2696 = vadd.f32 0.0, %v2695
        %v2697 = vpop.f32.mrb[0].mxu0
        %2698 = vmatprep.mubr.bf16.mxu0 0
        %2699 = vmatmul.mubr.bf16.gmra.mrb[0].mxu0 %v1914
        %v2700 = vpop.f32.mrb[0].mxu0
        %v2701 = vadd.f32 0.0, %v2700
        %v2702 = vpop.f32.mrb[0].mxu0
        %v2703 = vpop.f32.mrb[0].mxu0
        %v2704 = vadd.f32 0.0, %v2703
        %v2705 = vpop.f32.mrb[0].mxu0
        %2706 = vmatprep.mubr.bf16.mxu0 0
        %2707 = vmatmul.mubr.bf16.gmra.mrb[0].mxu0 %v2557
        %v2708 = vpop.f32.mrb[0].mxu0
        %v2709 = vadd.f32 0.0, %v2708
        %v2710 = vpop.f32.mrb[0].mxu0
        %v2711 = vpop.f32.mrb[0].mxu0
        %v2712 = vadd.f32 0.0, %v2711
        %v2713 = vpop.f32.mrb[0].mxu0
        %2714 = vmatprep.mubr.bf16.mxu0 0
        %2715 = vmatmul.mubr.bf16.gmra.mrb[0].mxu0 %v2560
        %v2716 = vpop.f32.mrb[0].mxu0
        %v2717 = vadd.f32 0.0, %v2716
        %v2718 = vpop.f32.mrb[0].mxu0
        %v2719 = vpop.f32.mrb[0].mxu0
        %v2720 = vadd.f32 0.0, %v2719
        %v2721 = vpop.f32.mrb[0].mxu0
        %2722 = vdwg.mxu0
        %v2723 = vadd.f32 %v2507, %v2597
        %v2724 = vadd.f32 %v2508, %v2600
        %v2725 = vadd.f32 %v2509, %v2605
        %v2726 = vadd.f32 %v2510, %v2608
        %v2727 = vadd.f32 %v2511, %v2613
        %v2728 = vadd.f32 %v2512, %v2616
        %v2729 = vadd.f32 %v2513, %v2621
        %v2730 = vadd.f32 %v2514, %v2624
        %v2731 = vadd.f32 %v2515, %v2629
        %v2732 = vadd.f32 %v2516, %v2632
        %v2733 = vadd.f32 %v2517, %v2637
        %v2734 = vadd.f32 %v2518, %v2640
        %v2735 = vadd.f32 %v2519, %v2645
        %v2736 = vadd.f32 %v2520, %v2648
        %v2737 = vadd.f32 %v2521, %v2653
        %v2738 = vadd.f32 %v2522, %v2656
        %v2739 = vadd.f32 %v2523, %v2661
        %v2740 = vadd.f32 %v2524, %v2664
        %v2741 = vadd.f32 %v2525, %v2669
        %v2742 = vadd.f32 %v2526, %v2672
        %v2743 = vadd.f32 %v2527, %v2677
        %v2744 = vadd.f32 %v2528, %v2680
        %v2745 = vadd.f32 %v2529, %v2685
        %v2746 = vadd.f32 %v2530, %v2688
        %v2747 = vadd.f32 %v2531, %v2693
        %v2748 = vadd.f32 %v2532, %v2696
        %v2749 = vadd.f32 %v2533, %v2701
        %v2750 = vadd.f32 %v2534, %v2704
        %v2751 = vadd.f32 %v2535, %v2709
        %v2752 = vadd.f32 %v2536, %v2712
        %v2753 = vadd.f32 %v2537, %v2717
        %v2754 = vadd.f32 %v2538, %v2720
        %s2755 = scalar_lea.vmem [#allocation8], 112
        %v2756 = vld [vmem:[%s2755] sm:$0xf]
        %v2757 = vld [vmem:[%s2755 + $0x4] sm:$0xf]
        %v2758 = vld [vmem:[%s2755 + $0x8] sm:$0xf]
        %v2759 = vld [vmem:[%s2755 + $0xc] sm:$0xf]
        %v2764 = vunpack.c.l.b16 %v2756
        %v2765 = vunpack.c.l.b16 %v2757
        %v2766 = vunpack.c.l.b16 %v2758
        %v2767 = vunpack.c.l.b16 %v2759
        %v2768 = vpack.c.b16 %v2765, %v2764
        %v2769 = vpack.c.b16 %v2767, %v2766
        %v2772 = vsel %vm1220, %v967, 0
        %v2774 = vsel %vm1220, %v968, 0
        %2776 = vmatprep.subr.bf16.mxu0 0
        %2777 = vmatpush1.bf16.msra.mxu0 %v2768
        %2778 = vmatprep.subr.bf16.mxu0 0
        %2779 = vmatpush1.bf16.msra.mxu0 %v2769
        %2780 = vmatprep.subr.bf16.mxu0 0
        %2781 = vmatpush1.bf16.msra.mxu0 0
        %2782 = vmatprep.subr.bf16.mxu0 0
        %2783 = vmatpush1.bf16.msra.mxu0 0
        %2784 = vmatprep.subr.bf16.mxu0 0
        %2785 = vmatpush1.bf16.msra.mxu0 0
        %2786 = vmatprep.subr.bf16.mxu0 0
        %2787 = vmatpush1.bf16.msra.mxu0 0
        %2788 = vmatprep.subr.bf16.mxu0 0
        %2789 = vmatpush1.bf16.msra.mxu0 0
        %2790 = vmatprep.subr.bf16.mxu0 0
        %2791 = vmatpush1.bf16.msra.mxu0 0
        %2792 = vmatprep.subr.bf16.mxu0 0
        %2793 = vmatpush1.bf16.msra.mxu0 0
        %2794 = vmatprep.subr.bf16.mxu0 0
        %2795 = vmatpush1.bf16.msra.mxu0 0
        %2796 = vmatprep.subr.bf16.mxu0 0
        %2797 = vmatpush1.bf16.msra.mxu0 0
        %2798 = vmatprep.subr.bf16.mxu0 0
        %2799 = vmatpush1.bf16.msra.mxu0 0
        %2800 = vmatprep.subr.bf16.mxu0 0
        %2801 = vmatpush1.bf16.msra.mxu0 0
        %2802 = vmatprep.subr.bf16.mxu0 0
        %2803 = vmatpush1.bf16.msra.mxu0 0
        %2804 = vmatprep.subr.bf16.mxu0 0
        %2805 = vmatpush1.bf16.msra.mxu0 0
        %2806 = vmatprep.subr.bf16.mxu0 0
        %2807 = vmatpush1.bf16.msra.mxu0 0
        %2808 = vmatprep.mubr.bf16.mxu0 0
        %2809 = vmatmul.mubr.bf16.gmra.mrb[0].mxu0 %v1229
        %v2810 = vpop.f32.mrb[0].mxu0
        %v2811 = vadd.f32 0.0, %v2810
        %v2812 = vpop.f32.mrb[0].mxu0
        %v2813 = vpop.f32.mrb[0].mxu0
        %v2814 = vadd.f32 0.0, %v2813
        %v2815 = vpop.f32.mrb[0].mxu0
        %2816 = vmatprep.mubr.bf16.mxu0 0
        %2817 = vmatmul.mubr.bf16.gmra.mrb[0].mxu0 %v1231
        %v2818 = vpop.f32.mrb[0].mxu0
        %v2819 = vadd.f32 0.0, %v2818
        %v2820 = vpop.f32.mrb[0].mxu0
        %v2821 = vpop.f32.mrb[0].mxu0
        %v2822 = vadd.f32 0.0, %v2821
        %v2823 = vpop.f32.mrb[0].mxu0
        %2824 = vmatprep.mubr.bf16.mxu0 0
        %2825 = vmatmul.mubr.bf16.gmra.mrb[0].mxu0 %v1233
        %v2826 = vpop.f32.mrb[0].mxu0
        %v2827 = vadd.f32 0.0, %v2826
        %v2828 = vpop.f32.mrb[0].mxu0
        %v2829 = vpop.f32.mrb[0].mxu0
        %v2830 = vadd.f32 0.0, %v2829
        %v2831 = vpop.f32.mrb[0].mxu0
        %2832 = vmatprep.mubr.bf16.mxu0 0
        %2833 = vmatmul.mubr.bf16.gmra.mrb[0].mxu0 %v1235
        %v2834 = vpop.f32.mrb[0].mxu0
        %v2835 = vadd.f32 0.0, %v2834
        %v2836 = vpop.f32.mrb[0].mxu0
        %v2837 = vpop.f32.mrb[0].mxu0
        %v2838 = vadd.f32 0.0, %v2837
        %v2839 = vpop.f32.mrb[0].mxu0
        %2840 = vmatprep.mubr.bf16.mxu0 0
        %2841 = vmatmul.mubr.bf16.gmra.mrb[0].mxu0 %v1237
        %v2842 = vpop.f32.mrb[0].mxu0
        %v2843 = vadd.f32 0.0, %v2842
        %v2844 = vpop.f32.mrb[0].mxu0
        %v2845 = vpop.f32.mrb[0].mxu0
        %v2846 = vadd.f32 0.0, %v2845
        %v2847 = vpop.f32.mrb[0].mxu0
        %2848 = vmatprep.mubr.bf16.mxu0 0
        %2849 = vmatmul.mubr.bf16.gmra.mrb[0].mxu0 %v1239
        %v2850 = vpop.f32.mrb[0].mxu0
        %v2851 = vadd.f32 0.0, %v2850
        %v2852 = vpop.f32.mrb[0].mxu0
        %v2853 = vpop.f32.mrb[0].mxu0
        %v2854 = vadd.f32 0.0, %v2853
        %v2855 = vpop.f32.mrb[0].mxu0
        %2856 = vmatprep.mubr.bf16.mxu0 0
        %2857 = vmatmul.mubr.bf16.gmra.mrb[0].mxu0 %v1241
        %v2858 = vpop.f32.mrb[0].mxu0
        %v2859 = vadd.f32 0.0, %v2858
        %v2860 = vpop.f32.mrb[0].mxu0
        %v2861 = vpop.f32.mrb[0].mxu0
        %v2862 = vadd.f32 0.0, %v2861
        %v2863 = vpop.f32.mrb[0].mxu0
        %2864 = vmatprep.mubr.bf16.mxu0 0
        %2865 = vmatmul.mubr.bf16.gmra.mrb[0].mxu0 %v1243
        %v2866 = vpop.f32.mrb[0].mxu0
        %v2867 = vadd.f32 0.0, %v2866
        %v2868 = vpop.f32.mrb[0].mxu0
        %v2869 = vpop.f32.mrb[0].mxu0
        %v2870 = vadd.f32 0.0, %v2869
        %v2871 = vpop.f32.mrb[0].mxu0
        %2872 = vmatprep.mubr.bf16.mxu0 0
        %2873 = vmatmul.mubr.bf16.gmra.mrb[0].mxu0 %v1245
        %v2874 = vpop.f32.mrb[0].mxu0
        %v2875 = vadd.f32 0.0, %v2874
        %v2876 = vpop.f32.mrb[0].mxu0
        %v2877 = vpop.f32.mrb[0].mxu0
        %v2878 = vadd.f32 0.0, %v2877
        %v2879 = vpop.f32.mrb[0].mxu0
        %2880 = vmatprep.mubr.bf16.mxu0 0
        %2881 = vmatmul.mubr.bf16.gmra.mrb[0].mxu0 %v1247
        %v2882 = vpop.f32.mrb[0].mxu0
        %v2883 = vadd.f32 0.0, %v2882
        %v2884 = vpop.f32.mrb[0].mxu0
        %v2885 = vpop.f32.mrb[0].mxu0
        %v2886 = vadd.f32 0.0, %v2885
        %v2887 = vpop.f32.mrb[0].mxu0
        %2888 = vmatprep.mubr.bf16.mxu0 0
        %2889 = vmatmul.mubr.bf16.gmra.mrb[0].mxu0 %v1249
        %v2890 = vpop.f32.mrb[0].mxu0
        %v2891 = vadd.f32 0.0, %v2890
        %v2892 = vpop.f32.mrb[0].mxu0
        %v2893 = vpop.f32.mrb[0].mxu0
        %v2894 = vadd.f32 0.0, %v2893
        %v2895 = vpop.f32.mrb[0].mxu0
        %2896 = vmatprep.mubr.bf16.mxu0 0
        %2897 = vmatmul.mubr.bf16.gmra.mrb[0].mxu0 %v1251
        %v2898 = vpop.f32.mrb[0].mxu0
        %v2899 = vadd.f32 0.0, %v2898
        %v2900 = vpop.f32.mrb[0].mxu0
        %v2901 = vpop.f32.mrb[0].mxu0
        %v2902 = vadd.f32 0.0, %v2901
        %v2903 = vpop.f32.mrb[0].mxu0
        %2904 = vmatprep.mubr.bf16.mxu0 0
        %2905 = vmatmul.mubr.bf16.gmra.mrb[0].mxu0 %v2126
        %v2906 = vpop.f32.mrb[0].mxu0
        %v2907 = vadd.f32 0.0, %v2906
        %v2908 = vpop.f32.mrb[0].mxu0
        %v2909 = vpop.f32.mrb[0].mxu0
        %v2910 = vadd.f32 0.0, %v2909
        %v2911 = vpop.f32.mrb[0].mxu0
        %2912 = vmatprep.mubr.bf16.mxu0 0
        %2913 = vmatmul.mubr.bf16.gmra.mrb[0].mxu0 %v2128
        %v2914 = vpop.f32.mrb[0].mxu0
        %v2915 = vadd.f32 0.0, %v2914
        %v2916 = vpop.f32.mrb[0].mxu0
        %v2917 = vpop.f32.mrb[0].mxu0
        %v2918 = vadd.f32 0.0, %v2917
        %v2919 = vpop.f32.mrb[0].mxu0
        %2920 = vmatprep.mubr.bf16.mxu0 0
        %2921 = vmatmul.mubr.bf16.gmra.mrb[0].mxu0 %v2772
        %v2922 = vpop.f32.mrb[0].mxu0
        %v2923 = vadd.f32 0.0, %v2922
        %v2924 = vpop.f32.mrb[0].mxu0
        %v2925 = vpop.f32.mrb[0].mxu0
        %v2926 = vadd.f32 0.0, %v2925
        %v2927 = vpop.f32.mrb[0].mxu0
        %2928 = vmatprep.mubr.bf16.mxu0 0
        %2929 = vmatmul.mubr.bf16.gmra.mrb[0].mxu0 %v2774
        %v2930 = vpop.f32.mrb[0].mxu0
        %v2931 = vadd.f32 0.0, %v2930
        %v2932 = vpop.f32.mrb[0].mxu0
        %v2933 = vpop.f32.mrb[0].mxu0
        %v2934 = vadd.f32 0.0, %v2933
        %v2935 = vpop.f32.mrb[0].mxu0
        %2936 = vdwg.mxu0
        %v2937 = vadd.f32 %v2723, %v2811
        %v2938 = vadd.f32 %v2724, %v2814
        %v2939 = vadd.f32 %v2725, %v2819
        %v2940 = vadd.f32 %v2726, %v2822
        %v2941 = vadd.f32 %v2727, %v2827
        %v2942 = vadd.f32 %v2728, %v2830
        %v2943 = vadd.f32 %v2729, %v2835
        %v2944 = vadd.f32 %v2730, %v2838
        %v2945 = vadd.f32 %v2731, %v2843
        %v2946 = vadd.f32 %v2732, %v2846
        %v2947 = vadd.f32 %v2733, %v2851
        %v2948 = vadd.f32 %v2734, %v2854
        %v2949 = vadd.f32 %v2735, %v2859
        %v2950 = vadd.f32 %v2736, %v2862
        %v2951 = vadd.f32 %v2737, %v2867
        %v2952 = vadd.f32 %v2738, %v2870
        %v2953 = vadd.f32 %v2739, %v2875
        %v2954 = vadd.f32 %v2740, %v2878
        %v2955 = vadd.f32 %v2741, %v2883
        %v2956 = vadd.f32 %v2742, %v2886
        %v2957 = vadd.f32 %v2743, %v2891
        %v2958 = vadd.f32 %v2744, %v2894
        %v2959 = vadd.f32 %v2745, %v2899
        %v2960 = vadd.f32 %v2746, %v2902
        %v2961 = vadd.f32 %v2747, %v2907
        %v2962 = vadd.f32 %v2748, %v2910
        %v2963 = vadd.f32 %v2749, %v2915
        %v2964 = vadd.f32 %v2750, %v2918
        %v2965 = vadd.f32 %v2751, %v2923
        %v2966 = vadd.f32 %v2752, %v2926
        %v2967 = vadd.f32 %v2753, %v2931
        %v2968 = vadd.f32 %v2754, %v2934
        %s2969 = scalar_lea.vmem [#allocation8], 128
        %v2970 = vld [vmem:[%s2969] sm:$0xf]
        %v2971 = vld [vmem:[%s2969 + $0x4] sm:$0xf]
        %v2972 = vld [vmem:[%s2969 + $0x8] sm:$0xf]
        %v2973 = vld [vmem:[%s2969 + $0xc] sm:$0xf]
        %v2978 = vunpack.c.l.b16 %v2970
        %v2979 = vunpack.c.l.b16 %v2971
        %v2980 = vunpack.c.l.b16 %v2972
        %v2981 = vunpack.c.l.b16 %v2973
        %v2982 = vpack.c.b16 %v2979, %v2978
        %v2983 = vpack.c.b16 %v2981, %v2980
        %v2987 = vsel %vm1220, %v1192, 0
        %v2990 = vsel %vm1220, %v1198, 0
        %2992 = vmatprep.subr.bf16.mxu0 0
        %2993 = vmatpush1.bf16.msra.mxu0 %v2982
        %2994 = vmatprep.subr.bf16.mxu0 0
        %2995 = vmatpush1.bf16.msra.mxu0 %v2983
        %2996 = vmatprep.subr.bf16.mxu0 0
        %2997 = vmatpush1.bf16.msra.mxu0 0
        %2998 = vmatprep.subr.bf16.mxu0 0
        %2999 = vmatpush1.bf16.msra.mxu0 0
        %3000 = vmatprep.subr.bf16.mxu0 0
        %3001 = vmatpush1.bf16.msra.mxu0 0
        %3002 = vmatprep.subr.bf16.mxu0 0
        %3003 = vmatpush1.bf16.msra.mxu0 0
        %3004 = vmatprep.subr.bf16.mxu0 0
        %3005 = vmatpush1.bf16.msra.mxu0 0
        %3006 = vmatprep.subr.bf16.mxu0 0
        %3007 = vmatpush1.bf16.msra.mxu0 0
        %3008 = vmatprep.subr.bf16.mxu0 0
        %3009 = vmatpush1.bf16.msra.mxu0 0
        %3010 = vmatprep.subr.bf16.mxu0 0
        %3011 = vmatpush1.bf16.msra.mxu0 0
        %3012 = vmatprep.subr.bf16.mxu0 0
        %3013 = vmatpush1.bf16.msra.mxu0 0
        %3014 = vmatprep.subr.bf16.mxu0 0
        %3015 = vmatpush1.bf16.msra.mxu0 0
        %3016 = vmatprep.subr.bf16.mxu0 0
        %3017 = vmatpush1.bf16.msra.mxu0 0
        %3018 = vmatprep.subr.bf16.mxu0 0
        %3019 = vmatpush1.bf16.msra.mxu0 0
        %3020 = vmatprep.subr.bf16.mxu0 0
        %3021 = vmatpush1.bf16.msra.mxu0 0
        %3022 = vmatprep.subr.bf16.mxu0 0
        %3023 = vmatpush1.bf16.msra.mxu0 0
        %3024 = vmatprep.mubr.bf16.mxu0 0
        %3025 = vmatmul.mubr.bf16.gmra.mrb[0].mxu0 %v1665
        %v3026 = vpop.f32.mrb[0].mxu0
        %v3027 = vadd.f32 0.0, %v3026
        %v3028 = vpop.f32.mrb[0].mxu0
        %v3029 = vpop.f32.mrb[0].mxu0
        %v3030 = vadd.f32 0.0, %v3029
        %v3031 = vpop.f32.mrb[0].mxu0
        %3032 = vmatprep.mubr.bf16.mxu0 0
        %3033 = vmatmul.mubr.bf16.gmra.mrb[0].mxu0 %v1668
        %v3034 = vpop.f32.mrb[0].mxu0
        %v3035 = vadd.f32 0.0, %v3034
        %v3036 = vpop.f32.mrb[0].mxu0
        %v3037 = vpop.f32.mrb[0].mxu0
        %v3038 = vadd.f32 0.0, %v3037
        %v3039 = vpop.f32.mrb[0].mxu0
        %3040 = vmatprep.mubr.bf16.mxu0 0
        %3041 = vmatmul.mubr.bf16.gmra.mrb[0].mxu0 %v1671
        %v3042 = vpop.f32.mrb[0].mxu0
        %v3043 = vadd.f32 0.0, %v3042
        %v3044 = vpop.f32.mrb[0].mxu0
        %v3045 = vpop.f32.mrb[0].mxu0
        %v3046 = vadd.f32 0.0, %v3045
        %v3047 = vpop.f32.mrb[0].mxu0
        %3048 = vmatprep.mubr.bf16.mxu0 0
        %3049 = vmatmul.mubr.bf16.gmra.mrb[0].mxu0 %v1674
        %v3050 = vpop.f32.mrb[0].mxu0
        %v3051 = vadd.f32 0.0, %v3050
        %v3052 = vpop.f32.mrb[0].mxu0
        %v3053 = vpop.f32.mrb[0].mxu0
        %v3054 = vadd.f32 0.0, %v3053
        %v3055 = vpop.f32.mrb[0].mxu0
        %3056 = vmatprep.mubr.bf16.mxu0 0
        %3057 = vmatmul.mubr.bf16.gmra.mrb[0].mxu0 %v1677
        %v3058 = vpop.f32.mrb[0].mxu0
        %v3059 = vadd.f32 0.0, %v3058
        %v3060 = vpop.f32.mrb[0].mxu0
        %v3061 = vpop.f32.mrb[0].mxu0
        %v3062 = vadd.f32 0.0, %v3061
        %v3063 = vpop.f32.mrb[0].mxu0
        %3064 = vmatprep.mubr.bf16.mxu0 0
        %3065 = vmatmul.mubr.bf16.gmra.mrb[0].mxu0 %v1680
        %v3066 = vpop.f32.mrb[0].mxu0
        %v3067 = vadd.f32 0.0, %v3066
        %v3068 = vpop.f32.mrb[0].mxu0
        %v3069 = vpop.f32.mrb[0].mxu0
        %v3070 = vadd.f32 0.0, %v3069
        %v3071 = vpop.f32.mrb[0].mxu0
        %3072 = vmatprep.mubr.bf16.mxu0 0
        %3073 = vmatmul.mubr.bf16.gmra.mrb[0].mxu0 %v1683
        %v3074 = vpop.f32.mrb[0].mxu0
        %v3075 = vadd.f32 0.0, %v3074
        %v3076 = vpop.f32.mrb[0].mxu0
        %v3077 = vpop.f32.mrb[0].mxu0
        %v3078 = vadd.f32 0.0, %v3077
        %v3079 = vpop.f32.mrb[0].mxu0
        %3080 = vmatprep.mubr.bf16.mxu0 0
        %3081 = vmatmul.mubr.bf16.gmra.mrb[0].mxu0 %v1686
        %v3082 = vpop.f32.mrb[0].mxu0
        %v3083 = vadd.f32 0.0, %v3082
        %v3084 = vpop.f32.mrb[0].mxu0
        %v3085 = vpop.f32.mrb[0].mxu0
        %v3086 = vadd.f32 0.0, %v3085
        %v3087 = vpop.f32.mrb[0].mxu0
        %3088 = vmatprep.mubr.bf16.mxu0 0
        %3089 = vmatmul.mubr.bf16.gmra.mrb[0].mxu0 %v1689
        %v3090 = vpop.f32.mrb[0].mxu0
        %v3091 = vadd.f32 0.0, %v3090
        %v3092 = vpop.f32.mrb[0].mxu0
        %v3093 = vpop.f32.mrb[0].mxu0
        %v3094 = vadd.f32 0.0, %v3093
        %v3095 = vpop.f32.mrb[0].mxu0
        %3096 = vmatprep.mubr.bf16.mxu0 0
        %3097 = vmatmul.mubr.bf16.gmra.mrb[0].mxu0 %v1692
        %v3098 = vpop.f32.mrb[0].mxu0
        %v3099 = vadd.f32 0.0, %v3098
        %v3100 = vpop.f32.mrb[0].mxu0
        %v3101 = vpop.f32.mrb[0].mxu0
        %v3102 = vadd.f32 0.0, %v3101
        %v3103 = vpop.f32.mrb[0].mxu0
        %3104 = vmatprep.mubr.bf16.mxu0 0
        %3105 = vmatmul.mubr.bf16.gmra.mrb[0].mxu0 %v1695
        %v3106 = vpop.f32.mrb[0].mxu0
        %v3107 = vadd.f32 0.0, %v3106
        %v3108 = vpop.f32.mrb[0].mxu0
        %v3109 = vpop.f32.mrb[0].mxu0
        %v3110 = vadd.f32 0.0, %v3109
        %v3111 = vpop.f32.mrb[0].mxu0
        %3112 = vmatprep.mubr.bf16.mxu0 0
        %3113 = vmatmul.mubr.bf16.gmra.mrb[0].mxu0 %v1698
        %v3114 = vpop.f32.mrb[0].mxu0
        %v3115 = vadd.f32 0.0, %v3114
        %v3116 = vpop.f32.mrb[0].mxu0
        %v3117 = vpop.f32.mrb[0].mxu0
        %v3118 = vadd.f32 0.0, %v3117
        %v3119 = vpop.f32.mrb[0].mxu0
        %3120 = vmatprep.mubr.bf16.mxu0 0
        %3121 = vmatmul.mubr.bf16.gmra.mrb[0].mxu0 %v2341
        %v3122 = vpop.f32.mrb[0].mxu0
        %v3123 = vadd.f32 0.0, %v3122
        %v3124 = vpop.f32.mrb[0].mxu0
        %v3125 = vpop.f32.mrb[0].mxu0
        %v3126 = vadd.f32 0.0, %v3125
        %v3127 = vpop.f32.mrb[0].mxu0
        %3128 = vmatprep.mubr.bf16.mxu0 0
        %3129 = vmatmul.mubr.bf16.gmra.mrb[0].mxu0 %v2344
        %v3130 = vpop.f32.mrb[0].mxu0
        %v3131 = vadd.f32 0.0, %v3130
        %v3132 = vpop.f32.mrb[0].mxu0
        %v3133 = vpop.f32.mrb[0].mxu0
        %v3134 = vadd.f32 0.0, %v3133
        %v3135 = vpop.f32.mrb[0].mxu0
        %3136 = vmatprep.mubr.bf16.mxu0 0
        %3137 = vmatmul.mubr.bf16.gmra.mrb[0].mxu0 %v2987
        %v3138 = vpop.f32.mrb[0].mxu0
        %v3139 = vadd.f32 0.0, %v3138
        %v3140 = vpop.f32.mrb[0].mxu0
        %v3141 = vpop.f32.mrb[0].mxu0
        %v3142 = vadd.f32 0.0, %v3141
        %v3143 = vpop.f32.mrb[0].mxu0
        %3144 = vmatprep.mubr.bf16.mxu0 0
        %3145 = vmatmul.mubr.bf16.gmra.mrb[0].mxu0 %v2990
        %v3146 = vpop.f32.mrb[0].mxu0
        %v3147 = vadd.f32 0.0, %v3146
        %v3148 = vpop.f32.mrb[0].mxu0
        %v3149 = vpop.f32.mrb[0].mxu0
        %v3150 = vadd.f32 0.0, %v3149
        %v3151 = vpop.f32.mrb[0].mxu0
        %3152 = vdwg.mxu0
        %v3153 = vadd.f32 %v2937, %v3027
        %v3154 = vadd.f32 %v2938, %v3030
        %v3155 = vadd.f32 %v2939, %v3035
        %v3156 = vadd.f32 %v2940, %v3038
        %v3157 = vadd.f32 %v2941, %v3043
        %v3158 = vadd.f32 %v2942, %v3046
        %v3159 = vadd.f32 %v2943, %v3051
        %v3160 = vadd.f32 %v2944, %v3054
        %v3161 = vadd.f32 %v2945, %v3059
        %v3162 = vadd.f32 %v2946, %v3062
        %v3163 = vadd.f32 %v2947, %v3067
        %v3164 = vadd.f32 %v2948, %v3070
        %v3165 = vadd.f32 %v2949, %v3075
        %v3166 = vadd.f32 %v2950, %v3078
        %v3167 = vadd.f32 %v2951, %v3083
        %v3168 = vadd.f32 %v2952, %v3086
        %v3169 = vadd.f32 %v2953, %v3091
        %v3170 = vadd.f32 %v2954, %v3094
        %v3171 = vadd.f32 %v2955, %v3099
        %v3172 = vadd.f32 %v2956, %v3102
        %v3173 = vadd.f32 %v2957, %v3107
        %v3174 = vadd.f32 %v2958, %v3110
        %v3175 = vadd.f32 %v2959, %v3115
        %v3176 = vadd.f32 %v2960, %v3118
        %v3177 = vadd.f32 %v2961, %v3123
        %v3178 = vadd.f32 %v2962, %v3126
        %v3179 = vadd.f32 %v2963, %v3131
        %v3180 = vadd.f32 %v2964, %v3134
        %v3181 = vadd.f32 %v2965, %v3139
        %v3182 = vadd.f32 %v2966, %v3142
        %v3183 = vadd.f32 %v2967, %v3147
        %v3184 = vadd.f32 %v2968, %v3150
        %vm3185 = vcmp.gt.f32.partialorder %v3153, 0.0
        %vm3186 = vcmp.gt.f32.partialorder %v3154, 0.0
        %vm3187 = vcmp.gt.f32.partialorder %v3155, 0.0
        %vm3188 = vcmp.gt.f32.partialorder %v3156, 0.0
        %vm3189 = vcmp.gt.f32.partialorder %v3157, 0.0
        %vm3190 = vcmp.gt.f32.partialorder %v3158, 0.0
        %vm3191 = vcmp.gt.f32.partialorder %v3159, 0.0
        %vm3192 = vcmp.gt.f32.partialorder %v3160, 0.0
        %vm3193 = vcmp.gt.f32.partialorder %v3161, 0.0
        %vm3194 = vcmp.gt.f32.partialorder %v3162, 0.0
        %vm3195 = vcmp.gt.f32.partialorder %v3163, 0.0
        %vm3196 = vcmp.gt.f32.partialorder %v3164, 0.0
        %vm3197 = vcmp.gt.f32.partialorder %v3165, 0.0
        %vm3198 = vcmp.gt.f32.partialorder %v3166, 0.0
        %vm3199 = vcmp.gt.f32.partialorder %v3167, 0.0
        %vm3200 = vcmp.gt.f32.partialorder %v3168, 0.0
        %vm3201 = vcmp.gt.f32.partialorder %v3169, 0.0
        %vm3202 = vcmp.gt.f32.partialorder %v3170, 0.0
        %vm3203 = vcmp.gt.f32.partialorder %v3171, 0.0
        %vm3204 = vcmp.gt.f32.partialorder %v3172, 0.0
        %vm3205 = vcmp.gt.f32.partialorder %v3173, 0.0
        %vm3206 = vcmp.gt.f32.partialorder %v3174, 0.0
        %vm3207 = vcmp.gt.f32.partialorder %v3175, 0.0
        %vm3208 = vcmp.gt.f32.partialorder %v3176, 0.0
        %vm3209 = vcmp.gt.f32.partialorder %v3177, 0.0
        %vm3210 = vcmp.gt.f32.partialorder %v3178, 0.0
        %vm3211 = vcmp.gt.f32.partialorder %v3179, 0.0
        %vm3212 = vcmp.gt.f32.partialorder %v3180, 0.0
        %vm3213 = vcmp.gt.f32.partialorder %v3181, 0.0
        %vm3214 = vcmp.gt.f32.partialorder %v3182, 0.0
        %vm3215 = vcmp.gt.f32.partialorder %v3183, 0.0
        %vm3216 = vcmp.gt.f32.partialorder %v3184, 0.0
        %v3217 = vmul.f32 %v3153, 0.2
        %v3218 = vmul.f32 %v3154, 0.2
        %v3219 = vmul.f32 %v3155, 0.2
        %v3220 = vmul.f32 %v3156, 0.2
        %v3221 = vmul.f32 %v3157, 0.2
        %v3222 = vmul.f32 %v3158, 0.2
        %v3223 = vmul.f32 %v3159, 0.2
        %v3224 = vmul.f32 %v3160, 0.2
        %v3225 = vmul.f32 %v3161, 0.2
        %v3226 = vmul.f32 %v3162, 0.2
        %v3227 = vmul.f32 %v3163, 0.2
        %v3228 = vmul.f32 %v3164, 0.2
        %v3229 = vmul.f32 %v3165, 0.2
        %v3230 = vmul.f32 %v3166, 0.2
        %v3231 = vmul.f32 %v3167, 0.2
        %v3232 = vmul.f32 %v3168, 0.2
        %v3233 = vmul.f32 %v3169, 0.2
        %v3234 = vmul.f32 %v3170, 0.2
        %v3235 = vmul.f32 %v3171, 0.2
        %v3236 = vmul.f32 %v3172, 0.2
        %v3237 = vmul.f32 %v3173, 0.2
        %v3238 = vmul.f32 %v3174, 0.2
        %v3239 = vmul.f32 %v3175, 0.2
        %v3240 = vmul.f32 %v3176, 0.2
        %v3241 = vmul.f32 %v3177, 0.2
        %v3242 = vmul.f32 %v3178, 0.2
        %v3243 = vmul.f32 %v3179, 0.2
        %v3244 = vmul.f32 %v3180, 0.2
        %v3245 = vmul.f32 %v3181, 0.2
        %v3246 = vmul.f32 %v3182, 0.2
        %v3247 = vmul.f32 %v3183, 0.2
        %v3248 = vmul.f32 %v3184, 0.2
        %v3249 = vsel %vm3185, %v3153, %v3217
        %v3250 = vsel %vm3186, %v3154, %v3218
        %v3251 = vsel %vm3187, %v3155, %v3219
        %v3252 = vsel %vm3188, %v3156, %v3220
        %v3253 = vsel %vm3189, %v3157, %v3221
        %v3254 = vsel %vm3190, %v3158, %v3222
        %v3255 = vsel %vm3191, %v3159, %v3223
        %v3256 = vsel %vm3192, %v3160, %v3224
        %v3257 = vsel %vm3193, %v3161, %v3225
        %v3258 = vsel %vm3194, %v3162, %v3226
        %v3259 = vsel %vm3195, %v3163, %v3227
        %v3260 = vsel %vm3196, %v3164, %v3228
        %v3261 = vsel %vm3197, %v3165, %v3229
        %v3262 = vsel %vm3198, %v3166, %v3230
        %v3263 = vsel %vm3199, %v3167, %v3231
        %v3264 = vsel %vm3200, %v3168, %v3232
        %v3265 = vsel %vm3201, %v3169, %v3233
        %v3266 = vsel %vm3202, %v3170, %v3234
        %v3267 = vsel %vm3203, %v3171, %v3235
        %v3268 = vsel %vm3204, %v3172, %v3236
        %v3269 = vsel %vm3205, %v3173, %v3237
        %v3270 = vsel %vm3206, %v3174, %v3238
        %v3271 = vsel %vm3207, %v3175, %v3239
        %v3272 = vsel %vm3208, %v3176, %v3240
        %v3273 = vsel %vm3209, %v3177, %v3241
        %v3274 = vsel %vm3210, %v3178, %v3242
        %v3275 = vsel %vm3211, %v3179, %v3243
        %v3276 = vsel %vm3212, %v3180, %v3244
        %v3277 = vsel %vm3213, %v3181, %v3245
        %v3278 = vsel %vm3214, %v3182, %v3246
        %v3279 = vsel %vm3215, %v3183, %v3247
        %v3280 = vsel %vm3216, %v3184, %v3248
        %v3281 = vpack.c.bf16 %v3250, %v3249
        %v3282 = vpack.c.bf16 %v3252, %v3251
        %v3283 = vpack.c.bf16 %v3254, %v3253
        %v3284 = vpack.c.bf16 %v3256, %v3255
        %v3285 = vpack.c.bf16 %v3258, %v3257
        %v3286 = vpack.c.bf16 %v3260, %v3259
        %v3287 = vpack.c.bf16 %v3262, %v3261
        %v3288 = vpack.c.bf16 %v3264, %v3263
        %v3289 = vpack.c.bf16 %v3266, %v3265
        %v3290 = vpack.c.bf16 %v3268, %v3267
        %v3291 = vpack.c.bf16 %v3270, %v3269
        %v3292 = vpack.c.bf16 %v3272, %v3271
        %v3293 = vpack.c.bf16 %v3274, %v3273
        %v3294 = vpack.c.bf16 %v3276, %v3275
        %v3295 = vpack.c.bf16 %v3278, %v3277
        %v3296 = vpack.c.bf16 %v3280, %v3279
        %v3297 = vld [vmem:[#allocation10] sm:$0xf]
        %v3298 = vld [vmem:[#allocation10 + $0x4] sm:$0xf]
        %v3299 = vld [vmem:[#allocation10 + $0x8] sm:$0xf]
        %v3300 = vld [vmem:[#allocation10 + $0xc] sm:$0xf]
        %v3305 = vunpack.c.l.b16 %v3297
        %v3306 = vunpack.c.l.b16 %v3298
        %v3307 = vunpack.c.l.b16 %v3299
        %v3308 = vunpack.c.l.b16 %v3300
        %v3309 = vpack.c.b16 %v3306, %v3305
        %v3310 = vpack.c.b16 %v3308, %v3307
        %v3314 = vsel %vm1220, %v3281, 0
        %v3317 = vsel %vm1220, %v3282, 0
        %v3320 = vsel %vm1220, %v3283, 0
        %v3323 = vsel %vm1220, %v3284, 0
        %v3326 = vsel %vm1220, %v3285, 0
        %v3329 = vsel %vm1220, %v3286, 0
        %v3332 = vsel %vm1220, %v3287, 0
        %v3335 = vsel %vm1220, %v3288, 0
        %v3338 = vsel %vm1220, %v3289, 0
        %v3341 = vsel %vm1220, %v3290, 0
        %v3344 = vsel %vm1220, %v3291, 0
        %v3347 = vsel %vm1220, %v3292, 0
        %v3350 = vsel %vm1220, %v3293, 0
        %v3353 = vsel %vm1220, %v3294, 0
        %v3356 = vsel %vm1220, %v3295, 0
        %v3359 = vsel %vm1220, %v3296, 0
        %3361 = vmatprep.subr.bf16.mxu0 0
        %3362 = vmatpush1.bf16.msra.mxu0 %v3309
        %3363 = vmatprep.subr.bf16.mxu0 0
        %3364 = vmatpush1.bf16.msra.mxu0 %v3310
        %3365 = vmatprep.subr.bf16.mxu0 0
        %3366 = vmatpush1.bf16.msra.mxu0 0
        %3367 = vmatprep.subr.bf16.mxu0 0
        %3368 = vmatpush1.bf16.msra.mxu0 0
        %3369 = vmatprep.subr.bf16.mxu0 0
        %3370 = vmatpush1.bf16.msra.mxu0 0
        %3371 = vmatprep.subr.bf16.mxu0 0
        %3372 = vmatpush1.bf16.msra.mxu0 0
        %3373 = vmatprep.subr.bf16.mxu0 0
        %3374 = vmatpush1.bf16.msra.mxu0 0
        %3375 = vmatprep.subr.bf16.mxu0 0
        %3376 = vmatpush1.bf16.msra.mxu0 0
        %3377 = vmatprep.subr.bf16.mxu0 0
        %3378 = vmatpush1.bf16.msra.mxu0 0
        %3379 = vmatprep.subr.bf16.mxu0 0
        %3380 = vmatpush1.bf16.msra.mxu0 0
        %3381 = vmatprep.subr.bf16.mxu0 0
        %3382 = vmatpush1.bf16.msra.mxu0 0
        %3383 = vmatprep.subr.bf16.mxu0 0
        %3384 = vmatpush1.bf16.msra.mxu0 0
        %3385 = vmatprep.subr.bf16.mxu0 0
        %3386 = vmatpush1.bf16.msra.mxu0 0
        %3387 = vmatprep.subr.bf16.mxu0 0
        %3388 = vmatpush1.bf16.msra.mxu0 0
        %3389 = vmatprep.subr.bf16.mxu0 0
        %3390 = vmatpush1.bf16.msra.mxu0 0
        %3391 = vmatprep.subr.bf16.mxu0 0
        %3392 = vmatpush1.bf16.msra.mxu0 0
        %3393 = vmatprep.mubr.bf16.mxu0 0
        %3394 = vmatmul.mubr.bf16.gmra.mrb[0].mxu0 %v3314
        %v3395 = vpop.f32.mrb[0].mxu0
        %v3396 = vadd.f32 0.0, %v3395
        %v3397 = vpop.f32.mrb[0].mxu0
        %v3398 = vpop.f32.mrb[0].mxu0
        %v3399 = vadd.f32 0.0, %v3398
        %v3400 = vpop.f32.mrb[0].mxu0
        %3401 = vmatprep.mubr.bf16.mxu0 0
        %3402 = vmatmul.mubr.bf16.gmra.mrb[0].mxu0 %v3317
        %v3403 = vpop.f32.mrb[0].mxu0
        %v3404 = vadd.f32 0.0, %v3403
        %v3405 = vpop.f32.mrb[0].mxu0
        %v3406 = vpop.f32.mrb[0].mxu0
        %v3407 = vadd.f32 0.0, %v3406
        %v3408 = vpop.f32.mrb[0].mxu0
        %3409 = vmatprep.mubr.bf16.mxu0 0
        %3410 = vmatmul.mubr.bf16.gmra.mrb[0].mxu0 %v3320
        %v3411 = vpop.f32.mrb[0].mxu0
        %v3412 = vadd.f32 0.0, %v3411
        %v3413 = vpop.f32.mrb[0].mxu0
        %v3414 = vpop.f32.mrb[0].mxu0
        %v3415 = vadd.f32 0.0, %v3414
        %v3416 = vpop.f32.mrb[0].mxu0
        %3417 = vmatprep.mubr.bf16.mxu0 0
        %3418 = vmatmul.mubr.bf16.gmra.mrb[0].mxu0 %v3323
        %v3419 = vpop.f32.mrb[0].mxu0
        %v3420 = vadd.f32 0.0, %v3419
        %v3421 = vpop.f32.mrb[0].mxu0
        %v3422 = vpop.f32.mrb[0].mxu0
        %v3423 = vadd.f32 0.0, %v3422
        %v3424 = vpop.f32.mrb[0].mxu0
        %3425 = vmatprep.mubr.bf16.mxu0 0
        %3426 = vmatmul.mubr.bf16.gmra.mrb[0].mxu0 %v3326
        %v3427 = vpop.f32.mrb[0].mxu0
        %v3428 = vadd.f32 0.0, %v3427
        %v3429 = vpop.f32.mrb[0].mxu0
        %v3430 = vpop.f32.mrb[0].mxu0
        %v3431 = vadd.f32 0.0, %v3430
        %v3432 = vpop.f32.mrb[0].mxu0
        %3433 = vmatprep.mubr.bf16.mxu0 0
        %3434 = vmatmul.mubr.bf16.gmra.mrb[0].mxu0 %v3329
        %v3435 = vpop.f32.mrb[0].mxu0
        %v3436 = vadd.f32 0.0, %v3435
        %v3437 = vpop.f32.mrb[0].mxu0
        %v3438 = vpop.f32.mrb[0].mxu0
        %v3439 = vadd.f32 0.0, %v3438
        %v3440 = vpop.f32.mrb[0].mxu0
        %3441 = vmatprep.mubr.bf16.mxu0 0
        %3442 = vmatmul.mubr.bf16.gmra.mrb[0].mxu0 %v3332
        %v3443 = vpop.f32.mrb[0].mxu0
        %v3444 = vadd.f32 0.0, %v3443
        %v3445 = vpop.f32.mrb[0].mxu0
        %v3446 = vpop.f32.mrb[0].mxu0
        %v3447 = vadd.f32 0.0, %v3446
        %v3448 = vpop.f32.mrb[0].mxu0
        %3449 = vmatprep.mubr.bf16.mxu0 0
        %3450 = vmatmul.mubr.bf16.gmra.mrb[0].mxu0 %v3335
        %v3451 = vpop.f32.mrb[0].mxu0
        %v3452 = vadd.f32 0.0, %v3451
        %v3453 = vpop.f32.mrb[0].mxu0
        %v3454 = vpop.f32.mrb[0].mxu0
        %v3455 = vadd.f32 0.0, %v3454
        %v3456 = vpop.f32.mrb[0].mxu0
        %3457 = vmatprep.mubr.bf16.mxu0 0
        %3458 = vmatmul.mubr.bf16.gmra.mrb[0].mxu0 %v3338
        %v3459 = vpop.f32.mrb[0].mxu0
        %v3460 = vadd.f32 0.0, %v3459
        %v3461 = vpop.f32.mrb[0].mxu0
        %v3462 = vpop.f32.mrb[0].mxu0
        %v3463 = vadd.f32 0.0, %v3462
        %v3464 = vpop.f32.mrb[0].mxu0
        %3465 = vmatprep.mubr.bf16.mxu0 0
        %3466 = vmatmul.mubr.bf16.gmra.mrb[0].mxu0 %v3341
        %v3467 = vpop.f32.mrb[0].mxu0
        %v3468 = vadd.f32 0.0, %v3467
        %v3469 = vpop.f32.mrb[0].mxu0
        %v3470 = vpop.f32.mrb[0].mxu0
        %v3471 = vadd.f32 0.0, %v3470
        %v3472 = vpop.f32.mrb[0].mxu0
        %3473 = vmatprep.mubr.bf16.mxu0 0
        %3474 = vmatmul.mubr.bf16.gmra.mrb[0].mxu0 %v3344
        %v3475 = vpop.f32.mrb[0].mxu0
        %v3476 = vadd.f32 0.0, %v3475
        %v3477 = vpop.f32.mrb[0].mxu0
        %v3478 = vpop.f32.mrb[0].mxu0
        %v3479 = vadd.f32 0.0, %v3478
        %v3480 = vpop.f32.mrb[0].mxu0
        %3481 = vmatprep.mubr.bf16.mxu0 0
        %3482 = vmatmul.mubr.bf16.gmra.mrb[0].mxu0 %v3347
        %v3483 = vpop.f32.mrb[0].mxu0
        %v3484 = vadd.f32 0.0, %v3483
        %v3485 = vpop.f32.mrb[0].mxu0
        %v3486 = vpop.f32.mrb[0].mxu0
        %v3487 = vadd.f32 0.0, %v3486
        %v3488 = vpop.f32.mrb[0].mxu0
        %3489 = vmatprep.mubr.bf16.mxu0 0
        %3490 = vmatmul.mubr.bf16.gmra.mrb[0].mxu0 %v3350
        %v3491 = vpop.f32.mrb[0].mxu0
        %v3492 = vadd.f32 0.0, %v3491
        %v3493 = vpop.f32.mrb[0].mxu0
        %v3494 = vpop.f32.mrb[0].mxu0
        %v3495 = vadd.f32 0.0, %v3494
        %v3496 = vpop.f32.mrb[0].mxu0
        %3497 = vmatprep.mubr.bf16.mxu0 0
        %3498 = vmatmul.mubr.bf16.gmra.mrb[0].mxu0 %v3353
        %v3499 = vpop.f32.mrb[0].mxu0
        %v3500 = vadd.f32 0.0, %v3499
        %v3501 = vpop.f32.mrb[0].mxu0
        %v3502 = vpop.f32.mrb[0].mxu0
        %v3503 = vadd.f32 0.0, %v3502
        %v3504 = vpop.f32.mrb[0].mxu0
        %3505 = vmatprep.mubr.bf16.mxu0 0
        %3506 = vmatmul.mubr.bf16.gmra.mrb[0].mxu0 %v3356
        %v3507 = vpop.f32.mrb[0].mxu0
        %v3508 = vadd.f32 0.0, %v3507
        %v3509 = vpop.f32.mrb[0].mxu0
        %v3510 = vpop.f32.mrb[0].mxu0
        %v3511 = vadd.f32 0.0, %v3510
        %v3512 = vpop.f32.mrb[0].mxu0
        %3513 = vmatprep.mubr.bf16.mxu0 0
        %3514 = vmatmul.mubr.bf16.gmra.mrb[0].mxu0 %v3359
        %v3515 = vpop.f32.mrb[0].mxu0
        %v3516 = vadd.f32 0.0, %v3515
        %v3517 = vpop.f32.mrb[0].mxu0
        %v3518 = vpop.f32.mrb[0].mxu0
        %v3519 = vadd.f32 0.0, %v3518
        %v3520 = vpop.f32.mrb[0].mxu0
        %3521 = vdwg.mxu0
        %v3522 = vunpack.c.l.bf16 %v374
        %v3523 = vunpack.c.l.bf16 %v375
        %v3524 = vunpack.c.l.bf16 %v376
        %v3525 = vunpack.c.l.bf16 %v377
        %v3526 = vunpack.c.l.bf16 %v378
        %v3527 = vunpack.c.l.bf16 %v379
        %v3528 = vunpack.c.l.bf16 %v380
        %v3529 = vunpack.c.l.bf16 %v381
        %v3530 = vunpack.c.l.bf16 %v382
        %v3531 = vunpack.c.l.bf16 %v383
        %v3532 = vunpack.c.l.bf16 %v384
        %v3533 = vunpack.c.l.bf16 %v385
        %v3534 = vunpack.c.l.bf16 %v386
        %v3535 = vunpack.c.l.bf16 %v387
        %v3536 = vunpack.c.l.bf16 %v388
        %v3537 = vunpack.c.l.bf16 %v389
        %v3538 = vunpack.c.l.bf16 %v390
        %v3539 = vunpack.c.l.bf16 %v391
        %v3540 = vunpack.c.l.bf16 %v392
        %v3541 = vunpack.c.l.bf16 %v393
        %v3542 = vunpack.c.l.bf16 %v394
        %v3543 = vunpack.c.l.bf16 %v395
        %v3544 = vunpack.c.l.bf16 %v396
        %v3545 = vunpack.c.l.bf16 %v397
        %v3546 = vunpack.c.l.bf16 %v398
        %v3547 = vunpack.c.l.bf16 %v399
        %v3548 = vunpack.c.l.bf16 %v400
        %v3549 = vunpack.c.l.bf16 %v401
        %v3550 = vadd.f32 %v3396, %v3522
        %v3551 = vadd.f32 %v3399, %v3523
        %v3552 = vadd.f32 %v3404, %v3524
        %v3553 = vadd.f32 %v3407, %v3525
        %v3554 = vadd.f32 %v3412, %v3526
        %v3555 = vadd.f32 %v3415, %v3527
        %v3556 = vadd.f32 %v3420, %v3528
        %v3557 = vadd.f32 %v3423, %v3529
        %v3558 = vadd.f32 %v3428, %v3530
        %v3559 = vadd.f32 %v3431, %v3531
        %v3560 = vadd.f32 %v3436, %v3532
        %v3561 = vadd.f32 %v3439, %v3533
        %v3562 = vadd.f32 %v3444, %v3534
        %v3563 = vadd.f32 %v3447, %v3535
        %v3564 = vadd.f32 %v3452, %v3536
        %v3565 = vadd.f32 %v3455, %v3537
        %v3566 = vadd.f32 %v3460, %v3538
        %v3567 = vadd.f32 %v3463, %v3539
        %v3568 = vadd.f32 %v3468, %v3540
        %v3569 = vadd.f32 %v3471, %v3541
        %v3570 = vadd.f32 %v3476, %v3542
        %v3571 = vadd.f32 %v3479, %v3543
        %v3572 = vadd.f32 %v3484, %v3544
        %v3573 = vadd.f32 %v3487, %v3545
        %v3574 = vadd.f32 %v3492, %v3546
        %v3575 = vadd.f32 %v3495, %v3547
        %v3576 = vadd.f32 %v3500, %v3548
        %v3577 = vadd.f32 %v3503, %v3549
        %3578 = vst.msk [vmem:[%s359] sm:$0xff] %vm522, %v3550
        %3579 = vst.msk [vmem:[%s359 + $0x8] sm:$0xff] %vm522, %v3551
        %3580 = vst.msk [vmem:[%s359 + $0x10] sm:$0xff] %vm522, %v3552
        %3581 = vst.msk [vmem:[%s359 + $0x18] sm:$0xff] %vm522, %v3553
        %3582 = vst.msk [vmem:[%s359 + $0x20] sm:$0xff] %vm522, %v3554
        %3583 = vst.msk [vmem:[%s359 + $0x28] sm:$0xff] %vm522, %v3555
        %3584 = vst.msk [vmem:[%s359 + $0x30] sm:$0xff] %vm522, %v3556
        %3585 = vst.msk [vmem:[%s359 + $0x38] sm:$0xff] %vm522, %v3557
        %3586 = vst.msk [vmem:[%s359 + $0x40] sm:$0xff] %vm522, %v3558
        %3587 = vst.msk [vmem:[%s359 + $0x48] sm:$0xff] %vm522, %v3559
        %3588 = vst.msk [vmem:[%s359 + $0x50] sm:$0xff] %vm522, %v3560
        %3589 = vst.msk [vmem:[%s359 + $0x58] sm:$0xff] %vm522, %v3561
        %3590 = vst.msk [vmem:[%s359 + $0x60] sm:$0xff] %vm522, %v3562
        %3591 = vst.msk [vmem:[%s359 + $0x68] sm:$0xff] %vm522, %v3563
        %3592 = vst.msk [vmem:[%s359 + $0x70] sm:$0xff] %vm522, %v3564
        %3593 = vst.msk [vmem:[%s359 + $0x78] sm:$0xff] %vm522, %v3565
        %3594 = vst.msk [vmem:[%s359 + $0x80] sm:$0xff] %vm522, %v3566
        %3595 = vst.msk [vmem:[%s359 + $0x88] sm:$0xff] %vm522, %v3567
        %3596 = vst.msk [vmem:[%s359 + $0x90] sm:$0xff] %vm522, %v3568
        %3597 = vst.msk [vmem:[%s359 + $0x98] sm:$0xff] %vm522, %v3569
        %3598 = vst.msk [vmem:[%s359 + $0xa0] sm:$0xff] %vm522, %v3570
        %3599 = vst.msk [vmem:[%s359 + $0xa8] sm:$0xff] %vm522, %v3571
        %3600 = vst.msk [vmem:[%s359 + $0xb0] sm:$0xff] %vm522, %v3572
        %3601 = vst.msk [vmem:[%s359 + $0xb8] sm:$0xff] %vm522, %v3573
        %3602 = vst.msk [vmem:[%s359 + $0xc0] sm:$0xff] %vm522, %v3574
        %3603 = vst.msk [vmem:[%s359 + $0xc8] sm:$0xff] %vm522, %v3575
        %3604 = vst.msk [vmem:[%s359 + $0xd0] sm:$0xff] %vm522, %v3576
        %3605 = vst.msk [vmem:[%s359 + $0xd8] sm:$0xff] %vm522, %v3577
        %v3606 = vunpack.c.l.bf16 %v402
        %v3607 = vunpack.c.l.bf16 %v403
        %v3608 = vunpack.c.l.bf16 %v404
        %v3609 = vunpack.c.l.bf16 %v405
        %v3610 = vadd.f32 %v3508, %v3606
        %v3611 = vadd.f32 %v3511, %v3607
        %v3612 = vadd.f32 %v3516, %v3608
        %v3613 = vadd.f32 %v3519, %v3609
        %3614 = vst.msk [vmem:[%s359 + $0xe0] sm:$0xff] %vm522, %v3610
        %3615 = vst.msk [vmem:[%s359 + $0xe8] sm:$0xff] %vm522, %v3611
        %3616 = vst.msk [vmem:[%s359 + $0xf0] sm:$0xff] %vm522, %v3612
        %3617 = vst.msk [vmem:[%s359 + $0xf8] sm:$0xff] %vm522, %v3613
        %s3618 = sand.u32 %s171, 1
        %s3619 = scalar_lea.sflag [#allocation4], %s3618
        %s3620 = sand.u32 %s171, 1
        %s3621 = smul.addr %s3620, 256
        %s3622 = scalar_lea.vmem [#allocation11], %s3621
        // Predicated region
        $region61: #{resnext_bottleneck.1} parent=39 // pred_check
          %p3623 = pneg %p181
        $region62: #{resnext_bottleneck.1} parent=39 // pred_check_branch
          %3625 = sbr.rel (%p3623) target = $region64
        $region63: #{resnext_bottleneck.1} parent=39 // pred_region
          %s3626 = smul.u32 32, %s31
          %s3628 = ssub.s32 4096, 4096
          %3629 = vsyncadd %s3619, %s3628
          %s3630 = smul.addr %s30, 64
          %s3631 = sadd.s32 %s3626, %s3630
          %s3632 = smul.addr %s3631, 128
          %s3633 = scalar_lea.hbm %s5, %s3632
          %s3634 = sshll.u32 %s3622, 4
          %s3635 = int_to_ptr.vmem [resolvable:$true] %s3634
          %3640 = dma.vmem_to_hbm [thread:$0]  %s3635, 4096, %s3633, %s3619, 128, 128, 8
        $region64: #{resnext_bottleneck.1} parent=39 // pred_fallthru
          _
      $region40: #{resnext_bottleneck.1} parent=5 // pred_fallthru
        _
      %p3641 = scmp.le.s32.totalorder 2, %s21
      // Predicated region
      $region65: #{resnext_bottleneck.1} parent=5 // pred_check
        %p3642 = pneg %p3641
      $region66: #{resnext_bottleneck.1} parent=5 // pred_check_branch
        %3644 = sbr.rel (%p3642) target = $region68
      $region67: #{resnext_bottleneck.1} parent=5 // pred_region
        %s3645 = ssub.s32 %s21, 2
        // Predicated region
        $region69: #{resnext_bottleneck.1} parent=67 // pred_check
          %p3646 = pneg %p187
        $region70: #{resnext_bottleneck.1} parent=67 // pred_check_branch
          %3648 = sbr.rel (%p3646) target = $region72
        $region71: #{resnext_bottleneck.1} parent=67 // pred_region
          %s3649 = sand.u32 %s172, 1
          %s3650 = scalar_lea.sflag [#allocation4], %s3649
          %s3651 = sand.u32 %s172, 1
          %s3652 = smul.addr %s3651, 256
          %s3653 = scalar_lea.vmem [#allocation11], %s3652
          %3654 = dma.done %s3650, 4096
        $region72: #{resnext_bottleneck.1} parent=67 // pred_fallthru
          _
      $region68: #{resnext_bottleneck.1} parent=5 // pred_fallthru
        _
    $region6: #{resnext_bottleneck.1} parent=1 // loop_footer
      %s25 = sadd.s32 1, %s21
    $region7: #{resnext_bottleneck.1} parent=1 // loop_footer_branch
      %20 = sbr.rel target = $region3
    $region8: #{resnext_bottleneck.1} parent=1 // loop_exit
      _
    %3655 = vsyncpa [#allocation3], 1
    %s3656 = scalar_lea.sflag [#allocation3], 1
    %3657 = vsyncpa %s3656, 1
    %3658 = vsyncpa [#allocation6], 1
    %s3659 = scalar_lea.sflag [#allocation6], 1
    %3660 = vsyncpa %s3659, 1
    %3661 = vsyncpa [#allocation9], 1
    %3662 = vsyncpa [#allocation4], 1
    %s3663 = scalar_lea.sflag [#allocation4], 1
    %3664 = vsyncpa %s3663, 1

</llo_original>
